<compile_context>
chip_gen: v5e
topology: v5e:2x2
jax: 0.10.0
libtpu: 0.0.40
codegen_flags: <defaults>
</compile_context>

<pallas_src>
import functools

import numpy as np
import jax
import jax.numpy as jnp
from jax.experimental import pallas as pl
from jax.experimental.pallas import tpu as pltpu


def cpd_forward_kernel(z_ref, w1_ref, b1_ref, whe_ref, bhe_ref, out_ref,
                       *, num_node, w_dim):
    n, w = num_node, w_dim
    lw = w * n * n      # expanded-left block width   (lane = w_*n*n + n_*n + m_)
    mw = w * w * n      # expanded-middle block width (lane = v*w*n + w_*n + m_)
    wn = w * n          # right block width           (lane = v*n + m_)
    nn = n * n

    # shared hidden layer: tanh(z @ W1 + b1)
    h = jnp.tanh(
        jnp.dot(z_ref[...], w1_ref[...], preferred_element_type=jnp.float32)
        + b1_ref[...])

    # single fused head matmul; columns were pre-expanded in the wrapper so
    # every value needed below already sits at a fixed lane, with block_m on
    # the sublane axis (tanh commutes with column replication/permutation).
    heads = jnp.tanh(
        jnp.dot(h, whe_ref[...], preferred_element_type=jnp.float32)
        + bhe_ref[...])

    l_blk = heads[:, :lw]                    # w_left[b, n_, w_]  at lane w_*n*n + n_*n + m_
    m_blk = heads[:, lw:lw + mw]             # w_middle[b, w_, v] at lane v*w*n + w_*n + m_
    r_blk = heads[:, lw + mw:lw + mw + wn]   # w_right[b, m_, v]  at lane v*n + m_

    # stage 1: tmp[b, w_, m_] = sum_v w_middle[b, w_, v] * w_right[b, m_, v]
    #          laid out as lane = w_*n + m_   (unrolled VPU FMAs, no MXU)
    tmp = None
    for v in range(w):
        r_v = r_blk[:, v * n:(v + 1) * n]                # (bm, n), lane = m_
        r_tiled = jnp.concatenate([r_v] * w, axis=1)     # (bm, w*n), lane = w_*n + m_
        term = m_blk[:, v * wn:(v + 1) * wn] * r_tiled
        tmp = term if tmp is None else tmp + term

    # stage 2: logits[b, n_, m_] = sum_w w_left[b, n_, w_] * tmp[b, w_, m_]
    #          laid out lane-dense as lane = n_*n + m_
    logits = None
    for w_ in range(w):
        t_w = tmp[:, w_ * n:(w_ + 1) * n]                # (bm, n), lane = m_
        t_tiled = jnp.concatenate([t_w] * n, axis=1)     # (bm, n*n), lane = n_*n + m_
        term = l_blk[:, w_ * nn:(w_ + 1) * nn] * t_tiled
        logits = term if logits is None else logits + term

    out_ref[...] = jax.nn.sigmoid(logits)


def pack_params(params, *, num_node, w_dim):
    """Fuse the three head projections into one weight/bias whose columns are
    pre-permuted/replicated so the kernel never has to rearrange lanes."""
    w1, b1, wl, bl, wm, bmid, wr, br = params
    n, w = num_node, w_dim

    # L block: lane (w_, n_, m_) -> wl column n_*w + w_     (value indep. of m_)
    w_i, n_i, m_i = np.meshgrid(np.arange(w), np.arange(n), np.arange(n),
                                indexing="ij")
    l_cols = (n_i * w + w_i).reshape(-1)

    # M block: lane (v, w_, m_) -> wm column w_*w + v       (value indep. of m_)
    v_i, w_i, m_i = np.meshgrid(np.arange(w), np.arange(w), np.arange(n),
                                indexing="ij")
    m_cols = (w_i * w + v_i).reshape(-1)

    # R block: lane (v, m_)     -> wr column m_*w + v       (pure permutation)
    v_i, m_i = np.meshgrid(np.arange(w), np.arange(n), indexing="ij")
    r_cols = (m_i * w + v_i).reshape(-1)

    whe = jnp.concatenate([wl[:, l_cols], wm[:, m_cols], wr[:, r_cols]], axis=1)
    bhe = jnp.concatenate([bl[:, l_cols], bmid[:, m_cols], br[:, r_cols]], axis=1)
    return w1, b1, whe, bhe


def cpd_forward(z, params, *, num_node, w_dim, block_m=256):
    m, latent_dim = z.shape
    nn = num_node * num_node
    w1, b1, whe, bhe = pack_params(params, num_node=num_node, w_dim=w_dim)

    # pad the sample axis to a multiple of block_m (zero rows are sliced away)
    grid_m = pl.cdiv(m, block_m)
    m_pad = grid_m * block_m
    if m_pad != m:
        z = jnp.pad(z, ((0, m_pad - m), (0, 0)))

    def full_spec(arr):
        return pl.BlockSpec(arr.shape, lambda i: (0,) * arr.ndim)

    kernel = functools.partial(cpd_forward_kernel,
                               num_node=num_node, w_dim=w_dim)

    out_flat = pl.pallas_call(
        kernel,
        out_shape=jax.ShapeDtypeStruct((m_pad, nn), jnp.float32),
        grid_spec=pltpu.PrefetchScalarGridSpec(
            num_scalar_prefetch=0,
            grid=(grid_m,),
            in_specs=[
                pl.BlockSpec((block_m, latent_dim), lambda i: (i, 0)),
                full_spec(w1), full_spec(b1),
                full_spec(whe), full_spec(bhe),
            ],
            out_specs=pl.BlockSpec((block_m, nn), lambda i: (i, 0)),
        ),
        compiler_params=pltpu.CompilerParams(
            dimension_semantics=("parallel",)),
    )(z, w1, b1, whe, bhe)

    return out_flat[:m].reshape(m, num_node, num_node)


def cpd_forward_ref(z, params, *, num_node, w_dim):
    """Pure-JAX reference mirroring the PyTorch module."""
    w1, b1, wl, bl, wm, bmid, wr, br = params
    m = z.shape[0]
    h = jnp.tanh(z @ w1 + b1)
    w_left = jnp.tanh(h @ wl + bl).reshape(m, num_node, w_dim)
    w_middle = jnp.tanh(h @ wm + bmid).reshape(m, w_dim, w_dim)
    w_right = jnp.tanh(h @ wr + br).reshape(m, num_node, w_dim)
    logits = jnp.einsum('bnw,bwv->bnv', w_left, w_middle)
    logits = jnp.einsum('bnv,bmv->bnm', logits, w_right)
    return jax.nn.sigmoid(logits)


def init_params(key, latent_dim, hidden, num_node, w_dim):
    """Deterministic synthetic parameters (shapes match nn.Linear, stored (in,out))."""
    ks = jax.random.split(key, 8)
    scale = 0.1

    def lin(kw, kb, fan_in, fan_out):
        wgt = jax.random.normal(kw, (fan_in, fan_out), jnp.float32) * scale
        bia = jax.random.normal(kb, (1, fan_out), jnp.float32) * scale
        return wgt, bia

    w1, b1 = lin(ks[0], ks[1], latent_dim, hidden)               # l1
    wl, bl = lin(ks[2], ks[3], hidden, num_node * w_dim)         # left1
    wm, bmid = lin(ks[4], ks[5], hidden, w_dim * w_dim)          # middle1
    wr, br = lin(ks[6], ks[7], hidden, num_node * w_dim)         # right1
    return (w1, b1, wl, bl, wm, bmid, wr, br)


if __name__ == "__main__":
    # Small shapes consistent with the module's forward:
    #   z: (num_samples, latent_dim) -> out: (num_samples, num_node, num_node)
    num_samples = 512      # 2 grid steps at block_m=256 (keeps both v7x TCs busy)
    latent_dim = 4
    hidden = 32            # args.output_layer[0]
    num_node = 8
    w_dim = 4

    key = jax.random.PRNGKey(0)
    k_z, k_p = jax.random.split(key)
    z = jax.random.normal(k_z, (num_samples, latent_dim), jnp.float32)
    params = init_params(k_p, latent_dim, hidden, num_node, w_dim)

    out = cpd_forward(z, params, num_node=num_node, w_dim=w_dim, block_m=256)
    out = jax.block_until_ready(out)

    ref = cpd_forward_ref(z, params, num_node=num_node, w_dim=w_dim)
    assert out.shape == (num_samples, num_node, num_node)
    assert jnp.allclose(out, ref, atol=5e-5, rtol=1e-5), (
        float(jnp.max(jnp.abs(out - ref))))

    # TODO(synk): infer_z (Langevin sampling w/ autograd) and cal_log_lik are
    # training/inference loops, not a single forward hot path; left in JAX land.
    print("KERNEL_OK")
</pallas_src>

<mosaic_0001>
module attributes {stable_mosaic.version = 11 : i64} {
  func.func @cpd_forward_kernel(%arg0: i32, %arg1: memref<256x4xf32, #tpu.memory_space<vmem>>, %arg2: memref<4x32xf32, #tpu.memory_space<vmem>>, %arg3: memref<1x32xf32, #tpu.memory_space<vmem>>, %arg4: memref<32x416xf32, #tpu.memory_space<vmem>>, %arg5: memref<1x416xf32, #tpu.memory_space<vmem>>, %arg6: memref<256x64xf32, #tpu.memory_space<vmem>>) attributes {dimension_semantics = [#tpu.dimension_semantics<parallel>], iteration_bounds = array<i64: 2>, scalar_prefetch = 0 : i64, scratch_operands = 0 : i64, tpu.core_type = #tpu.core_type<tc>, window_params = [{transform_indices = @transform_0, window_bounds = array<i64: 256, 4>}, {pipeline_mode = #tpu.pipeline_mode<synchronous>, transform_indices = @transform_1, window_bounds = array<i64: 4, 32>}, {pipeline_mode = #tpu.pipeline_mode<synchronous>, transform_indices = @transform_2, window_bounds = array<i64: 1, 32>}, {pipeline_mode = #tpu.pipeline_mode<synchronous>, transform_indices = @transform_3, window_bounds = array<i64: 32, 416>}, {pipeline_mode = #tpu.pipeline_mode<synchronous>, transform_indices = @transform_4, window_bounds = array<i64: 1, 416>}, {transform_indices = @transform_5, window_bounds = array<i64: 256, 64>}]} {
    %c0 = arith.constant 0 : index
    %c0_0 = arith.constant 0 : index
    %0 = vector.load %arg1[%c0, %c0_0] : memref<256x4xf32, #tpu.memory_space<vmem>>, vector<256x4xf32>
    %c0_1 = arith.constant 0 : index
    %c0_2 = arith.constant 0 : index
    %1 = vector.load %arg2[%c0_1, %c0_2] : memref<4x32xf32, #tpu.memory_space<vmem>>, vector<4x32xf32>
    %cst = arith.constant dense<0.000000e+00> : vector<256x32xf32>
    %2 = tpu.matmul %0, %1, %cst {dimension_numbers = #tpu.dot_dimension_numbers<[1], [0], [0], [1], [0, 0, 1, 1], [], []>} : vector<256x4xf32>, vector<4x32xf32>, vector<256x32xf32> -> vector<256x32xf32>
    %c0_3 = arith.constant 0 : index
    %c0_4 = arith.constant 0 : index
    %3 = vector.load %arg3[%c0_3, %c0_4] : memref<1x32xf32, #tpu.memory_space<vmem>>, vector<1x32xf32>
    %4 = vector.broadcast %3 : vector<1x32xf32> to vector<256x32xf32>
    %5 = arith.addf %2, %4 : vector<256x32xf32>
    %6 = math.tanh %5 : vector<256x32xf32>
    %c0_5 = arith.constant 0 : index
    %c0_6 = arith.constant 0 : index
    %7 = vector.load %arg4[%c0_5, %c0_6] : memref<32x416xf32, #tpu.memory_space<vmem>>, vector<32x416xf32>
    %cst_7 = arith.constant dense<0.000000e+00> : vector<256x416xf32>
    %8 = tpu.matmul %6, %7, %cst_7 {dimension_numbers = #tpu.dot_dimension_numbers<[1], [0], [0], [1], [0, 0, 1, 1], [], []>} : vector<256x32xf32>, vector<32x416xf32>, vector<256x416xf32> -> vector<256x416xf32>
    %c0_8 = arith.constant 0 : index
    %c0_9 = arith.constant 0 : index
    %9 = vector.load %arg5[%c0_8, %c0_9] : memref<1x416xf32, #tpu.memory_space<vmem>>, vector<1x416xf32>
    %10 = vector.broadcast %9 : vector<1x416xf32> to vector<256x416xf32>
    %11 = arith.addf %8, %10 : vector<256x416xf32>
    %12 = math.tanh %11 : vector<256x416xf32>
    %13 = vector.extract_strided_slice %12 {offsets = [0, 0], sizes = [256, 256], strides = [1, 1]} : vector<256x416xf32> to vector<256x256xf32>
    %14 = vector.extract_strided_slice %12 {offsets = [0, 256], sizes = [256, 128], strides = [1, 1]} : vector<256x416xf32> to vector<256x128xf32>
    %15 = vector.extract_strided_slice %12 {offsets = [0, 384], sizes = [256, 32], strides = [1, 1]} : vector<256x416xf32> to vector<256x32xf32>
    %16 = vector.extract_strided_slice %15 {offsets = [0, 0], sizes = [256, 8], strides = [1, 1]} : vector<256x32xf32> to vector<256x8xf32>
    %17 = tpu.concatenate %16, %16, %16, %16 in 1 : vector<256x8xf32>, vector<256x8xf32>, vector<256x8xf32>, vector<256x8xf32> -> vector<256x32xf32>
    %18 = vector.extract_strided_slice %14 {offsets = [0, 0], sizes = [256, 32], strides = [1, 1]} : vector<256x128xf32> to vector<256x32xf32>
    %19 = arith.mulf %18, %17 : vector<256x32xf32>
    %20 = vector.extract_strided_slice %15 {offsets = [0, 8], sizes = [256, 8], strides = [1, 1]} : vector<256x32xf32> to vector<256x8xf32>
    %21 = tpu.concatenate %20, %20, %20, %20 in 1 : vector<256x8xf32>, vector<256x8xf32>, vector<256x8xf32>, vector<256x8xf32> -> vector<256x32xf32>
    %22 = vector.extract_strided_slice %14 {offsets = [0, 32], sizes = [256, 32], strides = [1, 1]} : vector<256x128xf32> to vector<256x32xf32>
    %23 = arith.mulf %22, %21 : vector<256x32xf32>
    %24 = arith.addf %19, %23 : vector<256x32xf32>
    %25 = vector.extract_strided_slice %15 {offsets = [0, 16], sizes = [256, 8], strides = [1, 1]} : vector<256x32xf32> to vector<256x8xf32>
    %26 = tpu.concatenate %25, %25, %25, %25 in 1 : vector<256x8xf32>, vector<256x8xf32>, vector<256x8xf32>, vector<256x8xf32> -> vector<256x32xf32>
    %27 = vector.extract_strided_slice %14 {offsets = [0, 64], sizes = [256, 32], strides = [1, 1]} : vector<256x128xf32> to vector<256x32xf32>
    %28 = arith.mulf %27, %26 : vector<256x32xf32>
    %29 = arith.addf %24, %28 : vector<256x32xf32>
    %30 = vector.extract_strided_slice %15 {offsets = [0, 24], sizes = [256, 8], strides = [1, 1]} : vector<256x32xf32> to vector<256x8xf32>
    %31 = tpu.concatenate %30, %30, %30, %30 in 1 : vector<256x8xf32>, vector<256x8xf32>, vector<256x8xf32>, vector<256x8xf32> -> vector<256x32xf32>
    %32 = vector.extract_strided_slice %14 {offsets = [0, 96], sizes = [256, 32], strides = [1, 1]} : vector<256x128xf32> to vector<256x32xf32>
    %33 = arith.mulf %32, %31 : vector<256x32xf32>
    %34 = arith.addf %29, %33 : vector<256x32xf32>
    %35 = vector.extract_strided_slice %34 {offsets = [0, 0], sizes = [256, 8], strides = [1, 1]} : vector<256x32xf32> to vector<256x8xf32>
    %36 = tpu.concatenate %35, %35, %35, %35, %35, %35, %35, %35 in 1 : vector<256x8xf32>, vector<256x8xf32>, vector<256x8xf32>, vector<256x8xf32>, vector<256x8xf32>, vector<256x8xf32>, vector<256x8xf32>, vector<256x8xf32> -> vector<256x64xf32>
    %37 = vector.extract_strided_slice %13 {offsets = [0, 0], sizes = [256, 64], strides = [1, 1]} : vector<256x256xf32> to vector<256x64xf32>
    %38 = arith.mulf %37, %36 : vector<256x64xf32>
    %39 = vector.extract_strided_slice %34 {offsets = [0, 8], sizes = [256, 8], strides = [1, 1]} : vector<256x32xf32> to vector<256x8xf32>
    %40 = tpu.concatenate %39, %39, %39, %39, %39, %39, %39, %39 in 1 : vector<256x8xf32>, vector<256x8xf32>, vector<256x8xf32>, vector<256x8xf32>, vector<256x8xf32>, vector<256x8xf32>, vector<256x8xf32>, vector<256x8xf32> -> vector<256x64xf32>
    %41 = vector.extract_strided_slice %13 {offsets = [0, 64], sizes = [256, 64], strides = [1, 1]} : vector<256x256xf32> to vector<256x64xf32>
    %42 = arith.mulf %41, %40 : vector<256x64xf32>
    %43 = arith.addf %38, %42 : vector<256x64xf32>
    %44 = vector.extract_strided_slice %34 {offsets = [0, 16], sizes = [256, 8], strides = [1, 1]} : vector<256x32xf32> to vector<256x8xf32>
    %45 = tpu.concatenate %44, %44, %44, %44, %44, %44, %44, %44 in 1 : vector<256x8xf32>, vector<256x8xf32>, vector<256x8xf32>, vector<256x8xf32>, vector<256x8xf32>, vector<256x8xf32>, vector<256x8xf32>, vector<256x8xf32> -> vector<256x64xf32>
    %46 = vector.extract_strided_slice %13 {offsets = [0, 128], sizes = [256, 64], strides = [1, 1]} : vector<256x256xf32> to vector<256x64xf32>
    %47 = arith.mulf %46, %45 : vector<256x64xf32>
    %48 = arith.addf %43, %47 : vector<256x64xf32>
    %49 = vector.extract_strided_slice %34 {offsets = [0, 24], sizes = [256, 8], strides = [1, 1]} : vector<256x32xf32> to vector<256x8xf32>
    %50 = tpu.concatenate %49, %49, %49, %49, %49, %49, %49, %49 in 1 : vector<256x8xf32>, vector<256x8xf32>, vector<256x8xf32>, vector<256x8xf32>, vector<256x8xf32>, vector<256x8xf32>, vector<256x8xf32>, vector<256x8xf32> -> vector<256x64xf32>
    %51 = vector.extract_strided_slice %13 {offsets = [0, 192], sizes = [256, 64], strides = [1, 1]} : vector<256x256xf32> to vector<256x64xf32>
    %52 = arith.mulf %51, %50 : vector<256x64xf32>
    %53 = arith.addf %48, %52 : vector<256x64xf32>
    %54 = arith.negf %53 : vector<256x64xf32>
    %55 = math.exp %54 : vector<256x64xf32>
    %cst_10 = arith.constant 1.000000e+00 : f32
    %56 = vector.broadcast %cst_10 : f32 to vector<256x64xf32>
    %57 = arith.addf %56, %55 : vector<256x64xf32>
    %58 = arith.divf %56, %57 : vector<256x64xf32>
    %c0_11 = arith.constant 0 : index
    %c0_12 = arith.constant 0 : index
    %59 = vector.load %arg6[%c0_11, %c0_12] : memref<256x64xf32, #tpu.memory_space<vmem>>, vector<256x64xf32>
    tpu.vector_store %arg6[%c0_11, %c0_12], %58 {strides = array<i32>} : memref<256x64xf32, #tpu.memory_space<vmem>>, vector<256x64xf32>,
    return
  }
  func.func @transform_0(%arg0: i32) -> (i32, i32) {
    %c0_i32 = arith.constant 0 : i32
    %c0_i32_0 = arith.constant 0 : i32
    return %arg0, %c0_i32 : i32, i32
  }
  func.func @transform_1(%arg0: i32) -> (i32, i32) {
    %c0_i32 = arith.constant 0 : i32
    %c0_i32_0 = arith.constant 0 : i32
    %c0_i32_1 = arith.constant 0 : i32
    return %c0_i32, %c0_i32_0 : i32, i32
  }
  func.func @transform_2(%arg0: i32) -> (i32, i32) {
    %c0_i32 = arith.constant 0 : i32
    %c0_i32_0 = arith.constant 0 : i32
    %c0_i32_1 = arith.constant 0 : i32
    return %c0_i32, %c0_i32_0 : i32, i32
  }
  func.func @transform_3(%arg0: i32) -> (i32, i32) {
    %c0_i32 = arith.constant 0 : i32
    %c0_i32_0 = arith.constant 0 : i32
    %c0_i32_1 = arith.constant 0 : i32
    return %c0_i32, %c0_i32_0 : i32, i32
  }
  func.func @transform_4(%arg0: i32) -> (i32, i32) {
    %c0_i32 = arith.constant 0 : i32
    %c0_i32_0 = arith.constant 0 : i32
    %c0_i32_1 = arith.constant 0 : i32
    return %c0_i32, %c0_i32_0 : i32, i32
  }
  func.func @transform_5(%arg0: i32) -> (i32, i32) {
    %c0_i32 = arith.constant 0 : i32
    %c0_i32_0 = arith.constant 0 : i32
    return %arg0, %c0_i32 : i32, i32
  }
}

</mosaic_0001>

<llo_original>
// kernel: tpu_custom_call.1
$region0: #{tpu_custom_call.1}
  #allocation0 [shape = 'u32[]', space=smem, size = 0x4, offset = 0x4, fixed_abs, tag = 'smem constant byte address 0x4 - core index']
  #allocation1 [shape = 'u32[72,128]{1,0:T(1,128)}', space=vmem, size = 0x9000, scoped, tag = 'internal scratch']
  %s0 = inlined_call_operand.vmem [shape: f32[512,4], index: 0, kind: input, shape index: {}]
  %s1 = inlined_call_operand.vmem [shape: f32[4,32], index: 1, kind: input, shape index: {}]
  %s2 = inlined_call_operand.vmem [shape: f32[1,32], index: 2, kind: input, shape index: {}]
  %s3 = inlined_call_operand.vmem [shape: f32[32,416], index: 3, kind: input, shape index: {}]
  %s4 = inlined_call_operand.vmem [shape: f32[1,416], index: 4, kind: input, shape index: {}]
  %s5 = inlined_call_operand.vmem [shape: f32[512,64], index: 5, kind: output, shape index: {}]
  %s6 = sld [smem:[#allocation0]]
  $region53: #{tpu_custom_call.1} parent=0
    _
  %s8 = ssub.s32 1, %s6
  %s9 = scalar_select 0, %s8, %s6
  loop: start=0, step=1, limit=4
  $region2: #{tpu_custom_call.1} parent=0 // loop_pre_header
    _
  $region3: #{tpu_custom_call.1} parent=0 // loop_header
    %s11 = sphi 0, %s15
    %p12 = scmp.ge.s32.totalorder %s11, 4
    %s21 = sphi 0, %s23
    %s24 = sphi 0, %s21
    %s25 = sphi 0, %s24
    %s41 = sphi 0, %s25
    %s45 = sphi 0, %s45
    %s47 = sphi 0, %s45
    %s48 = sphi 0, %s47
    %s62 = sphi 0, %s48
    %s66 = sphi 0, %s66
    %s68 = sphi 0, %s66
    %s69 = sphi 0, %s68
    %s83 = sphi 0, %s69
    %s87 = sphi 0, %s87
    %s89 = sphi 0, %s87
    %s90 = sphi 0, %s89
    %s104 = sphi 0, %s90
    %s108 = sphi 0, %s108
    %s110 = sphi 0, %s108
    %s111 = sphi 0, %s110
    %s125 = sphi 0, %s111
    %s131 = sphi 0, %s133
    %s134 = sphi 0, %s131
    %s135 = sphi 0, %s134
    %s151 = sphi 0, %s135
  $region4: #{tpu_custom_call.1} parent=0 // loop_header_branch
    %14 = sbr.rel (%p12) target = $region8
  $region5: #{tpu_custom_call.1} parent=0 // loop_body
    %s16 = ssub.s32 %s11, 1
    %s17 = ssub.s32 %s11, 2
    %s18 = sadd.s32 %s11, 1
    %s19 = ssub.s32 %s11, %s18
    %p20 = scmp.eq.s32.totalorder %s19, 0
    %s22 = sadd.s32 %s21, 1
    %s23 = scalar_select %p20, %s21, %s22
    %p26 = pneg %p20
    %p27 = scmp.eq.s32.totalorder %s11, 1
    %p28 = por %p26, %p27
    %p29 = scmp.ne.s32.totalorder %s21, %s24
    %p30 = scmp.eq.s32.totalorder %s11, 0
    %p31 = por %p29, %p30
    %p32 = scmp.ne.s32.totalorder %s21, %s24
    %p33 = scmp.eq.s32.totalorder %s16, 1
    %p34 = por %p32, %p33
    %p35 = scmp.ne.s32.totalorder %s24, %s25
    %p36 = scmp.eq.s32.totalorder %s16, 0
    %p37 = por %p35, %p36
    %p38 = scmp.ne.s32.totalorder %s24, %s25
    %p39 = scmp.eq.s32.totalorder %s17, 1
    %p40 = por %p38, %p39
    %p42 = scmp.ne.s32.totalorder %s25, %s41
    %p43 = scmp.eq.s32.totalorder %s17, 0
    %p44 = por %p42, %p43
    %s46 = sadd.s32 %s45, 1
    %p49 = scmp.eq.s32.totalorder %s11, 1
    %p50 = scmp.ne.s32.totalorder %s45, %s47
    %p51 = scmp.eq.s32.totalorder %s11, 0
    %p52 = por %p50, %p51
    %p53 = scmp.ne.s32.totalorder %s45, %s47
    %p54 = scmp.eq.s32.totalorder %s16, 1
    %p55 = por %p53, %p54
    %p56 = scmp.ne.s32.totalorder %s47, %s48
    %p57 = scmp.eq.s32.totalorder %s16, 0
    %p58 = por %p56, %p57
    %p59 = scmp.ne.s32.totalorder %s47, %s48
    %p60 = scmp.eq.s32.totalorder %s17, 1
    %p61 = por %p59, %p60
    %p63 = scmp.ne.s32.totalorder %s48, %s62
    %p64 = scmp.eq.s32.totalorder %s17, 0
    %p65 = por %p63, %p64
    %s67 = sadd.s32 %s66, 1
    %p70 = scmp.eq.s32.totalorder %s11, 1
    %p71 = scmp.ne.s32.totalorder %s66, %s68
    %p72 = scmp.eq.s32.totalorder %s11, 0
    %p73 = por %p71, %p72
    %p74 = scmp.ne.s32.totalorder %s66, %s68
    %p75 = scmp.eq.s32.totalorder %s16, 1
    %p76 = por %p74, %p75
    %p77 = scmp.ne.s32.totalorder %s68, %s69
    %p78 = scmp.eq.s32.totalorder %s16, 0
    %p79 = por %p77, %p78
    %p80 = scmp.ne.s32.totalorder %s68, %s69
    %p81 = scmp.eq.s32.totalorder %s17, 1
    %p82 = por %p80, %p81
    %p84 = scmp.ne.s32.totalorder %s69, %s83
    %p85 = scmp.eq.s32.totalorder %s17, 0
    %p86 = por %p84, %p85
    %s88 = sadd.s32 %s87, 1
    %p91 = scmp.eq.s32.totalorder %s11, 1
    %p92 = scmp.ne.s32.totalorder %s87, %s89
    %p93 = scmp.eq.s32.totalorder %s11, 0
    %p94 = por %p92, %p93
    %p95 = scmp.ne.s32.totalorder %s87, %s89
    %p96 = scmp.eq.s32.totalorder %s16, 1
    %p97 = por %p95, %p96
    %p98 = scmp.ne.s32.totalorder %s89, %s90
    %p99 = scmp.eq.s32.totalorder %s16, 0
    %p100 = por %p98, %p99
    %p101 = scmp.ne.s32.totalorder %s89, %s90
    %p102 = scmp.eq.s32.totalorder %s17, 1
    %p103 = por %p101, %p102
    %p105 = scmp.ne.s32.totalorder %s90, %s104
    %p106 = scmp.eq.s32.totalorder %s17, 0
    %p107 = por %p105, %p106
    %s109 = sadd.s32 %s108, 1
    %p112 = scmp.eq.s32.totalorder %s11, 1
    %p113 = scmp.ne.s32.totalorder %s108, %s110
    %p114 = scmp.eq.s32.totalorder %s11, 0
    %p115 = por %p113, %p114
    %p116 = scmp.ne.s32.totalorder %s108, %s110
    %p117 = scmp.eq.s32.totalorder %s16, 1
    %p118 = por %p116, %p117
    %p119 = scmp.ne.s32.totalorder %s110, %s111
    %p120 = scmp.eq.s32.totalorder %s16, 0
    %p121 = por %p119, %p120
    %p122 = scmp.ne.s32.totalorder %s110, %s111
    %p123 = scmp.eq.s32.totalorder %s17, 1
    %p124 = por %p122, %p123
    %p126 = scmp.ne.s32.totalorder %s111, %s125
    %p127 = scmp.eq.s32.totalorder %s17, 0
    %p128 = por %p126, %p127
    %s129 = ssub.s32 %s11, %s18
    %p130 = scmp.eq.s32.totalorder %s129, 0
    %s132 = sadd.s32 %s131, 1
    %s133 = scalar_select %p130, %s131, %s132
    %p136 = pneg %p130
    %p137 = scmp.eq.s32.totalorder %s11, 1
    %p138 = por %p136, %p137
    %p139 = scmp.ne.s32.totalorder %s131, %s134
    %p140 = scmp.eq.s32.totalorder %s11, 0
    %p141 = por %p139, %p140
    %p142 = scmp.ne.s32.totalorder %s131, %s134
    %p143 = scmp.eq.s32.totalorder %s16, 1
    %p144 = por %p142, %p143
    %p145 = scmp.ne.s32.totalorder %s134, %s135
    %p146 = scmp.eq.s32.totalorder %s16, 0
    %p147 = por %p145, %p146
    %p148 = scmp.ne.s32.totalorder %s134, %s135
    %p149 = scmp.eq.s32.totalorder %s17, 1
    %p150 = por %p148, %p149
    %p152 = scmp.ne.s32.totalorder %s135, %s151
    %p153 = scmp.eq.s32.totalorder %s17, 0
    %p154 = por %p152, %p153
    %p155 = scmp.le.s32.totalorder 1, %s11
    %p156 = scmp.lt.s32.totalorder %s11, 3
    %p157 = pnand %p155, %p156
    %p158 = pneg %p157
    // Predicated region
    $region9: #{tpu_custom_call.1} parent=5 // pred_check
      _
    $region10: #{tpu_custom_call.1} parent=5 // pred_check_branch
      %160 = sbr.rel (%p157) target = $region12
    $region11: #{tpu_custom_call.1} parent=5 // pred_region
      %s161 = ssub.s32 %s11, 1
      // Predicated region
      $region13: #{tpu_custom_call.1} parent=11 // pred_check
        %p162 = pneg %p58
      $region14: #{tpu_custom_call.1} parent=11 // pred_check_branch
        %164 = sbr.rel (%p162) target = $region16
      $region15: #{tpu_custom_call.1} parent=11 // pred_region
        _
      $region16: #{tpu_custom_call.1} parent=11 // pred_fallthru
        _
      // Predicated region
      $region17: #{tpu_custom_call.1} parent=11 // pred_check
        %p165 = pneg %p79
      $region18: #{tpu_custom_call.1} parent=11 // pred_check_branch
        %167 = sbr.rel (%p165) target = $region20
      $region19: #{tpu_custom_call.1} parent=11 // pred_region
        _
      $region20: #{tpu_custom_call.1} parent=11 // pred_fallthru
        _
      // Predicated region
      $region21: #{tpu_custom_call.1} parent=11 // pred_check
        %p168 = pneg %p100
      $region22: #{tpu_custom_call.1} parent=11 // pred_check_branch
        %170 = sbr.rel (%p168) target = $region24
      $region23: #{tpu_custom_call.1} parent=11 // pred_region
        _
      $region24: #{tpu_custom_call.1} parent=11 // pred_fallthru
        _
      // Predicated region
      $region25: #{tpu_custom_call.1} parent=11 // pred_check
        %p171 = pneg %p121
      $region26: #{tpu_custom_call.1} parent=11 // pred_check_branch
        %173 = sbr.rel (%p171) target = $region28
      $region27: #{tpu_custom_call.1} parent=11 // pred_region
        _
      $region28: #{tpu_custom_call.1} parent=11 // pred_fallthru
        _
    $region12: #{tpu_custom_call.1} parent=5 // pred_fallthru
      _
    %p174 = scmp.lt.s32.totalorder %s11, 2
    // Predicated region
    $region29: #{tpu_custom_call.1} parent=5 // pred_check
      %p175 = pneg %p174
    $region30: #{tpu_custom_call.1} parent=5 // pred_check_branch
      %177 = sbr.rel (%p175) target = $region32
    $region31: #{tpu_custom_call.1} parent=5 // pred_region
      // Predicated region
      $region33: #{tpu_custom_call.1} parent=31 // pred_check
        %p178 = pneg %p31
      $region34: #{tpu_custom_call.1} parent=31 // pred_check_branch
        %180 = sbr.rel (%p178) target = $region36
      $region35: #{tpu_custom_call.1} parent=31 // pred_region
        %s181 = smul.u32 32, %s11
        %p182 = scmp.lt.s32.totalorder %s181, 63
        %s183 = scalar_select %p182, %s181, 63
        %s184 = smul.addr %s183, 8
        %s185 = scalar_lea.vmem %s0, %s184
        %s186 = smul.u32 32, %s11
      $region36: #{tpu_custom_call.1} parent=31 // pred_fallthru
        _
    $region32: #{tpu_custom_call.1} parent=5 // pred_fallthru
      _
    %p187 = scmp.le.s32.totalorder 1, %s11
    %p188 = scmp.lt.s32.totalorder %s11, 3
    %p189 = pnand %p187, %p188
    %p190 = pneg %p189
    // Predicated region
    $region37: #{tpu_custom_call.1} parent=5 // pred_check
      _
    $region38: #{tpu_custom_call.1} parent=5 // pred_check_branch
      %192 = sbr.rel (%p189) target = $region40
    $region39: #{tpu_custom_call.1} parent=5 // pred_region
      %s193 = ssub.s32 %s11, 1
      %s194 = smul.u32 32, %s16
      %p195 = scmp.lt.s32.totalorder %s194, 63
      %s196 = scalar_select %p195, %s194, 63
      %s197 = smul.addr %s196, 8
      %s198 = scalar_lea.vmem %s0, %s197
      %p199 = pneg %p37
      %p200 = pneg %p34
      %p201 = pneg %p58
      %p202 = pneg %p55
      %p203 = pneg %p79
      %p204 = pneg %p76
      %p205 = pneg %p100
      %p206 = pneg %p97
      %p207 = pneg %p121
      %p208 = pneg %p118
      %p209 = pneg %p147
      %p210 = pneg %p144
      %s211 = smul.u32 32, %s16
      %p212 = scmp.lt.s32.totalorder %s211, 63
      %s213 = scalar_select %p212, %s211, 63
      %s214 = smul.addr %s213, 8
      %s215 = scalar_lea.vmem %s5, %s214
      %s216 = smul.u32 32, %s16
      %p217 = scmp.lt.s32.totalorder %s216, 63
      %s218 = scalar_select %p217, %s216, 63
      %s219 = smul.addr %s218, 8
      %s220 = scalar_lea.vmem %s0, %s219
      %s221 = smul.u32 32, %s16
      %s222 = smul.u32 32, %s16
      %p223 = scmp.lt.s32.totalorder %s222, 63
      %s224 = scalar_select %p223, %s222, 63
      %s225 = smul.addr %s224, 8
      %s226 = scalar_lea.vmem %s5, %s225
      %s227 = smul.u32 32, %s16
      %v228 = vld [vmem:[%s220] sm:$0xff]
      %v229 = vld [vmem:[%s220 + $0x8] sm:$0xff]
      %v230 = vld [vmem:[%s220 + $0x10] sm:$0xff]
      %v231 = vld [vmem:[%s220 + $0x18] sm:$0xff]
      %v232 = vld [vmem:[%s220 + $0x20] sm:$0xff]
      %v233 = vld [vmem:[%s220 + $0x28] sm:$0xff]
      %v234 = vld [vmem:[%s220 + $0x30] sm:$0xff]
      %v235 = vld [vmem:[%s220 + $0x38] sm:$0xff]
      %v236 = vld [vmem:[%s220 + $0x40] sm:$0xff]
      %v237 = vld [vmem:[%s220 + $0x48] sm:$0xff]
      %v238 = vld [vmem:[%s220 + $0x50] sm:$0xff]
      %v239 = vld [vmem:[%s220 + $0x58] sm:$0xff]
      %v240 = vld [vmem:[%s220 + $0x60] sm:$0xff]
      %v241 = vld [vmem:[%s220 + $0x68] sm:$0xff]
      %v242 = vld [vmem:[%s220 + $0x70] sm:$0xff]
      %v243 = vld [vmem:[%s220 + $0x78] sm:$0xff]
      %v244 = vld [vmem:[%s220 + $0x80] sm:$0xff]
      %v245 = vld [vmem:[%s220 + $0x88] sm:$0xff]
      %v246 = vld [vmem:[%s220 + $0x90] sm:$0xff]
      %v247 = vld [vmem:[%s220 + $0x98] sm:$0xff]
      %v248 = vld [vmem:[%s220 + $0xa0] sm:$0xff]
      %v249 = vld [vmem:[%s220 + $0xa8] sm:$0xff]
      %v250 = vld [vmem:[%s220 + $0xb0] sm:$0xff]
      %v251 = vld [vmem:[%s220 + $0xb8] sm:$0xff]
      %v252 = vld [vmem:[%s220 + $0xc0] sm:$0xff]
      %v253 = vld [vmem:[%s220 + $0xc8] sm:$0xff]
      %v254 = vld [vmem:[%s220 + $0xd0] sm:$0xff]
      %v255 = vld [vmem:[%s220 + $0xd8] sm:$0xff]
      %v256 = vld [vmem:[%s220 + $0xe0] sm:$0xff]
      %v257 = vld [vmem:[%s220 + $0xe8] sm:$0xff]
      %v258 = vld [vmem:[%s220 + $0xf0] sm:$0xff]
      %v259 = vld [vmem:[%s220 + $0xf8] sm:$0xff]
      %v260 = vld [vmem:[%s1] sm:$0xf]
      %v261 = vld [vmem:[%s2] sm:$0x1]
      %v263 = vperm.slane %v261, 0
      %vm265 = vcmask 31744
      %v267 = vsel %vm265, %v228, 0
      %v270 = vsel %vm265, %v229, 0
      %v273 = vsel %vm265, %v230, 0
      %v276 = vsel %vm265, %v231, 0
      %v279 = vsel %vm265, %v232, 0
      %v282 = vsel %vm265, %v233, 0
      %v285 = vsel %vm265, %v234, 0
      %v288 = vsel %vm265, %v235, 0
      %v291 = vsel %vm265, %v236, 0
      %v294 = vsel %vm265, %v237, 0
      %v297 = vsel %vm265, %v238, 0
      %v300 = vsel %vm265, %v239, 0
      %v303 = vsel %vm265, %v240, 0
      %v306 = vsel %vm265, %v241, 0
      %v309 = vsel %vm265, %v242, 0
      %v312 = vsel %vm265, %v243, 0
      %v315 = vsel %vm265, %v244, 0
      %v318 = vsel %vm265, %v245, 0
      %v321 = vsel %vm265, %v246, 0
      %v324 = vsel %vm265, %v247, 0
      %v327 = vsel %vm265, %v248, 0
      %v330 = vsel %vm265, %v249, 0
      %v333 = vsel %vm265, %v250, 0
      %v336 = vsel %vm265, %v251, 0
      %v339 = vsel %vm265, %v252, 0
      %v342 = vsel %vm265, %v253, 0
      %v345 = vsel %vm265, %v254, 0
      %v348 = vsel %vm265, %v255, 0
      %v351 = vsel %vm265, %v256, 0
      %v354 = vsel %vm265, %v257, 0
      %v357 = vsel %vm265, %v258, 0
      %v360 = vsel %vm265, %v259, 0
      %vm362 = vcmask 1043456
      %v364 = vsel %vm362, %v260, 0
      %366 = vmatpush.msra.mxu0 0.0
      %367 = vmatpush.msra.mxu0 0.0
      %368 = vmatpush.msra.mxu0 0.0
      %369 = vmatpush.msra.mxu0 0.0
      %370 = vmatpush.msra.mxu0 0.0
      %371 = vmatpush.msra.mxu0 0.0
      %372 = vmatpush.msra.mxu0 0.0
      %373 = vmatpush.msra.mxu0 0.0
      %374 = vmatpush.msra.mxu0 0.0
      %375 = vmatpush.msra.mxu0 0.0
      %376 = vmatpush.msra.mxu0 0.0
      %377 = vmatpush.msra.mxu0 0.0
      %378 = vmatpush.msra.mxu0 0.0
      %379 = vmatpush.msra.mxu0 0.0
      %380 = vmatpush.msra.mxu0 0.0
      %381 = vmatpush.msra.mxu0 %v364
      %382 = vmatmul.f32.gmra.mxu0 %v267
      %v383 = vpop.f32.mrf.mxu0
      %v384 = vadd.f32 %v263, %v383
      %385 = vmatmul.f32.gmra.mxu0 %v270
      %v386 = vpop.f32.mrf.mxu0
      %v387 = vadd.f32 %v263, %v386
      %388 = vmatmul.f32.gmra.mxu0 %v273
      %v389 = vpop.f32.mrf.mxu0
      %v390 = vadd.f32 %v263, %v389
      %391 = vmatmul.f32.gmra.mxu0 %v276
      %v392 = vpop.f32.mrf.mxu0
      %v393 = vadd.f32 %v263, %v392
      %394 = vmatmul.f32.gmra.mxu0 %v279
      %v395 = vpop.f32.mrf.mxu0
      %v396 = vadd.f32 %v263, %v395
      %397 = vmatmul.f32.gmra.mxu0 %v282
      %v398 = vpop.f32.mrf.mxu0
      %v399 = vadd.f32 %v263, %v398
      %400 = vmatmul.f32.gmra.mxu0 %v285
      %v401 = vpop.f32.mrf.mxu0
      %v402 = vadd.f32 %v263, %v401
      %403 = vmatmul.f32.gmra.mxu0 %v288
      %v404 = vpop.f32.mrf.mxu0
      %v405 = vadd.f32 %v263, %v404
      %406 = vmatmul.f32.gmra.mxu0 %v291
      %v407 = vpop.f32.mrf.mxu0
      %v408 = vadd.f32 %v263, %v407
      %409 = vmatmul.f32.gmra.mxu0 %v294
      %v410 = vpop.f32.mrf.mxu0
      %v411 = vadd.f32 %v263, %v410
      %412 = vmatmul.f32.gmra.mxu0 %v297
      %v413 = vpop.f32.mrf.mxu0
      %v414 = vadd.f32 %v263, %v413
      %415 = vmatmul.f32.gmra.mxu0 %v300
      %v416 = vpop.f32.mrf.mxu0
      %v417 = vadd.f32 %v263, %v416
      %418 = vmatmul.f32.gmra.mxu0 %v303
      %v419 = vpop.f32.mrf.mxu0
      %v420 = vadd.f32 %v263, %v419
      %421 = vmatmul.f32.gmra.mxu0 %v306
      %v422 = vpop.f32.mrf.mxu0
      %v423 = vadd.f32 %v263, %v422
      %424 = vmatmul.f32.gmra.mxu0 %v309
      %v425 = vpop.f32.mrf.mxu0
      %v426 = vadd.f32 %v263, %v425
      %427 = vmatmul.f32.gmra.mxu0 %v312
      %v428 = vpop.f32.mrf.mxu0
      %v429 = vadd.f32 %v263, %v428
      %430 = vmatmul.f32.gmra.mxu0 %v315
      %v431 = vpop.f32.mrf.mxu0
      %v432 = vadd.f32 %v263, %v431
      %433 = vmatmul.f32.gmra.mxu0 %v318
      %v434 = vpop.f32.mrf.mxu0
      %v435 = vadd.f32 %v263, %v434
      %436 = vmatmul.f32.gmra.mxu0 %v321
      %v437 = vpop.f32.mrf.mxu0
      %v438 = vadd.f32 %v263, %v437
      %439 = vmatmul.f32.gmra.mxu0 %v324
      %v440 = vpop.f32.mrf.mxu0
      %v441 = vadd.f32 %v263, %v440
      %442 = vmatmul.f32.gmra.mxu0 %v327
      %v443 = vpop.f32.mrf.mxu0
      %v444 = vadd.f32 %v263, %v443
      %445 = vmatmul.f32.gmra.mxu0 %v330
      %v446 = vpop.f32.mrf.mxu0
      %v447 = vadd.f32 %v263, %v446
      %448 = vmatmul.f32.gmra.mxu0 %v333
      %v449 = vpop.f32.mrf.mxu0
      %v450 = vadd.f32 %v263, %v449
      %451 = vmatmul.f32.gmra.mxu0 %v336
      %v452 = vpop.f32.mrf.mxu0
      %v453 = vadd.f32 %v263, %v452
      %454 = vmatmul.f32.gmra.mxu0 %v339
      %v455 = vpop.f32.mrf.mxu0
      %v456 = vadd.f32 %v263, %v455
      %457 = vmatmul.f32.gmra.mxu0 %v342
      %v458 = vpop.f32.mrf.mxu0
      %v459 = vadd.f32 %v263, %v458
      %460 = vmatmul.f32.gmra.mxu0 %v345
      %v461 = vpop.f32.mrf.mxu0
      %v462 = vadd.f32 %v263, %v461
      %463 = vmatmul.f32.gmra.mxu0 %v348
      %v464 = vpop.f32.mrf.mxu0
      %v465 = vadd.f32 %v263, %v464
      %466 = vmatmul.f32.gmra.mxu0 %v351
      %v467 = vpop.f32.mrf.mxu0
      %v468 = vadd.f32 %v263, %v467
      %469 = vmatmul.f32.gmra.mxu0 %v354
      %v470 = vpop.f32.mrf.mxu0
      %v471 = vadd.f32 %v263, %v470
      %472 = vmatmul.f32.gmra.mxu0 %v357
      %v473 = vpop.f32.mrf.mxu0
      %v474 = vadd.f32 %v263, %v473
      %475 = vmatmul.f32.gmra.mxu0 %v360
      %v476 = vpop.f32.mrf.mxu0
      %v477 = vadd.f32 %v263, %v476
      %478 = vdwg.mxu0
      %v479 = vtanh.pop %v384
      %v480 = vtanh.pop %v387
      %v481 = vtanh.pop %v390
      %v482 = vtanh.pop %v393
      %v483 = vtanh.pop %v396
      %v484 = vtanh.pop %v399
      %v485 = vtanh.pop %v402
      %v486 = vtanh.pop %v405
      %v487 = vtanh.pop %v408
      %v488 = vtanh.pop %v411
      %v489 = vtanh.pop %v414
      %v490 = vtanh.pop %v417
      %v491 = vtanh.pop %v420
      %v492 = vtanh.pop %v423
      %v493 = vtanh.pop %v426
      %v494 = vtanh.pop %v429
      %v495 = vtanh.pop %v432
      %v496 = vtanh.pop %v435
      %v497 = vtanh.pop %v438
      %v498 = vtanh.pop %v441
      %v499 = vtanh.pop %v444
      %v500 = vtanh.pop %v447
      %v501 = vtanh.pop %v450
      %v502 = vtanh.pop %v453
      %v503 = vtanh.pop %v456
      %v504 = vtanh.pop %v459
      %v505 = vtanh.pop %v462
      %v506 = vtanh.pop %v465
      %v507 = vtanh.pop %v468
      %v508 = vtanh.pop %v471
      %v509 = vtanh.pop %v474
      %v510 = vtanh.pop %v477
      %v511 = vld [vmem:[%s3] sm:$0xff]
      %v512 = vld [vmem:[%s3 + $0x8] sm:$0xff]
      %v513 = vld [vmem:[%s3 + $0x10] sm:$0xff]
      %v514 = vld [vmem:[%s3 + $0x18] sm:$0xff]
      %v515 = vld [vmem:[%s3 + $0x20] sm:$0xff]
      %v516 = vld [vmem:[%s3 + $0x28] sm:$0xff]
      %v517 = vld [vmem:[%s3 + $0x30] sm:$0xff]
      %v518 = vld [vmem:[%s3 + $0x38] sm:$0xff]
      %v519 = vld [vmem:[%s3 + $0x40] sm:$0xff]
      %v520 = vld [vmem:[%s3 + $0x48] sm:$0xff]
      %v521 = vld [vmem:[%s3 + $0x50] sm:$0xff]
      %v522 = vld [vmem:[%s3 + $0x58] sm:$0xff]
      %v523 = vld [vmem:[%s3 + $0x60] sm:$0xff]
      %v524 = vld [vmem:[%s3 + $0x68] sm:$0xff]
      %v525 = vld [vmem:[%s3 + $0x70] sm:$0xff]
      %v526 = vld [vmem:[%s3 + $0x78] sm:$0xff]
      %v527 = vld [vmem:[%s4] sm:$0xf]
      %v529 = vperm.slane %v527, 0
      %v530 = vperm.slane %v527, 1
      %v531 = vperm.slane %v527, 2
      %v532 = vperm.slane %v527, 3
      %vm537 = vcmask 261120
      %v539 = vsel %vm537, %v479, 0
      %v542 = vsel %vm537, %v480, 0
      %v545 = vsel %vm537, %v481, 0
      %v548 = vsel %vm537, %v482, 0
      %v551 = vsel %vm537, %v483, 0
      %v554 = vsel %vm537, %v484, 0
      %v557 = vsel %vm537, %v485, 0
      %v560 = vsel %vm537, %v486, 0
      %v563 = vsel %vm537, %v487, 0
      %v566 = vsel %vm537, %v488, 0
      %v569 = vsel %vm537, %v489, 0
      %v572 = vsel %vm537, %v490, 0
      %v575 = vsel %vm537, %v491, 0
      %v578 = vsel %vm537, %v492, 0
      %v581 = vsel %vm537, %v493, 0
      %v584 = vsel %vm537, %v494, 0
      %v587 = vsel %vm537, %v495, 0
      %v590 = vsel %vm537, %v496, 0
      %v593 = vsel %vm537, %v497, 0
      %v596 = vsel %vm537, %v498, 0
      %v599 = vsel %vm537, %v499, 0
      %v602 = vsel %vm537, %v500, 0
      %v605 = vsel %vm537, %v501, 0
      %v608 = vsel %vm537, %v502, 0
      %v611 = vsel %vm537, %v503, 0
      %v614 = vsel %vm537, %v504, 0
      %v617 = vsel %vm537, %v505, 0
      %v620 = vsel %vm537, %v506, 0
      %v623 = vsel %vm537, %v507, 0
      %v626 = vsel %vm537, %v508, 0
      %v629 = vsel %vm537, %v509, 0
      %v632 = vsel %vm537, %v510, 0
      %634 = vmatpush.msra.mxu0 0.0
      %635 = vmatpush.msra.mxu0 0.0
      %636 = vmatpush.msra.mxu0 0.0
      %637 = vmatpush.msra.mxu0 0.0
      %638 = vmatpush.msra.mxu0 0.0
      %639 = vmatpush.msra.mxu0 0.0
      %640 = vmatpush.msra.mxu0 0.0
      %641 = vmatpush.msra.mxu0 0.0
      %642 = vmatpush.msra.mxu0 0.0
      %643 = vmatpush.msra.mxu0 0.0
      %644 = vmatpush.msra.mxu0 0.0
      %645 = vmatpush.msra.mxu0 0.0
      %646 = vmatpush.msra.mxu0 %v523
      %647 = vmatpush.msra.mxu0 %v519
      %648 = vmatpush.msra.mxu0 %v515
      %649 = vmatpush.msra.mxu0 %v511
      %650 = vmatmul.f32.gmra.mxu0 %v539
      %v651 = vpop.f32.mrf.mxu0
      %v652 = vadd.f32 %v529, %v651
      %653 = vmatmul.f32.gmra.mxu0 %v542
      %v654 = vpop.f32.mrf.mxu0
      %v655 = vadd.f32 %v529, %v654
      %656 = vmatmul.f32.gmra.mxu0 %v545
      %v657 = vpop.f32.mrf.mxu0
      %v658 = vadd.f32 %v529, %v657
      %659 = vmatmul.f32.gmra.mxu0 %v548
      %v660 = vpop.f32.mrf.mxu0
      %v661 = vadd.f32 %v529, %v660
      %662 = vmatmul.f32.gmra.mxu0 %v551
      %v663 = vpop.f32.mrf.mxu0
      %v664 = vadd.f32 %v529, %v663
      %665 = vmatmul.f32.gmra.mxu0 %v554
      %v666 = vpop.f32.mrf.mxu0
      %v667 = vadd.f32 %v529, %v666
      %668 = vmatmul.f32.gmra.mxu0 %v557
      %v669 = vpop.f32.mrf.mxu0
      %v670 = vadd.f32 %v529, %v669
      %671 = vmatmul.f32.gmra.mxu0 %v560
      %v672 = vpop.f32.mrf.mxu0
      %v673 = vadd.f32 %v529, %v672
      %674 = vmatmul.f32.gmra.mxu0 %v563
      %v675 = vpop.f32.mrf.mxu0
      %v676 = vadd.f32 %v529, %v675
      %677 = vmatmul.f32.gmra.mxu0 %v566
      %v678 = vpop.f32.mrf.mxu0
      %v679 = vadd.f32 %v529, %v678
      %680 = vmatmul.f32.gmra.mxu0 %v569
      %v681 = vpop.f32.mrf.mxu0
      %v682 = vadd.f32 %v529, %v681
      %683 = vmatmul.f32.gmra.mxu0 %v572
      %v684 = vpop.f32.mrf.mxu0
      %v685 = vadd.f32 %v529, %v684
      %686 = vmatmul.f32.gmra.mxu0 %v575
      %v687 = vpop.f32.mrf.mxu0
      %v688 = vadd.f32 %v529, %v687
      %689 = vmatmul.f32.gmra.mxu0 %v578
      %v690 = vpop.f32.mrf.mxu0
      %v691 = vadd.f32 %v529, %v690
      %692 = vmatmul.f32.gmra.mxu0 %v581
      %v693 = vpop.f32.mrf.mxu0
      %v694 = vadd.f32 %v529, %v693
      %695 = vmatmul.f32.gmra.mxu0 %v584
      %v696 = vpop.f32.mrf.mxu0
      %v697 = vadd.f32 %v529, %v696
      %698 = vmatmul.f32.gmra.mxu0 %v587
      %v699 = vpop.f32.mrf.mxu0
      %v700 = vadd.f32 %v529, %v699
      %701 = vmatmul.f32.gmra.mxu0 %v590
      %v702 = vpop.f32.mrf.mxu0
      %v703 = vadd.f32 %v529, %v702
      %704 = vmatmul.f32.gmra.mxu0 %v593
      %v705 = vpop.f32.mrf.mxu0
      %v706 = vadd.f32 %v529, %v705
      %707 = vmatmul.f32.gmra.mxu0 %v596
      %v708 = vpop.f32.mrf.mxu0
      %v709 = vadd.f32 %v529, %v708
      %710 = vmatmul.f32.gmra.mxu0 %v599
      %v711 = vpop.f32.mrf.mxu0
      %v712 = vadd.f32 %v529, %v711
      %713 = vmatmul.f32.gmra.mxu0 %v602
      %v714 = vpop.f32.mrf.mxu0
      %v715 = vadd.f32 %v529, %v714
      %716 = vmatmul.f32.gmra.mxu0 %v605
      %v717 = vpop.f32.mrf.mxu0
      %v718 = vadd.f32 %v529, %v717
      %719 = vmatmul.f32.gmra.mxu0 %v608
      %v720 = vpop.f32.mrf.mxu0
      %v721 = vadd.f32 %v529, %v720
      %722 = vmatmul.f32.gmra.mxu0 %v611
      %v723 = vpop.f32.mrf.mxu0
      %v724 = vadd.f32 %v529, %v723
      %725 = vmatmul.f32.gmra.mxu0 %v614
      %v726 = vpop.f32.mrf.mxu0
      %v727 = vadd.f32 %v529, %v726
      %728 = vmatmul.f32.gmra.mxu0 %v617
      %v729 = vpop.f32.mrf.mxu0
      %v730 = vadd.f32 %v529, %v729
      %731 = vmatmul.f32.gmra.mxu0 %v620
      %v732 = vpop.f32.mrf.mxu0
      %v733 = vadd.f32 %v529, %v732
      %734 = vmatmul.f32.gmra.mxu0 %v623
      %v735 = vpop.f32.mrf.mxu0
      %v736 = vadd.f32 %v529, %v735
      %737 = vmatmul.f32.gmra.mxu0 %v626
      %v738 = vpop.f32.mrf.mxu0
      %v739 = vadd.f32 %v529, %v738
      %740 = vmatmul.f32.gmra.mxu0 %v629
      %v741 = vpop.f32.mrf.mxu0
      %v742 = vadd.f32 %v529, %v741
      %743 = vmatmul.f32.gmra.mxu0 %v632
      %v744 = vpop.f32.mrf.mxu0
      %v745 = vadd.f32 %v529, %v744
      %746 = vdwg.mxu0
      %747 = vmatpush.msra.mxu0 0.0
      %748 = vmatpush.msra.mxu0 0.0
      %749 = vmatpush.msra.mxu0 0.0
      %750 = vmatpush.msra.mxu0 0.0
      %751 = vmatpush.msra.mxu0 0.0
      %752 = vmatpush.msra.mxu0 0.0
      %753 = vmatpush.msra.mxu0 0.0
      %754 = vmatpush.msra.mxu0 0.0
      %755 = vmatpush.msra.mxu0 0.0
      %756 = vmatpush.msra.mxu0 0.0
      %757 = vmatpush.msra.mxu0 0.0
      %758 = vmatpush.msra.mxu0 0.0
      %759 = vmatpush.msra.mxu0 %v524
      %760 = vmatpush.msra.mxu0 %v520
      %761 = vmatpush.msra.mxu0 %v516
      %762 = vmatpush.msra.mxu0 %v512
      %763 = vmatmul.f32.gmra.mxu0 %v539
      %v764 = vpop.f32.mrf.mxu0
      %v765 = vadd.f32 %v530, %v764
      %766 = vmatmul.f32.gmra.mxu0 %v542
      %v767 = vpop.f32.mrf.mxu0
      %v768 = vadd.f32 %v530, %v767
      %769 = vmatmul.f32.gmra.mxu0 %v545
      %v770 = vpop.f32.mrf.mxu0
      %v771 = vadd.f32 %v530, %v770
      %772 = vmatmul.f32.gmra.mxu0 %v548
      %v773 = vpop.f32.mrf.mxu0
      %v774 = vadd.f32 %v530, %v773
      %775 = vmatmul.f32.gmra.mxu0 %v551
      %v776 = vpop.f32.mrf.mxu0
      %v777 = vadd.f32 %v530, %v776
      %778 = vmatmul.f32.gmra.mxu0 %v554
      %v779 = vpop.f32.mrf.mxu0
      %v780 = vadd.f32 %v530, %v779
      %781 = vmatmul.f32.gmra.mxu0 %v557
      %v782 = vpop.f32.mrf.mxu0
      %v783 = vadd.f32 %v530, %v782
      %784 = vmatmul.f32.gmra.mxu0 %v560
      %v785 = vpop.f32.mrf.mxu0
      %v786 = vadd.f32 %v530, %v785
      %787 = vmatmul.f32.gmra.mxu0 %v563
      %v788 = vpop.f32.mrf.mxu0
      %v789 = vadd.f32 %v530, %v788
      %790 = vmatmul.f32.gmra.mxu0 %v566
      %v791 = vpop.f32.mrf.mxu0
      %v792 = vadd.f32 %v530, %v791
      %793 = vmatmul.f32.gmra.mxu0 %v569
      %v794 = vpop.f32.mrf.mxu0
      %v795 = vadd.f32 %v530, %v794
      %796 = vmatmul.f32.gmra.mxu0 %v572
      %v797 = vpop.f32.mrf.mxu0
      %v798 = vadd.f32 %v530, %v797
      %799 = vmatmul.f32.gmra.mxu0 %v575
      %v800 = vpop.f32.mrf.mxu0
      %v801 = vadd.f32 %v530, %v800
      %802 = vmatmul.f32.gmra.mxu0 %v578
      %v803 = vpop.f32.mrf.mxu0
      %v804 = vadd.f32 %v530, %v803
      %805 = vmatmul.f32.gmra.mxu0 %v581
      %v806 = vpop.f32.mrf.mxu0
      %v807 = vadd.f32 %v530, %v806
      %808 = vmatmul.f32.gmra.mxu0 %v584
      %v809 = vpop.f32.mrf.mxu0
      %v810 = vadd.f32 %v530, %v809
      %811 = vmatmul.f32.gmra.mxu0 %v587
      %v812 = vpop.f32.mrf.mxu0
      %v813 = vadd.f32 %v530, %v812
      %814 = vmatmul.f32.gmra.mxu0 %v590
      %v815 = vpop.f32.mrf.mxu0
      %v816 = vadd.f32 %v530, %v815
      %817 = vmatmul.f32.gmra.mxu0 %v593
      %v818 = vpop.f32.mrf.mxu0
      %v819 = vadd.f32 %v530, %v818
      %820 = vmatmul.f32.gmra.mxu0 %v596
      %v821 = vpop.f32.mrf.mxu0
      %v822 = vadd.f32 %v530, %v821
      %823 = vmatmul.f32.gmra.mxu0 %v599
      %v824 = vpop.f32.mrf.mxu0
      %v825 = vadd.f32 %v530, %v824
      %826 = vmatmul.f32.gmra.mxu0 %v602
      %v827 = vpop.f32.mrf.mxu0
      %v828 = vadd.f32 %v530, %v827
      %829 = vmatmul.f32.gmra.mxu0 %v605
      %v830 = vpop.f32.mrf.mxu0
      %v831 = vadd.f32 %v530, %v830
      %832 = vmatmul.f32.gmra.mxu0 %v608
      %v833 = vpop.f32.mrf.mxu0
      %v834 = vadd.f32 %v530, %v833
      %835 = vmatmul.f32.gmra.mxu0 %v611
      %v836 = vpop.f32.mrf.mxu0
      %v837 = vadd.f32 %v530, %v836
      %838 = vmatmul.f32.gmra.mxu0 %v614
      %v839 = vpop.f32.mrf.mxu0
      %v840 = vadd.f32 %v530, %v839
      %841 = vmatmul.f32.gmra.mxu0 %v617
      %v842 = vpop.f32.mrf.mxu0
      %v843 = vadd.f32 %v530, %v842
      %844 = vmatmul.f32.gmra.mxu0 %v620
      %v845 = vpop.f32.mrf.mxu0
      %v846 = vadd.f32 %v530, %v845
      %847 = vmatmul.f32.gmra.mxu0 %v623
      %v848 = vpop.f32.mrf.mxu0
      %v849 = vadd.f32 %v530, %v848
      %850 = vmatmul.f32.gmra.mxu0 %v626
      %v851 = vpop.f32.mrf.mxu0
      %v852 = vadd.f32 %v530, %v851
      %853 = vmatmul.f32.gmra.mxu0 %v629
      %v854 = vpop.f32.mrf.mxu0
      %v855 = vadd.f32 %v530, %v854
      %856 = vmatmul.f32.gmra.mxu0 %v632
      %v857 = vpop.f32.mrf.mxu0
      %v858 = vadd.f32 %v530, %v857
      %859 = vdwg.mxu0
      %860 = vmatpush.msra.mxu0 0.0
      %861 = vmatpush.msra.mxu0 0.0
      %862 = vmatpush.msra.mxu0 0.0
      %863 = vmatpush.msra.mxu0 0.0
      %864 = vmatpush.msra.mxu0 0.0
      %865 = vmatpush.msra.mxu0 0.0
      %866 = vmatpush.msra.mxu0 0.0
      %867 = vmatpush.msra.mxu0 0.0
      %868 = vmatpush.msra.mxu0 0.0
      %869 = vmatpush.msra.mxu0 0.0
      %870 = vmatpush.msra.mxu0 0.0
      %871 = vmatpush.msra.mxu0 0.0
      %872 = vmatpush.msra.mxu0 %v525
      %873 = vmatpush.msra.mxu0 %v521
      %874 = vmatpush.msra.mxu0 %v517
      %875 = vmatpush.msra.mxu0 %v513
      %876 = vmatmul.f32.gmra.mxu0 %v539
      %v877 = vpop.f32.mrf.mxu0
      %v878 = vadd.f32 %v531, %v877
      %879 = vmatmul.f32.gmra.mxu0 %v542
      %v880 = vpop.f32.mrf.mxu0
      %v881 = vadd.f32 %v531, %v880
      %882 = vmatmul.f32.gmra.mxu0 %v545
      %v883 = vpop.f32.mrf.mxu0
      %v884 = vadd.f32 %v531, %v883
      %885 = vmatmul.f32.gmra.mxu0 %v548
      %v886 = vpop.f32.mrf.mxu0
      %v887 = vadd.f32 %v531, %v886
      %888 = vmatmul.f32.gmra.mxu0 %v551
      %v889 = vpop.f32.mrf.mxu0
      %v890 = vadd.f32 %v531, %v889
      %891 = vmatmul.f32.gmra.mxu0 %v554
      %v892 = vpop.f32.mrf.mxu0
      %v893 = vadd.f32 %v531, %v892
      %894 = vmatmul.f32.gmra.mxu0 %v557
      %v895 = vpop.f32.mrf.mxu0
      %v896 = vadd.f32 %v531, %v895
      %897 = vmatmul.f32.gmra.mxu0 %v560
      %v898 = vpop.f32.mrf.mxu0
      %v899 = vadd.f32 %v531, %v898
      %900 = vmatmul.f32.gmra.mxu0 %v563
      %v901 = vpop.f32.mrf.mxu0
      %v902 = vadd.f32 %v531, %v901
      %903 = vmatmul.f32.gmra.mxu0 %v566
      %v904 = vpop.f32.mrf.mxu0
      %v905 = vadd.f32 %v531, %v904
      %906 = vmatmul.f32.gmra.mxu0 %v569
      %v907 = vpop.f32.mrf.mxu0
      %v908 = vadd.f32 %v531, %v907
      %909 = vmatmul.f32.gmra.mxu0 %v572
      %v910 = vpop.f32.mrf.mxu0
      %v911 = vadd.f32 %v531, %v910
      %912 = vmatmul.f32.gmra.mxu0 %v575
      %v913 = vpop.f32.mrf.mxu0
      %v914 = vadd.f32 %v531, %v913
      %915 = vmatmul.f32.gmra.mxu0 %v578
      %v916 = vpop.f32.mrf.mxu0
      %v917 = vadd.f32 %v531, %v916
      %918 = vmatmul.f32.gmra.mxu0 %v581
      %v919 = vpop.f32.mrf.mxu0
      %v920 = vadd.f32 %v531, %v919
      %921 = vmatmul.f32.gmra.mxu0 %v584
      %v922 = vpop.f32.mrf.mxu0
      %v923 = vadd.f32 %v531, %v922
      %924 = vmatmul.f32.gmra.mxu0 %v587
      %v925 = vpop.f32.mrf.mxu0
      %v926 = vadd.f32 %v531, %v925
      %927 = vmatmul.f32.gmra.mxu0 %v590
      %v928 = vpop.f32.mrf.mxu0
      %v929 = vadd.f32 %v531, %v928
      %930 = vmatmul.f32.gmra.mxu0 %v593
      %v931 = vpop.f32.mrf.mxu0
      %v932 = vadd.f32 %v531, %v931
      %933 = vmatmul.f32.gmra.mxu0 %v596
      %v934 = vpop.f32.mrf.mxu0
      %v935 = vadd.f32 %v531, %v934
      %936 = vmatmul.f32.gmra.mxu0 %v599
      %v937 = vpop.f32.mrf.mxu0
      %v938 = vadd.f32 %v531, %v937
      %939 = vmatmul.f32.gmra.mxu0 %v602
      %v940 = vpop.f32.mrf.mxu0
      %v941 = vadd.f32 %v531, %v940
      %942 = vmatmul.f32.gmra.mxu0 %v605
      %v943 = vpop.f32.mrf.mxu0
      %v944 = vadd.f32 %v531, %v943
      %945 = vmatmul.f32.gmra.mxu0 %v608
      %v946 = vpop.f32.mrf.mxu0
      %v947 = vadd.f32 %v531, %v946
      %948 = vmatmul.f32.gmra.mxu0 %v611
      %v949 = vpop.f32.mrf.mxu0
      %v950 = vadd.f32 %v531, %v949
      %951 = vmatmul.f32.gmra.mxu0 %v614
      %v952 = vpop.f32.mrf.mxu0
      %v953 = vadd.f32 %v531, %v952
      %954 = vmatmul.f32.gmra.mxu0 %v617
      %v955 = vpop.f32.mrf.mxu0
      %v956 = vadd.f32 %v531, %v955
      %957 = vmatmul.f32.gmra.mxu0 %v620
      %v958 = vpop.f32.mrf.mxu0
      %v959 = vadd.f32 %v531, %v958
      %960 = vmatmul.f32.gmra.mxu0 %v623
      %v961 = vpop.f32.mrf.mxu0
      %v962 = vadd.f32 %v531, %v961
      %963 = vmatmul.f32.gmra.mxu0 %v626
      %v964 = vpop.f32.mrf.mxu0
      %v965 = vadd.f32 %v531, %v964
      %966 = vmatmul.f32.gmra.mxu0 %v629
      %v967 = vpop.f32.mrf.mxu0
      %v968 = vadd.f32 %v531, %v967
      %969 = vmatmul.f32.gmra.mxu0 %v632
      %v970 = vpop.f32.mrf.mxu0
      %v971 = vadd.f32 %v531, %v970
      %972 = vdwg.mxu0
      %973 = vmatpush.msra.mxu0 0.0
      %974 = vmatpush.msra.mxu0 0.0
      %975 = vmatpush.msra.mxu0 0.0
      %976 = vmatpush.msra.mxu0 0.0
      %977 = vmatpush.msra.mxu0 0.0
      %978 = vmatpush.msra.mxu0 0.0
      %979 = vmatpush.msra.mxu0 0.0
      %980 = vmatpush.msra.mxu0 0.0
      %981 = vmatpush.msra.mxu0 0.0
      %982 = vmatpush.msra.mxu0 0.0
      %983 = vmatpush.msra.mxu0 0.0
      %984 = vmatpush.msra.mxu0 0.0
      %985 = vmatpush.msra.mxu0 %v526
      %986 = vmatpush.msra.mxu0 %v522
      %987 = vmatpush.msra.mxu0 %v518
      %988 = vmatpush.msra.mxu0 %v514
      %989 = vmatmul.f32.gmra.mxu0 %v539
      %v990 = vpop.f32.mrf.mxu0
      %v991 = vadd.f32 %v532, %v990
      %992 = vmatmul.f32.gmra.mxu0 %v542
      %v993 = vpop.f32.mrf.mxu0
      %v994 = vadd.f32 %v532, %v993
      %995 = vmatmul.f32.gmra.mxu0 %v545
      %v996 = vpop.f32.mrf.mxu0
      %v997 = vadd.f32 %v532, %v996
      %998 = vmatmul.f32.gmra.mxu0 %v548
      %v999 = vpop.f32.mrf.mxu0
      %v1000 = vadd.f32 %v532, %v999
      %1001 = vmatmul.f32.gmra.mxu0 %v551
      %v1002 = vpop.f32.mrf.mxu0
      %v1003 = vadd.f32 %v532, %v1002
      %1004 = vmatmul.f32.gmra.mxu0 %v554
      %v1005 = vpop.f32.mrf.mxu0
      %v1006 = vadd.f32 %v532, %v1005
      %1007 = vmatmul.f32.gmra.mxu0 %v557
      %v1008 = vpop.f32.mrf.mxu0
      %v1009 = vadd.f32 %v532, %v1008
      %1010 = vmatmul.f32.gmra.mxu0 %v560
      %v1011 = vpop.f32.mrf.mxu0
      %v1012 = vadd.f32 %v532, %v1011
      %1013 = vmatmul.f32.gmra.mxu0 %v563
      %v1014 = vpop.f32.mrf.mxu0
      %v1015 = vadd.f32 %v532, %v1014
      %1016 = vmatmul.f32.gmra.mxu0 %v566
      %v1017 = vpop.f32.mrf.mxu0
      %v1018 = vadd.f32 %v532, %v1017
      %1019 = vmatmul.f32.gmra.mxu0 %v569
      %v1020 = vpop.f32.mrf.mxu0
      %v1021 = vadd.f32 %v532, %v1020
      %1022 = vmatmul.f32.gmra.mxu0 %v572
      %v1023 = vpop.f32.mrf.mxu0
      %v1024 = vadd.f32 %v532, %v1023
      %1025 = vmatmul.f32.gmra.mxu0 %v575
      %v1026 = vpop.f32.mrf.mxu0
      %v1027 = vadd.f32 %v532, %v1026
      %1028 = vmatmul.f32.gmra.mxu0 %v578
      %v1029 = vpop.f32.mrf.mxu0
      %v1030 = vadd.f32 %v532, %v1029
      %1031 = vmatmul.f32.gmra.mxu0 %v581
      %v1032 = vpop.f32.mrf.mxu0
      %v1033 = vadd.f32 %v532, %v1032
      %1034 = vmatmul.f32.gmra.mxu0 %v584
      %v1035 = vpop.f32.mrf.mxu0
      %v1036 = vadd.f32 %v532, %v1035
      %1037 = vmatmul.f32.gmra.mxu0 %v587
      %v1038 = vpop.f32.mrf.mxu0
      %v1039 = vadd.f32 %v532, %v1038
      %1040 = vmatmul.f32.gmra.mxu0 %v590
      %v1041 = vpop.f32.mrf.mxu0
      %v1042 = vadd.f32 %v532, %v1041
      %1043 = vmatmul.f32.gmra.mxu0 %v593
      %v1044 = vpop.f32.mrf.mxu0
      %v1045 = vadd.f32 %v532, %v1044
      %1046 = vmatmul.f32.gmra.mxu0 %v596
      %v1047 = vpop.f32.mrf.mxu0
      %v1048 = vadd.f32 %v532, %v1047
      %1049 = vmatmul.f32.gmra.mxu0 %v599
      %v1050 = vpop.f32.mrf.mxu0
      %v1051 = vadd.f32 %v532, %v1050
      %1052 = vmatmul.f32.gmra.mxu0 %v602
      %v1053 = vpop.f32.mrf.mxu0
      %v1054 = vadd.f32 %v532, %v1053
      %1055 = vmatmul.f32.gmra.mxu0 %v605
      %v1056 = vpop.f32.mrf.mxu0
      %v1057 = vadd.f32 %v532, %v1056
      %1058 = vmatmul.f32.gmra.mxu0 %v608
      %v1059 = vpop.f32.mrf.mxu0
      %v1060 = vadd.f32 %v532, %v1059
      %1061 = vmatmul.f32.gmra.mxu0 %v611
      %v1062 = vpop.f32.mrf.mxu0
      %v1063 = vadd.f32 %v532, %v1062
      %1064 = vmatmul.f32.gmra.mxu0 %v614
      %v1065 = vpop.f32.mrf.mxu0
      %v1066 = vadd.f32 %v532, %v1065
      %1067 = vmatmul.f32.gmra.mxu0 %v617
      %v1068 = vpop.f32.mrf.mxu0
      %v1069 = vadd.f32 %v532, %v1068
      %1070 = vmatmul.f32.gmra.mxu0 %v620
      %v1071 = vpop.f32.mrf.mxu0
      %v1072 = vadd.f32 %v532, %v1071
      %1073 = vmatmul.f32.gmra.mxu0 %v623
      %v1074 = vpop.f32.mrf.mxu0
      %v1075 = vadd.f32 %v532, %v1074
      %1076 = vmatmul.f32.gmra.mxu0 %v626
      %v1077 = vpop.f32.mrf.mxu0
      %v1078 = vadd.f32 %v532, %v1077
      %1079 = vmatmul.f32.gmra.mxu0 %v629
      %v1080 = vpop.f32.mrf.mxu0
      %v1081 = vadd.f32 %v532, %v1080
      %1082 = vmatmul.f32.gmra.mxu0 %v632
      %v1083 = vpop.f32.mrf.mxu0
      %v1084 = vadd.f32 %v532, %v1083
      %1085 = vdwg.mxu0
      %v1086 = vtanh.pop %v652
      %v1087 = vtanh.pop %v765
      %v1088 = vtanh.pop %v878
      %v1089 = vtanh.pop %v991
      %v1090 = vtanh.pop %v655
      %v1091 = vtanh.pop %v768
      %v1092 = vtanh.pop %v881
      %v1093 = vtanh.pop %v994
      %v1094 = vtanh.pop %v658
      %v1095 = vtanh.pop %v771
      %v1096 = vtanh.pop %v884
      %v1097 = vtanh.pop %v997
      %v1098 = vtanh.pop %v661
      %v1099 = vtanh.pop %v774
      %v1100 = vtanh.pop %v887
      %v1101 = vtanh.pop %v1000
      %v1102 = vtanh.pop %v664
      %v1103 = vtanh.pop %v777
      %v1104 = vtanh.pop %v890
      %v1105 = vtanh.pop %v1003
      %v1106 = vtanh.pop %v667
      %v1107 = vtanh.pop %v780
      %v1108 = vtanh.pop %v893
      %v1109 = vtanh.pop %v1006
      %v1110 = vtanh.pop %v670
      %v1111 = vtanh.pop %v783
      %v1112 = vtanh.pop %v896
      %v1113 = vtanh.pop %v1009
      %v1114 = vtanh.pop %v673
      %v1115 = vtanh.pop %v786
      %v1116 = vtanh.pop %v899
      %v1117 = vtanh.pop %v1012
      %v1118 = vtanh.pop %v676
      %v1119 = vtanh.pop %v789
      %v1120 = vtanh.pop %v902
      %v1121 = vtanh.pop %v1015
      %v1122 = vtanh.pop %v679
      %v1123 = vtanh.pop %v792
      %v1124 = vtanh.pop %v905
      %v1125 = vtanh.pop %v1018
      %v1126 = vtanh.pop %v682
      %v1127 = vtanh.pop %v795
      %v1128 = vtanh.pop %v908
      %v1129 = vtanh.pop %v1021
      %v1130 = vtanh.pop %v685
      %v1131 = vtanh.pop %v798
      %v1132 = vtanh.pop %v911
      %v1133 = vtanh.pop %v1024
      %v1134 = vtanh.pop %v688
      %v1135 = vtanh.pop %v801
      %v1136 = vtanh.pop %v914
      %v1137 = vtanh.pop %v1027
      %v1138 = vtanh.pop %v691
      %v1139 = vtanh.pop %v804
      %v1140 = vtanh.pop %v917
      %v1141 = vtanh.pop %v1030
      %v1142 = vtanh.pop %v694
      %v1143 = vtanh.pop %v807
      %v1144 = vtanh.pop %v920
      %v1145 = vtanh.pop %v1033
      %v1146 = vtanh.pop %v697
      %v1147 = vtanh.pop %v810
      %v1148 = vtanh.pop %v923
      %v1149 = vtanh.pop %v1036
      %v1150 = vtanh.pop %v700
      %v1151 = vtanh.pop %v813
      %v1152 = vtanh.pop %v926
      %v1153 = vtanh.pop %v1039
      %v1154 = vtanh.pop %v703
      %v1155 = vtanh.pop %v816
      %v1156 = vtanh.pop %v929
      %v1157 = vtanh.pop %v1042
      %v1158 = vtanh.pop %v706
      %v1159 = vtanh.pop %v819
      %v1160 = vtanh.pop %v932
      %v1161 = vtanh.pop %v1045
      %v1162 = vtanh.pop %v709
      %v1163 = vtanh.pop %v822
      %v1164 = vtanh.pop %v935
      %v1165 = vtanh.pop %v1048
      %v1166 = vtanh.pop %v712
      %v1167 = vtanh.pop %v825
      %v1168 = vtanh.pop %v938
      %v1169 = vtanh.pop %v1051
      %v1170 = vtanh.pop %v715
      %v1171 = vtanh.pop %v828
      %v1172 = vtanh.pop %v941
      %v1173 = vtanh.pop %v1054
      %v1174 = vtanh.pop %v718
      %v1175 = vtanh.pop %v831
      %v1176 = vtanh.pop %v944
      %v1177 = vtanh.pop %v1057
      %v1178 = vtanh.pop %v721
      %v1179 = vtanh.pop %v834
      %v1180 = vtanh.pop %v947
      %v1181 = vtanh.pop %v1060
      %v1182 = vtanh.pop %v724
      %v1183 = vtanh.pop %v837
      %v1184 = vtanh.pop %v950
      %v1185 = vtanh.pop %v1063
      %v1186 = vtanh.pop %v727
      %v1187 = vtanh.pop %v840
      %v1188 = vtanh.pop %v953
      %v1189 = vtanh.pop %v1066
      %v1190 = vtanh.pop %v730
      %v1191 = vtanh.pop %v843
      %v1192 = vtanh.pop %v956
      %v1193 = vtanh.pop %v1069
      %v1194 = vtanh.pop %v733
      %v1195 = vtanh.pop %v846
      %v1196 = vtanh.pop %v959
      %v1197 = vtanh.pop %v1072
      %v1198 = vtanh.pop %v736
      %v1199 = vtanh.pop %v849
      %v1200 = vtanh.pop %v962
      %v1201 = vtanh.pop %v1075
      %v1202 = vtanh.pop %v739
      %v1203 = vtanh.pop %v852
      %v1204 = vtanh.pop %v965
      %v1205 = vtanh.pop %v1078
      %v1206 = vtanh.pop %v742
      %v1207 = vtanh.pop %v855
      %v1208 = vtanh.pop %v968
      %v1209 = vtanh.pop %v1081
      %v1210 = vtanh.pop %v745
      %v1211 = vtanh.pop %v858
      %v1212 = vtanh.pop %v971
      %v1213 = vtanh.pop %v1084
      %1246 = vrot.lane.b32.xlu0 %v1089, 8
      %v1247 = vpop.permute.xlu0 %1246
      %1248 = vrot.lane.b32.xlu0 %v1093, 8
      %v1249 = vpop.permute.xlu0 %1248
      %1250 = vrot.lane.b32.xlu0 %v1097, 8
      %v1251 = vpop.permute.xlu0 %1250
      %1252 = vrot.lane.b32.xlu0 %v1101, 8
      %v1253 = vpop.permute.xlu0 %1252
      %1254 = vrot.lane.b32.xlu0 %v1105, 8
      %v1255 = vpop.permute.xlu0 %1254
      %1256 = vrot.lane.b32.xlu0 %v1109, 8
      %v1257 = vpop.permute.xlu0 %1256
      %1258 = vrot.lane.b32.xlu0 %v1113, 8
      %v1259 = vpop.permute.xlu0 %1258
      %1260 = vrot.lane.b32.xlu0 %v1117, 8
      %v1261 = vpop.permute.xlu0 %1260
      %1262 = vrot.lane.b32.xlu0 %v1121, 8
      %v1263 = vpop.permute.xlu0 %1262
      %1264 = vrot.lane.b32.xlu0 %v1125, 8
      %v1265 = vpop.permute.xlu0 %1264
      %1266 = vrot.lane.b32.xlu0 %v1129, 8
      %v1267 = vpop.permute.xlu0 %1266
      %1268 = vrot.lane.b32.xlu0 %v1133, 8
      %v1269 = vpop.permute.xlu0 %1268
      %1270 = vrot.lane.b32.xlu0 %v1137, 8
      %v1271 = vpop.permute.xlu0 %1270
      %1272 = vrot.lane.b32.xlu0 %v1141, 8
      %v1273 = vpop.permute.xlu0 %1272
      %1274 = vrot.lane.b32.xlu0 %v1145, 8
      %v1275 = vpop.permute.xlu0 %1274
      %1276 = vrot.lane.b32.xlu0 %v1149, 8
      %v1277 = vpop.permute.xlu0 %1276
      %1278 = vrot.lane.b32.xlu0 %v1153, 8
      %v1279 = vpop.permute.xlu0 %1278
      %1280 = vrot.lane.b32.xlu0 %v1157, 8
      %v1281 = vpop.permute.xlu0 %1280
      %1282 = vrot.lane.b32.xlu0 %v1161, 8
      %v1283 = vpop.permute.xlu0 %1282
      %1284 = vrot.lane.b32.xlu0 %v1165, 8
      %v1285 = vpop.permute.xlu0 %1284
      %1286 = vrot.lane.b32.xlu0 %v1169, 8
      %v1287 = vpop.permute.xlu0 %1286
      %1288 = vrot.lane.b32.xlu0 %v1173, 8
      %v1289 = vpop.permute.xlu0 %1288
      %1290 = vrot.lane.b32.xlu0 %v1177, 8
      %v1291 = vpop.permute.xlu0 %1290
      %1292 = vrot.lane.b32.xlu0 %v1181, 8
      %v1293 = vpop.permute.xlu0 %1292
      %1294 = vrot.lane.b32.xlu0 %v1185, 8
      %v1295 = vpop.permute.xlu0 %1294
      %1296 = vrot.lane.b32.xlu0 %v1189, 8
      %v1297 = vpop.permute.xlu0 %1296
      %1298 = vrot.lane.b32.xlu0 %v1193, 8
      %v1299 = vpop.permute.xlu0 %1298
      %1300 = vrot.lane.b32.xlu0 %v1197, 8
      %v1301 = vpop.permute.xlu0 %1300
      %1302 = vrot.lane.b32.xlu0 %v1201, 8
      %v1303 = vpop.permute.xlu0 %1302
      %1304 = vrot.lane.b32.xlu0 %v1205, 8
      %v1305 = vpop.permute.xlu0 %1304
      %1306 = vrot.lane.b32.xlu0 %v1209, 8
      %v1307 = vpop.permute.xlu0 %1306
      %1308 = vrot.lane.b32.xlu0 %v1213, 8
      %v1309 = vpop.permute.xlu0 %1308
      %1342 = vrot.lane.b32.xlu0 %v1089, 16
      %v1343 = vpop.permute.xlu0 %1342
      %1344 = vrot.lane.b32.xlu0 %v1093, 16
      %v1345 = vpop.permute.xlu0 %1344
      %1346 = vrot.lane.b32.xlu0 %v1097, 16
      %v1347 = vpop.permute.xlu0 %1346
      %1348 = vrot.lane.b32.xlu0 %v1101, 16
      %v1349 = vpop.permute.xlu0 %1348
      %1350 = vrot.lane.b32.xlu0 %v1105, 16
      %v1351 = vpop.permute.xlu0 %1350
      %1352 = vrot.lane.b32.xlu0 %v1109, 16
      %v1353 = vpop.permute.xlu0 %1352
      %1354 = vrot.lane.b32.xlu0 %v1113, 16
      %v1355 = vpop.permute.xlu0 %1354
      %1356 = vrot.lane.b32.xlu0 %v1117, 16
      %v1357 = vpop.permute.xlu0 %1356
      %1358 = vrot.lane.b32.xlu0 %v1121, 16
      %v1359 = vpop.permute.xlu0 %1358
      %1360 = vrot.lane.b32.xlu0 %v1125, 16
      %v1361 = vpop.permute.xlu0 %1360
      %1362 = vrot.lane.b32.xlu0 %v1129, 16
      %v1363 = vpop.permute.xlu0 %1362
      %1364 = vrot.lane.b32.xlu0 %v1133, 16
      %v1365 = vpop.permute.xlu0 %1364
      %1366 = vrot.lane.b32.xlu0 %v1137, 16
      %v1367 = vpop.permute.xlu0 %1366
      %1368 = vrot.lane.b32.xlu0 %v1141, 16
      %v1369 = vpop.permute.xlu0 %1368
      %1370 = vrot.lane.b32.xlu0 %v1145, 16
      %v1371 = vpop.permute.xlu0 %1370
      %1372 = vrot.lane.b32.xlu0 %v1149, 16
      %v1373 = vpop.permute.xlu0 %1372
      %1374 = vrot.lane.b32.xlu0 %v1153, 16
      %v1375 = vpop.permute.xlu0 %1374
      %1376 = vrot.lane.b32.xlu0 %v1157, 16
      %v1377 = vpop.permute.xlu0 %1376
      %1378 = vrot.lane.b32.xlu0 %v1161, 16
      %v1379 = vpop.permute.xlu0 %1378
      %1380 = vrot.lane.b32.xlu0 %v1165, 16
      %v1381 = vpop.permute.xlu0 %1380
      %1382 = vrot.lane.b32.xlu0 %v1169, 16
      %v1383 = vpop.permute.xlu0 %1382
      %1384 = vrot.lane.b32.xlu0 %v1173, 16
      %v1385 = vpop.permute.xlu0 %1384
      %1386 = vrot.lane.b32.xlu0 %v1177, 16
      %v1387 = vpop.permute.xlu0 %1386
      %1388 = vrot.lane.b32.xlu0 %v1181, 16
      %v1389 = vpop.permute.xlu0 %1388
      %1390 = vrot.lane.b32.xlu0 %v1185, 16
      %v1391 = vpop.permute.xlu0 %1390
      %1392 = vrot.lane.b32.xlu0 %v1189, 16
      %v1393 = vpop.permute.xlu0 %1392
      %1394 = vrot.lane.b32.xlu0 %v1193, 16
      %v1395 = vpop.permute.xlu0 %1394
      %1396 = vrot.lane.b32.xlu0 %v1197, 16
      %v1397 = vpop.permute.xlu0 %1396
      %1398 = vrot.lane.b32.xlu0 %v1201, 16
      %v1399 = vpop.permute.xlu0 %1398
      %1400 = vrot.lane.b32.xlu0 %v1205, 16
      %v1401 = vpop.permute.xlu0 %1400
      %1402 = vrot.lane.b32.xlu0 %v1209, 16
      %v1403 = vpop.permute.xlu0 %1402
      %1404 = vrot.lane.b32.xlu0 %v1213, 16
      %v1405 = vpop.permute.xlu0 %1404
      %1438 = vrot.lane.b32.xlu0 %v1089, 24
      %v1439 = vpop.permute.xlu0 %1438
      %1440 = vrot.lane.b32.xlu0 %v1093, 24
      %v1441 = vpop.permute.xlu0 %1440
      %1442 = vrot.lane.b32.xlu0 %v1097, 24
      %v1443 = vpop.permute.xlu0 %1442
      %1444 = vrot.lane.b32.xlu0 %v1101, 24
      %v1445 = vpop.permute.xlu0 %1444
      %1446 = vrot.lane.b32.xlu0 %v1105, 24
      %v1447 = vpop.permute.xlu0 %1446
      %1448 = vrot.lane.b32.xlu0 %v1109, 24
      %v1449 = vpop.permute.xlu0 %1448
      %1450 = vrot.lane.b32.xlu0 %v1113, 24
      %v1451 = vpop.permute.xlu0 %1450
      %1452 = vrot.lane.b32.xlu0 %v1117, 24
      %v1453 = vpop.permute.xlu0 %1452
      %1454 = vrot.lane.b32.xlu0 %v1121, 24
      %v1455 = vpop.permute.xlu0 %1454
      %1456 = vrot.lane.b32.xlu0 %v1125, 24
      %v1457 = vpop.permute.xlu0 %1456
      %1458 = vrot.lane.b32.xlu0 %v1129, 24
      %v1459 = vpop.permute.xlu0 %1458
      %1460 = vrot.lane.b32.xlu0 %v1133, 24
      %v1461 = vpop.permute.xlu0 %1460
      %1462 = vrot.lane.b32.xlu0 %v1137, 24
      %v1463 = vpop.permute.xlu0 %1462
      %1464 = vrot.lane.b32.xlu0 %v1141, 24
      %v1465 = vpop.permute.xlu0 %1464
      %1466 = vrot.lane.b32.xlu0 %v1145, 24
      %v1467 = vpop.permute.xlu0 %1466
      %1468 = vrot.lane.b32.xlu0 %v1149, 24
      %v1469 = vpop.permute.xlu0 %1468
      %1470 = vrot.lane.b32.xlu0 %v1153, 24
      %v1471 = vpop.permute.xlu0 %1470
      %1472 = vrot.lane.b32.xlu0 %v1157, 24
      %v1473 = vpop.permute.xlu0 %1472
      %1474 = vrot.lane.b32.xlu0 %v1161, 24
      %v1475 = vpop.permute.xlu0 %1474
      %1476 = vrot.lane.b32.xlu0 %v1165, 24
      %v1477 = vpop.permute.xlu0 %1476
      %1478 = vrot.lane.b32.xlu0 %v1169, 24
      %v1479 = vpop.permute.xlu0 %1478
      %1480 = vrot.lane.b32.xlu0 %v1173, 24
      %v1481 = vpop.permute.xlu0 %1480
      %1482 = vrot.lane.b32.xlu0 %v1177, 24
      %v1483 = vpop.permute.xlu0 %1482
      %1484 = vrot.lane.b32.xlu0 %v1181, 24
      %v1485 = vpop.permute.xlu0 %1484
      %1486 = vrot.lane.b32.xlu0 %v1185, 24
      %v1487 = vpop.permute.xlu0 %1486
      %1488 = vrot.lane.b32.xlu0 %v1189, 24
      %v1489 = vpop.permute.xlu0 %1488
      %1490 = vrot.lane.b32.xlu0 %v1193, 24
      %v1491 = vpop.permute.xlu0 %1490
      %1492 = vrot.lane.b32.xlu0 %v1197, 24
      %v1493 = vpop.permute.xlu0 %1492
      %1494 = vrot.lane.b32.xlu0 %v1201, 24
      %v1495 = vpop.permute.xlu0 %1494
      %1496 = vrot.lane.b32.xlu0 %v1205, 24
      %v1497 = vpop.permute.xlu0 %1496
      %1498 = vrot.lane.b32.xlu0 %v1209, 24
      %v1499 = vpop.permute.xlu0 %1498
      %1500 = vrot.lane.b32.xlu0 %v1213, 24
      %v1501 = vpop.permute.xlu0 %1500
      %vm1534 = vcmask 64512
      %v1535 = vsel %vm1534, %v1089, %v1247
      %v1536 = vsel %vm1534, %v1093, %v1249
      %v1537 = vsel %vm1534, %v1097, %v1251
      %v1538 = vsel %vm1534, %v1101, %v1253
      %v1539 = vsel %vm1534, %v1105, %v1255
      %v1540 = vsel %vm1534, %v1109, %v1257
      %v1541 = vsel %vm1534, %v1113, %v1259
      %v1542 = vsel %vm1534, %v1117, %v1261
      %v1543 = vsel %vm1534, %v1121, %v1263
      %v1544 = vsel %vm1534, %v1125, %v1265
      %v1545 = vsel %vm1534, %v1129, %v1267
      %v1546 = vsel %vm1534, %v1133, %v1269
      %v1547 = vsel %vm1534, %v1137, %v1271
      %v1548 = vsel %vm1534, %v1141, %v1273
      %v1549 = vsel %vm1534, %v1145, %v1275
      %v1550 = vsel %vm1534, %v1149, %v1277
      %v1551 = vsel %vm1534, %v1153, %v1279
      %v1552 = vsel %vm1534, %v1157, %v1281
      %v1553 = vsel %vm1534, %v1161, %v1283
      %v1554 = vsel %vm1534, %v1165, %v1285
      %v1555 = vsel %vm1534, %v1169, %v1287
      %v1556 = vsel %vm1534, %v1173, %v1289
      %v1557 = vsel %vm1534, %v1177, %v1291
      %v1558 = vsel %vm1534, %v1181, %v1293
      %v1559 = vsel %vm1534, %v1185, %v1295
      %v1560 = vsel %vm1534, %v1189, %v1297
      %v1561 = vsel %vm1534, %v1193, %v1299
      %v1562 = vsel %vm1534, %v1197, %v1301
      %v1563 = vsel %vm1534, %v1201, %v1303
      %v1564 = vsel %vm1534, %v1205, %v1305
      %v1565 = vsel %vm1534, %v1209, %v1307
      %v1566 = vsel %vm1534, %v1213, %v1309
      %vm1567 = vcmask 130048
      %v1568 = vsel %vm1567, %v1535, %v1343
      %v1569 = vsel %vm1567, %v1536, %v1345
      %v1570 = vsel %vm1567, %v1537, %v1347
      %v1571 = vsel %vm1567, %v1538, %v1349
      %v1572 = vsel %vm1567, %v1539, %v1351
      %v1573 = vsel %vm1567, %v1540, %v1353
      %v1574 = vsel %vm1567, %v1541, %v1355
      %v1575 = vsel %vm1567, %v1542, %v1357
      %v1576 = vsel %vm1567, %v1543, %v1359
      %v1577 = vsel %vm1567, %v1544, %v1361
      %v1578 = vsel %vm1567, %v1545, %v1363
      %v1579 = vsel %vm1567, %v1546, %v1365
      %v1580 = vsel %vm1567, %v1547, %v1367
      %v1581 = vsel %vm1567, %v1548, %v1369
      %v1582 = vsel %vm1567, %v1549, %v1371
      %v1583 = vsel %vm1567, %v1550, %v1373
      %v1584 = vsel %vm1567, %v1551, %v1375
      %v1585 = vsel %vm1567, %v1552, %v1377
      %v1586 = vsel %vm1567, %v1553, %v1379
      %v1587 = vsel %vm1567, %v1554, %v1381
      %v1588 = vsel %vm1567, %v1555, %v1383
      %v1589 = vsel %vm1567, %v1556, %v1385
      %v1590 = vsel %vm1567, %v1557, %v1387
      %v1591 = vsel %vm1567, %v1558, %v1389
      %v1592 = vsel %vm1567, %v1559, %v1391
      %v1593 = vsel %vm1567, %v1560, %v1393
      %v1594 = vsel %vm1567, %v1561, %v1395
      %v1595 = vsel %vm1567, %v1562, %v1397
      %v1596 = vsel %vm1567, %v1563, %v1399
      %v1597 = vsel %vm1567, %v1564, %v1401
      %v1598 = vsel %vm1567, %v1565, %v1403
      %v1599 = vsel %vm1567, %v1566, %v1405
      %vm1600 = vcmask 195584
      %v1601 = vsel %vm1600, %v1568, %v1439
      %v1602 = vsel %vm1600, %v1569, %v1441
      %v1603 = vsel %vm1600, %v1570, %v1443
      %v1604 = vsel %vm1600, %v1571, %v1445
      %v1605 = vsel %vm1600, %v1572, %v1447
      %v1606 = vsel %vm1600, %v1573, %v1449
      %v1607 = vsel %vm1600, %v1574, %v1451
      %v1608 = vsel %vm1600, %v1575, %v1453
      %v1609 = vsel %vm1600, %v1576, %v1455
      %v1610 = vsel %vm1600, %v1577, %v1457
      %v1611 = vsel %vm1600, %v1578, %v1459
      %v1612 = vsel %vm1600, %v1579, %v1461
      %v1613 = vsel %vm1600, %v1580, %v1463
      %v1614 = vsel %vm1600, %v1581, %v1465
      %v1615 = vsel %vm1600, %v1582, %v1467
      %v1616 = vsel %vm1600, %v1583, %v1469
      %v1617 = vsel %vm1600, %v1584, %v1471
      %v1618 = vsel %vm1600, %v1585, %v1473
      %v1619 = vsel %vm1600, %v1586, %v1475
      %v1620 = vsel %vm1600, %v1587, %v1477
      %v1621 = vsel %vm1600, %v1588, %v1479
      %v1622 = vsel %vm1600, %v1589, %v1481
      %v1623 = vsel %vm1600, %v1590, %v1483
      %v1624 = vsel %vm1600, %v1591, %v1485
      %v1625 = vsel %vm1600, %v1592, %v1487
      %v1626 = vsel %vm1600, %v1593, %v1489
      %v1627 = vsel %vm1600, %v1594, %v1491
      %v1628 = vsel %vm1600, %v1595, %v1493
      %v1629 = vsel %vm1600, %v1596, %v1495
      %v1630 = vsel %vm1600, %v1597, %v1497
      %v1631 = vsel %vm1600, %v1598, %v1499
      %v1632 = vsel %vm1600, %v1599, %v1501
      %v1633 = vmul.f32 %v1088, %v1601
      %v1634 = vmul.f32 %v1092, %v1602
      %v1635 = vmul.f32 %v1096, %v1603
      %v1636 = vmul.f32 %v1100, %v1604
      %v1637 = vmul.f32 %v1104, %v1605
      %v1638 = vmul.f32 %v1108, %v1606
      %v1639 = vmul.f32 %v1112, %v1607
      %v1640 = vmul.f32 %v1116, %v1608
      %v1641 = vmul.f32 %v1120, %v1609
      %v1642 = vmul.f32 %v1124, %v1610
      %v1643 = vmul.f32 %v1128, %v1611
      %v1644 = vmul.f32 %v1132, %v1612
      %v1645 = vmul.f32 %v1136, %v1613
      %v1646 = vmul.f32 %v1140, %v1614
      %v1647 = vmul.f32 %v1144, %v1615
      %v1648 = vmul.f32 %v1148, %v1616
      %v1649 = vmul.f32 %v1152, %v1617
      %v1650 = vmul.f32 %v1156, %v1618
      %v1651 = vmul.f32 %v1160, %v1619
      %v1652 = vmul.f32 %v1164, %v1620
      %v1653 = vmul.f32 %v1168, %v1621
      %v1654 = vmul.f32 %v1172, %v1622
      %v1655 = vmul.f32 %v1176, %v1623
      %v1656 = vmul.f32 %v1180, %v1624
      %v1657 = vmul.f32 %v1184, %v1625
      %v1658 = vmul.f32 %v1188, %v1626
      %v1659 = vmul.f32 %v1192, %v1627
      %v1660 = vmul.f32 %v1196, %v1628
      %v1661 = vmul.f32 %v1200, %v1629
      %v1662 = vmul.f32 %v1204, %v1630
      %v1663 = vmul.f32 %v1208, %v1631
      %v1664 = vmul.f32 %v1212, %v1632
      %1665 = vrot.lane.b32.xlu0 %v1089, 120
      %v1666 = vpop.permute.xlu0 %1665
      %1667 = vrot.lane.b32.xlu0 %v1093, 120
      %v1668 = vpop.permute.xlu0 %1667
      %1669 = vrot.lane.b32.xlu0 %v1097, 120
      %v1670 = vpop.permute.xlu0 %1669
      %1671 = vrot.lane.b32.xlu0 %v1101, 120
      %v1672 = vpop.permute.xlu0 %1671
      %1673 = vrot.lane.b32.xlu0 %v1105, 120
      %v1674 = vpop.permute.xlu0 %1673
      %1675 = vrot.lane.b32.xlu0 %v1109, 120
      %v1676 = vpop.permute.xlu0 %1675
      %1677 = vrot.lane.b32.xlu0 %v1113, 120
      %v1678 = vpop.permute.xlu0 %1677
      %1679 = vrot.lane.b32.xlu0 %v1117, 120
      %v1680 = vpop.permute.xlu0 %1679
      %1681 = vrot.lane.b32.xlu0 %v1121, 120
      %v1682 = vpop.permute.xlu0 %1681
      %1683 = vrot.lane.b32.xlu0 %v1125, 120
      %v1684 = vpop.permute.xlu0 %1683
      %1685 = vrot.lane.b32.xlu0 %v1129, 120
      %v1686 = vpop.permute.xlu0 %1685
      %1687 = vrot.lane.b32.xlu0 %v1133, 120
      %v1688 = vpop.permute.xlu0 %1687
      %1689 = vrot.lane.b32.xlu0 %v1137, 120
      %v1690 = vpop.permute.xlu0 %1689
      %1691 = vrot.lane.b32.xlu0 %v1141, 120
      %v1692 = vpop.permute.xlu0 %1691
      %1693 = vrot.lane.b32.xlu0 %v1145, 120
      %v1694 = vpop.permute.xlu0 %1693
      %1695 = vrot.lane.b32.xlu0 %v1149, 120
      %v1696 = vpop.permute.xlu0 %1695
      %1697 = vrot.lane.b32.xlu0 %v1153, 120
      %v1698 = vpop.permute.xlu0 %1697
      %1699 = vrot.lane.b32.xlu0 %v1157, 120
      %v1700 = vpop.permute.xlu0 %1699
      %1701 = vrot.lane.b32.xlu0 %v1161, 120
      %v1702 = vpop.permute.xlu0 %1701
      %1703 = vrot.lane.b32.xlu0 %v1165, 120
      %v1704 = vpop.permute.xlu0 %1703
      %1705 = vrot.lane.b32.xlu0 %v1169, 120
      %v1706 = vpop.permute.xlu0 %1705
      %1707 = vrot.lane.b32.xlu0 %v1173, 120
      %v1708 = vpop.permute.xlu0 %1707
      %1709 = vrot.lane.b32.xlu0 %v1177, 120
      %v1710 = vpop.permute.xlu0 %1709
      %1711 = vrot.lane.b32.xlu0 %v1181, 120
      %v1712 = vpop.permute.xlu0 %1711
      %1713 = vrot.lane.b32.xlu0 %v1185, 120
      %v1714 = vpop.permute.xlu0 %1713
      %1715 = vrot.lane.b32.xlu0 %v1189, 120
      %v1716 = vpop.permute.xlu0 %1715
      %1717 = vrot.lane.b32.xlu0 %v1193, 120
      %v1718 = vpop.permute.xlu0 %1717
      %1719 = vrot.lane.b32.xlu0 %v1197, 120
      %v1720 = vpop.permute.xlu0 %1719
      %1721 = vrot.lane.b32.xlu0 %v1201, 120
      %v1722 = vpop.permute.xlu0 %1721
      %1723 = vrot.lane.b32.xlu0 %v1205, 120
      %v1724 = vpop.permute.xlu0 %1723
      %1725 = vrot.lane.b32.xlu0 %v1209, 120
      %v1726 = vpop.permute.xlu0 %1725
      %1727 = vrot.lane.b32.xlu0 %v1213, 120
      %v1728 = vpop.permute.xlu0 %1727
      %v1761 = vsel %vm1534, %v1666, %v1089
      %v1762 = vsel %vm1534, %v1668, %v1093
      %v1763 = vsel %vm1534, %v1670, %v1097
      %v1764 = vsel %vm1534, %v1672, %v1101
      %v1765 = vsel %vm1534, %v1674, %v1105
      %v1766 = vsel %vm1534, %v1676, %v1109
      %v1767 = vsel %vm1534, %v1678, %v1113
      %v1768 = vsel %vm1534, %v1680, %v1117
      %v1769 = vsel %vm1534, %v1682, %v1121
      %v1770 = vsel %vm1534, %v1684, %v1125
      %v1771 = vsel %vm1534, %v1686, %v1129
      %v1772 = vsel %vm1534, %v1688, %v1133
      %v1773 = vsel %vm1534, %v1690, %v1137
      %v1774 = vsel %vm1534, %v1692, %v1141
      %v1775 = vsel %vm1534, %v1694, %v1145
      %v1776 = vsel %vm1534, %v1696, %v1149
      %v1777 = vsel %vm1534, %v1698, %v1153
      %v1778 = vsel %vm1534, %v1700, %v1157
      %v1779 = vsel %vm1534, %v1702, %v1161
      %v1780 = vsel %vm1534, %v1704, %v1165
      %v1781 = vsel %vm1534, %v1706, %v1169
      %v1782 = vsel %vm1534, %v1708, %v1173
      %v1783 = vsel %vm1534, %v1710, %v1177
      %v1784 = vsel %vm1534, %v1712, %v1181
      %v1785 = vsel %vm1534, %v1714, %v1185
      %v1786 = vsel %vm1534, %v1716, %v1189
      %v1787 = vsel %vm1534, %v1718, %v1193
      %v1788 = vsel %vm1534, %v1720, %v1197
      %v1789 = vsel %vm1534, %v1722, %v1201
      %v1790 = vsel %vm1534, %v1724, %v1205
      %v1791 = vsel %vm1534, %v1726, %v1209
      %v1792 = vsel %vm1534, %v1728, %v1213
      %v1793 = vsel %vm1567, %v1761, %v1247
      %v1794 = vsel %vm1567, %v1762, %v1249
      %v1795 = vsel %vm1567, %v1763, %v1251
      %v1796 = vsel %vm1567, %v1764, %v1253
      %v1797 = vsel %vm1567, %v1765, %v1255
      %v1798 = vsel %vm1567, %v1766, %v1257
      %v1799 = vsel %vm1567, %v1767, %v1259
      %v1800 = vsel %vm1567, %v1768, %v1261
      %v1801 = vsel %vm1567, %v1769, %v1263
      %v1802 = vsel %vm1567, %v1770, %v1265
      %v1803 = vsel %vm1567, %v1771, %v1267
      %v1804 = vsel %vm1567, %v1772, %v1269
      %v1805 = vsel %vm1567, %v1773, %v1271
      %v1806 = vsel %vm1567, %v1774, %v1273
      %v1807 = vsel %vm1567, %v1775, %v1275
      %v1808 = vsel %vm1567, %v1776, %v1277
      %v1809 = vsel %vm1567, %v1777, %v1279
      %v1810 = vsel %vm1567, %v1778, %v1281
      %v1811 = vsel %vm1567, %v1779, %v1283
      %v1812 = vsel %vm1567, %v1780, %v1285
      %v1813 = vsel %vm1567, %v1781, %v1287
      %v1814 = vsel %vm1567, %v1782, %v1289
      %v1815 = vsel %vm1567, %v1783, %v1291
      %v1816 = vsel %vm1567, %v1784, %v1293
      %v1817 = vsel %vm1567, %v1785, %v1295
      %v1818 = vsel %vm1567, %v1786, %v1297
      %v1819 = vsel %vm1567, %v1787, %v1299
      %v1820 = vsel %vm1567, %v1788, %v1301
      %v1821 = vsel %vm1567, %v1789, %v1303
      %v1822 = vsel %vm1567, %v1790, %v1305
      %v1823 = vsel %vm1567, %v1791, %v1307
      %v1824 = vsel %vm1567, %v1792, %v1309
      %v1825 = vsel %vm1600, %v1793, %v1343
      %v1826 = vsel %vm1600, %v1794, %v1345
      %v1827 = vsel %vm1600, %v1795, %v1347
      %v1828 = vsel %vm1600, %v1796, %v1349
      %v1829 = vsel %vm1600, %v1797, %v1351
      %v1830 = vsel %vm1600, %v1798, %v1353
      %v1831 = vsel %vm1600, %v1799, %v1355
      %v1832 = vsel %vm1600, %v1800, %v1357
      %v1833 = vsel %vm1600, %v1801, %v1359
      %v1834 = vsel %vm1600, %v1802, %v1361
      %v1835 = vsel %vm1600, %v1803, %v1363
      %v1836 = vsel %vm1600, %v1804, %v1365
      %v1837 = vsel %vm1600, %v1805, %v1367
      %v1838 = vsel %vm1600, %v1806, %v1369
      %v1839 = vsel %vm1600, %v1807, %v1371
      %v1840 = vsel %vm1600, %v1808, %v1373
      %v1841 = vsel %vm1600, %v1809, %v1375
      %v1842 = vsel %vm1600, %v1810, %v1377
      %v1843 = vsel %vm1600, %v1811, %v1379
      %v1844 = vsel %vm1600, %v1812, %v1381
      %v1845 = vsel %vm1600, %v1813, %v1383
      %v1846 = vsel %vm1600, %v1814, %v1385
      %v1847 = vsel %vm1600, %v1815, %v1387
      %v1848 = vsel %vm1600, %v1816, %v1389
      %v1849 = vsel %vm1600, %v1817, %v1391
      %v1850 = vsel %vm1600, %v1818, %v1393
      %v1851 = vsel %vm1600, %v1819, %v1395
      %v1852 = vsel %vm1600, %v1820, %v1397
      %v1853 = vsel %vm1600, %v1821, %v1399
      %v1854 = vsel %vm1600, %v1822, %v1401
      %v1855 = vsel %vm1600, %v1823, %v1403
      %v1856 = vsel %vm1600, %v1824, %v1405
      %1889 = vrot.lane.b32.xlu0 %v1825, 32
      %v1890 = vpop.permute.xlu0 %1889
      %1891 = vrot.lane.b32.xlu0 %v1826, 32
      %v1892 = vpop.permute.xlu0 %1891
      %1893 = vrot.lane.b32.xlu0 %v1827, 32
      %v1894 = vpop.permute.xlu0 %1893
      %1895 = vrot.lane.b32.xlu0 %v1828, 32
      %v1896 = vpop.permute.xlu0 %1895
      %1897 = vrot.lane.b32.xlu0 %v1829, 32
      %v1898 = vpop.permute.xlu0 %1897
      %1899 = vrot.lane.b32.xlu0 %v1830, 32
      %v1900 = vpop.permute.xlu0 %1899
      %1901 = vrot.lane.b32.xlu0 %v1831, 32
      %v1902 = vpop.permute.xlu0 %1901
      %1903 = vrot.lane.b32.xlu0 %v1832, 32
      %v1904 = vpop.permute.xlu0 %1903
      %1905 = vrot.lane.b32.xlu0 %v1833, 32
      %v1906 = vpop.permute.xlu0 %1905
      %1907 = vrot.lane.b32.xlu0 %v1834, 32
      %v1908 = vpop.permute.xlu0 %1907
      %1909 = vrot.lane.b32.xlu0 %v1835, 32
      %v1910 = vpop.permute.xlu0 %1909
      %1911 = vrot.lane.b32.xlu0 %v1836, 32
      %v1912 = vpop.permute.xlu0 %1911
      %1913 = vrot.lane.b32.xlu0 %v1837, 32
      %v1914 = vpop.permute.xlu0 %1913
      %1915 = vrot.lane.b32.xlu0 %v1838, 32
      %v1916 = vpop.permute.xlu0 %1915
      %1917 = vrot.lane.b32.xlu0 %v1839, 32
      %v1918 = vpop.permute.xlu0 %1917
      %1919 = vrot.lane.b32.xlu0 %v1840, 32
      %v1920 = vpop.permute.xlu0 %1919
      %1921 = vrot.lane.b32.xlu0 %v1841, 32
      %v1922 = vpop.permute.xlu0 %1921
      %1923 = vrot.lane.b32.xlu0 %v1842, 32
      %v1924 = vpop.permute.xlu0 %1923
      %1925 = vrot.lane.b32.xlu0 %v1843, 32
      %v1926 = vpop.permute.xlu0 %1925
      %1927 = vrot.lane.b32.xlu0 %v1844, 32
      %v1928 = vpop.permute.xlu0 %1927
      %1929 = vrot.lane.b32.xlu0 %v1845, 32
      %v1930 = vpop.permute.xlu0 %1929
      %1931 = vrot.lane.b32.xlu0 %v1846, 32
      %v1932 = vpop.permute.xlu0 %1931
      %1933 = vrot.lane.b32.xlu0 %v1847, 32
      %v1934 = vpop.permute.xlu0 %1933
      %1935 = vrot.lane.b32.xlu0 %v1848, 32
      %v1936 = vpop.permute.xlu0 %1935
      %1937 = vrot.lane.b32.xlu0 %v1849, 32
      %v1938 = vpop.permute.xlu0 %1937
      %1939 = vrot.lane.b32.xlu0 %v1850, 32
      %v1940 = vpop.permute.xlu0 %1939
      %1941 = vrot.lane.b32.xlu0 %v1851, 32
      %v1942 = vpop.permute.xlu0 %1941
      %1943 = vrot.lane.b32.xlu0 %v1852, 32
      %v1944 = vpop.permute.xlu0 %1943
      %1945 = vrot.lane.b32.xlu0 %v1853, 32
      %v1946 = vpop.permute.xlu0 %1945
      %1947 = vrot.lane.b32.xlu0 %v1854, 32
      %v1948 = vpop.permute.xlu0 %1947
      %1949 = vrot.lane.b32.xlu0 %v1855, 32
      %v1950 = vpop.permute.xlu0 %1949
      %1951 = vrot.lane.b32.xlu0 %v1856, 32
      %v1952 = vpop.permute.xlu0 %1951
      %v1985 = vmul.f32 %v1088, %v1890
      %v1986 = vmul.f32 %v1092, %v1892
      %v1987 = vmul.f32 %v1096, %v1894
      %v1988 = vmul.f32 %v1100, %v1896
      %v1989 = vmul.f32 %v1104, %v1898
      %v1990 = vmul.f32 %v1108, %v1900
      %v1991 = vmul.f32 %v1112, %v1902
      %v1992 = vmul.f32 %v1116, %v1904
      %v1993 = vmul.f32 %v1120, %v1906
      %v1994 = vmul.f32 %v1124, %v1908
      %v1995 = vmul.f32 %v1128, %v1910
      %v1996 = vmul.f32 %v1132, %v1912
      %v1997 = vmul.f32 %v1136, %v1914
      %v1998 = vmul.f32 %v1140, %v1916
      %v1999 = vmul.f32 %v1144, %v1918
      %v2000 = vmul.f32 %v1148, %v1920
      %v2001 = vmul.f32 %v1152, %v1922
      %v2002 = vmul.f32 %v1156, %v1924
      %v2003 = vmul.f32 %v1160, %v1926
      %v2004 = vmul.f32 %v1164, %v1928
      %v2005 = vmul.f32 %v1168, %v1930
      %v2006 = vmul.f32 %v1172, %v1932
      %v2007 = vmul.f32 %v1176, %v1934
      %v2008 = vmul.f32 %v1180, %v1936
      %v2009 = vmul.f32 %v1184, %v1938
      %v2010 = vmul.f32 %v1188, %v1940
      %v2011 = vmul.f32 %v1192, %v1942
      %v2012 = vmul.f32 %v1196, %v1944
      %v2013 = vmul.f32 %v1200, %v1946
      %v2014 = vmul.f32 %v1204, %v1948
      %v2015 = vmul.f32 %v1208, %v1950
      %v2016 = vmul.f32 %v1212, %v1952
      %2049 = vrot.lane.b32.xlu0 %v1985, 96
      %v2050 = vpop.permute.xlu0 %2049
      %2051 = vrot.lane.b32.xlu0 %v1986, 96
      %v2052 = vpop.permute.xlu0 %2051
      %2053 = vrot.lane.b32.xlu0 %v1987, 96
      %v2054 = vpop.permute.xlu0 %2053
      %2055 = vrot.lane.b32.xlu0 %v1988, 96
      %v2056 = vpop.permute.xlu0 %2055
      %2057 = vrot.lane.b32.xlu0 %v1989, 96
      %v2058 = vpop.permute.xlu0 %2057
      %2059 = vrot.lane.b32.xlu0 %v1990, 96
      %v2060 = vpop.permute.xlu0 %2059
      %2061 = vrot.lane.b32.xlu0 %v1991, 96
      %v2062 = vpop.permute.xlu0 %2061
      %2063 = vrot.lane.b32.xlu0 %v1992, 96
      %v2064 = vpop.permute.xlu0 %2063
      %2065 = vrot.lane.b32.xlu0 %v1993, 96
      %v2066 = vpop.permute.xlu0 %2065
      %2067 = vrot.lane.b32.xlu0 %v1994, 96
      %v2068 = vpop.permute.xlu0 %2067
      %2069 = vrot.lane.b32.xlu0 %v1995, 96
      %v2070 = vpop.permute.xlu0 %2069
      %2071 = vrot.lane.b32.xlu0 %v1996, 96
      %v2072 = vpop.permute.xlu0 %2071
      %2073 = vrot.lane.b32.xlu0 %v1997, 96
      %v2074 = vpop.permute.xlu0 %2073
      %2075 = vrot.lane.b32.xlu0 %v1998, 96
      %v2076 = vpop.permute.xlu0 %2075
      %2077 = vrot.lane.b32.xlu0 %v1999, 96
      %v2078 = vpop.permute.xlu0 %2077
      %2079 = vrot.lane.b32.xlu0 %v2000, 96
      %v2080 = vpop.permute.xlu0 %2079
      %2081 = vrot.lane.b32.xlu0 %v2001, 96
      %v2082 = vpop.permute.xlu0 %2081
      %2083 = vrot.lane.b32.xlu0 %v2002, 96
      %v2084 = vpop.permute.xlu0 %2083
      %2085 = vrot.lane.b32.xlu0 %v2003, 96
      %v2086 = vpop.permute.xlu0 %2085
      %2087 = vrot.lane.b32.xlu0 %v2004, 96
      %v2088 = vpop.permute.xlu0 %2087
      %2089 = vrot.lane.b32.xlu0 %v2005, 96
      %v2090 = vpop.permute.xlu0 %2089
      %2091 = vrot.lane.b32.xlu0 %v2006, 96
      %v2092 = vpop.permute.xlu0 %2091
      %2093 = vrot.lane.b32.xlu0 %v2007, 96
      %v2094 = vpop.permute.xlu0 %2093
      %2095 = vrot.lane.b32.xlu0 %v2008, 96
      %v2096 = vpop.permute.xlu0 %2095
      %2097 = vrot.lane.b32.xlu0 %v2009, 96
      %v2098 = vpop.permute.xlu0 %2097
      %2099 = vrot.lane.b32.xlu0 %v2010, 96
      %v2100 = vpop.permute.xlu0 %2099
      %2101 = vrot.lane.b32.xlu0 %v2011, 96
      %v2102 = vpop.permute.xlu0 %2101
      %2103 = vrot.lane.b32.xlu0 %v2012, 96
      %v2104 = vpop.permute.xlu0 %2103
      %2105 = vrot.lane.b32.xlu0 %v2013, 96
      %v2106 = vpop.permute.xlu0 %2105
      %2107 = vrot.lane.b32.xlu0 %v2014, 96
      %v2108 = vpop.permute.xlu0 %2107
      %2109 = vrot.lane.b32.xlu0 %v2015, 96
      %v2110 = vpop.permute.xlu0 %2109
      %2111 = vrot.lane.b32.xlu0 %v2016, 96
      %v2112 = vpop.permute.xlu0 %2111
      %v2145 = vadd.f32 %v1633, %v2050
      %v2146 = vadd.f32 %v1634, %v2052
      %v2147 = vadd.f32 %v1635, %v2054
      %v2148 = vadd.f32 %v1636, %v2056
      %v2149 = vadd.f32 %v1637, %v2058
      %v2150 = vadd.f32 %v1638, %v2060
      %v2151 = vadd.f32 %v1639, %v2062
      %v2152 = vadd.f32 %v1640, %v2064
      %v2153 = vadd.f32 %v1641, %v2066
      %v2154 = vadd.f32 %v1642, %v2068
      %v2155 = vadd.f32 %v1643, %v2070
      %v2156 = vadd.f32 %v1644, %v2072
      %v2157 = vadd.f32 %v1645, %v2074
      %v2158 = vadd.f32 %v1646, %v2076
      %v2159 = vadd.f32 %v1647, %v2078
      %v2160 = vadd.f32 %v1648, %v2080
      %v2161 = vadd.f32 %v1649, %v2082
      %v2162 = vadd.f32 %v1650, %v2084
      %v2163 = vadd.f32 %v1651, %v2086
      %v2164 = vadd.f32 %v1652, %v2088
      %v2165 = vadd.f32 %v1653, %v2090
      %v2166 = vadd.f32 %v1654, %v2092
      %v2167 = vadd.f32 %v1655, %v2094
      %v2168 = vadd.f32 %v1656, %v2096
      %v2169 = vadd.f32 %v1657, %v2098
      %v2170 = vadd.f32 %v1658, %v2100
      %v2171 = vadd.f32 %v1659, %v2102
      %v2172 = vadd.f32 %v1660, %v2104
      %v2173 = vadd.f32 %v1661, %v2106
      %v2174 = vadd.f32 %v1662, %v2108
      %v2175 = vadd.f32 %v1663, %v2110
      %v2176 = vadd.f32 %v1664, %v2112
      %2177 = vrot.lane.b32.xlu0 %v1089, 112
      %v2178 = vpop.permute.xlu0 %2177
      %2179 = vrot.lane.b32.xlu0 %v1093, 112
      %v2180 = vpop.permute.xlu0 %2179
      %2181 = vrot.lane.b32.xlu0 %v1097, 112
      %v2182 = vpop.permute.xlu0 %2181
      %2183 = vrot.lane.b32.xlu0 %v1101, 112
      %v2184 = vpop.permute.xlu0 %2183
      %2185 = vrot.lane.b32.xlu0 %v1105, 112
      %v2186 = vpop.permute.xlu0 %2185
      %2187 = vrot.lane.b32.xlu0 %v1109, 112
      %v2188 = vpop.permute.xlu0 %2187
      %2189 = vrot.lane.b32.xlu0 %v1113, 112
      %v2190 = vpop.permute.xlu0 %2189
      %2191 = vrot.lane.b32.xlu0 %v1117, 112
      %v2192 = vpop.permute.xlu0 %2191
      %2193 = vrot.lane.b32.xlu0 %v1121, 112
      %v2194 = vpop.permute.xlu0 %2193
      %2195 = vrot.lane.b32.xlu0 %v1125, 112
      %v2196 = vpop.permute.xlu0 %2195
      %2197 = vrot.lane.b32.xlu0 %v1129, 112
      %v2198 = vpop.permute.xlu0 %2197
      %2199 = vrot.lane.b32.xlu0 %v1133, 112
      %v2200 = vpop.permute.xlu0 %2199
      %2201 = vrot.lane.b32.xlu0 %v1137, 112
      %v2202 = vpop.permute.xlu0 %2201
      %2203 = vrot.lane.b32.xlu0 %v1141, 112
      %v2204 = vpop.permute.xlu0 %2203
      %2205 = vrot.lane.b32.xlu0 %v1145, 112
      %v2206 = vpop.permute.xlu0 %2205
      %2207 = vrot.lane.b32.xlu0 %v1149, 112
      %v2208 = vpop.permute.xlu0 %2207
      %2209 = vrot.lane.b32.xlu0 %v1153, 112
      %v2210 = vpop.permute.xlu0 %2209
      %2211 = vrot.lane.b32.xlu0 %v1157, 112
      %v2212 = vpop.permute.xlu0 %2211
      %2213 = vrot.lane.b32.xlu0 %v1161, 112
      %v2214 = vpop.permute.xlu0 %2213
      %2215 = vrot.lane.b32.xlu0 %v1165, 112
      %v2216 = vpop.permute.xlu0 %2215
      %2217 = vrot.lane.b32.xlu0 %v1169, 112
      %v2218 = vpop.permute.xlu0 %2217
      %2219 = vrot.lane.b32.xlu0 %v1173, 112
      %v2220 = vpop.permute.xlu0 %2219
      %2221 = vrot.lane.b32.xlu0 %v1177, 112
      %v2222 = vpop.permute.xlu0 %2221
      %2223 = vrot.lane.b32.xlu0 %v1181, 112
      %v2224 = vpop.permute.xlu0 %2223
      %2225 = vrot.lane.b32.xlu0 %v1185, 112
      %v2226 = vpop.permute.xlu0 %2225
      %2227 = vrot.lane.b32.xlu0 %v1189, 112
      %v2228 = vpop.permute.xlu0 %2227
      %2229 = vrot.lane.b32.xlu0 %v1193, 112
      %v2230 = vpop.permute.xlu0 %2229
      %2231 = vrot.lane.b32.xlu0 %v1197, 112
      %v2232 = vpop.permute.xlu0 %2231
      %2233 = vrot.lane.b32.xlu0 %v1201, 112
      %v2234 = vpop.permute.xlu0 %2233
      %2235 = vrot.lane.b32.xlu0 %v1205, 112
      %v2236 = vpop.permute.xlu0 %2235
      %2237 = vrot.lane.b32.xlu0 %v1209, 112
      %v2238 = vpop.permute.xlu0 %2237
      %2239 = vrot.lane.b32.xlu0 %v1213, 112
      %v2240 = vpop.permute.xlu0 %2239
      %v2273 = vsel %vm1534, %v2178, %v1666
      %v2274 = vsel %vm1534, %v2180, %v1668
      %v2275 = vsel %vm1534, %v2182, %v1670
      %v2276 = vsel %vm1534, %v2184, %v1672
      %v2277 = vsel %vm1534, %v2186, %v1674
      %v2278 = vsel %vm1534, %v2188, %v1676
      %v2279 = vsel %vm1534, %v2190, %v1678
      %v2280 = vsel %vm1534, %v2192, %v1680
      %v2281 = vsel %vm1534, %v2194, %v1682
      %v2282 = vsel %vm1534, %v2196, %v1684
      %v2283 = vsel %vm1534, %v2198, %v1686
      %v2284 = vsel %vm1534, %v2200, %v1688
      %v2285 = vsel %vm1534, %v2202, %v1690
      %v2286 = vsel %vm1534, %v2204, %v1692
      %v2287 = vsel %vm1534, %v2206, %v1694
      %v2288 = vsel %vm1534, %v2208, %v1696
      %v2289 = vsel %vm1534, %v2210, %v1698
      %v2290 = vsel %vm1534, %v2212, %v1700
      %v2291 = vsel %vm1534, %v2214, %v1702
      %v2292 = vsel %vm1534, %v2216, %v1704
      %v2293 = vsel %vm1534, %v2218, %v1706
      %v2294 = vsel %vm1534, %v2220, %v1708
      %v2295 = vsel %vm1534, %v2222, %v1710
      %v2296 = vsel %vm1534, %v2224, %v1712
      %v2297 = vsel %vm1534, %v2226, %v1714
      %v2298 = vsel %vm1534, %v2228, %v1716
      %v2299 = vsel %vm1534, %v2230, %v1718
      %v2300 = vsel %vm1534, %v2232, %v1720
      %v2301 = vsel %vm1534, %v2234, %v1722
      %v2302 = vsel %vm1534, %v2236, %v1724
      %v2303 = vsel %vm1534, %v2238, %v1726
      %v2304 = vsel %vm1534, %v2240, %v1728
      %v2305 = vsel %vm1567, %v2273, %v1089
      %v2306 = vsel %vm1567, %v2274, %v1093
      %v2307 = vsel %vm1567, %v2275, %v1097
      %v2308 = vsel %vm1567, %v2276, %v1101
      %v2309 = vsel %vm1567, %v2277, %v1105
      %v2310 = vsel %vm1567, %v2278, %v1109
      %v2311 = vsel %vm1567, %v2279, %v1113
      %v2312 = vsel %vm1567, %v2280, %v1117
      %v2313 = vsel %vm1567, %v2281, %v1121
      %v2314 = vsel %vm1567, %v2282, %v1125
      %v2315 = vsel %vm1567, %v2283, %v1129
      %v2316 = vsel %vm1567, %v2284, %v1133
      %v2317 = vsel %vm1567, %v2285, %v1137
      %v2318 = vsel %vm1567, %v2286, %v1141
      %v2319 = vsel %vm1567, %v2287, %v1145
      %v2320 = vsel %vm1567, %v2288, %v1149
      %v2321 = vsel %vm1567, %v2289, %v1153
      %v2322 = vsel %vm1567, %v2290, %v1157
      %v2323 = vsel %vm1567, %v2291, %v1161
      %v2324 = vsel %vm1567, %v2292, %v1165
      %v2325 = vsel %vm1567, %v2293, %v1169
      %v2326 = vsel %vm1567, %v2294, %v1173
      %v2327 = vsel %vm1567, %v2295, %v1177
      %v2328 = vsel %vm1567, %v2296, %v1181
      %v2329 = vsel %vm1567, %v2297, %v1185
      %v2330 = vsel %vm1567, %v2298, %v1189
      %v2331 = vsel %vm1567, %v2299, %v1193
      %v2332 = vsel %vm1567, %v2300, %v1197
      %v2333 = vsel %vm1567, %v2301, %v1201
      %v2334 = vsel %vm1567, %v2302, %v1205
      %v2335 = vsel %vm1567, %v2303, %v1209
      %v2336 = vsel %vm1567, %v2304, %v1213
      %v2337 = vsel %vm1600, %v2305, %v1247
      %v2338 = vsel %vm1600, %v2306, %v1249
      %v2339 = vsel %vm1600, %v2307, %v1251
      %v2340 = vsel %vm1600, %v2308, %v1253
      %v2341 = vsel %vm1600, %v2309, %v1255
      %v2342 = vsel %vm1600, %v2310, %v1257
      %v2343 = vsel %vm1600, %v2311, %v1259
      %v2344 = vsel %vm1600, %v2312, %v1261
      %v2345 = vsel %vm1600, %v2313, %v1263
      %v2346 = vsel %vm1600, %v2314, %v1265
      %v2347 = vsel %vm1600, %v2315, %v1267
      %v2348 = vsel %vm1600, %v2316, %v1269
      %v2349 = vsel %vm1600, %v2317, %v1271
      %v2350 = vsel %vm1600, %v2318, %v1273
      %v2351 = vsel %vm1600, %v2319, %v1275
      %v2352 = vsel %vm1600, %v2320, %v1277
      %v2353 = vsel %vm1600, %v2321, %v1279
      %v2354 = vsel %vm1600, %v2322, %v1281
      %v2355 = vsel %vm1600, %v2323, %v1283
      %v2356 = vsel %vm1600, %v2324, %v1285
      %v2357 = vsel %vm1600, %v2325, %v1287
      %v2358 = vsel %vm1600, %v2326, %v1289
      %v2359 = vsel %vm1600, %v2327, %v1291
      %v2360 = vsel %vm1600, %v2328, %v1293
      %v2361 = vsel %vm1600, %v2329, %v1295
      %v2362 = vsel %vm1600, %v2330, %v1297
      %v2363 = vsel %vm1600, %v2331, %v1299
      %v2364 = vsel %vm1600, %v2332, %v1301
      %v2365 = vsel %vm1600, %v2333, %v1303
      %v2366 = vsel %vm1600, %v2334, %v1305
      %v2367 = vsel %vm1600, %v2335, %v1307
      %v2368 = vsel %vm1600, %v2336, %v1309
      %2401 = vrot.lane.b32.xlu0 %v2337, 64
      %v2402 = vpop.permute.xlu0 %2401
      %2403 = vrot.lane.b32.xlu0 %v2338, 64
      %v2404 = vpop.permute.xlu0 %2403
      %2405 = vrot.lane.b32.xlu0 %v2339, 64
      %v2406 = vpop.permute.xlu0 %2405
      %2407 = vrot.lane.b32.xlu0 %v2340, 64
      %v2408 = vpop.permute.xlu0 %2407
      %2409 = vrot.lane.b32.xlu0 %v2341, 64
      %v2410 = vpop.permute.xlu0 %2409
      %2411 = vrot.lane.b32.xlu0 %v2342, 64
      %v2412 = vpop.permute.xlu0 %2411
      %2413 = vrot.lane.b32.xlu0 %v2343, 64
      %v2414 = vpop.permute.xlu0 %2413
      %2415 = vrot.lane.b32.xlu0 %v2344, 64
      %v2416 = vpop.permute.xlu0 %2415
      %2417 = vrot.lane.b32.xlu0 %v2345, 64
      %v2418 = vpop.permute.xlu0 %2417
      %2419 = vrot.lane.b32.xlu0 %v2346, 64
      %v2420 = vpop.permute.xlu0 %2419
      %2421 = vrot.lane.b32.xlu0 %v2347, 64
      %v2422 = vpop.permute.xlu0 %2421
      %2423 = vrot.lane.b32.xlu0 %v2348, 64
      %v2424 = vpop.permute.xlu0 %2423
      %2425 = vrot.lane.b32.xlu0 %v2349, 64
      %v2426 = vpop.permute.xlu0 %2425
      %2427 = vrot.lane.b32.xlu0 %v2350, 64
      %v2428 = vpop.permute.xlu0 %2427
      %2429 = vrot.lane.b32.xlu0 %v2351, 64
      %v2430 = vpop.permute.xlu0 %2429
      %2431 = vrot.lane.b32.xlu0 %v2352, 64
      %v2432 = vpop.permute.xlu0 %2431
      %2433 = vrot.lane.b32.xlu0 %v2353, 64
      %v2434 = vpop.permute.xlu0 %2433
      %2435 = vrot.lane.b32.xlu0 %v2354, 64
      %v2436 = vpop.permute.xlu0 %2435
      %2437 = vrot.lane.b32.xlu0 %v2355, 64
      %v2438 = vpop.permute.xlu0 %2437
      %2439 = vrot.lane.b32.xlu0 %v2356, 64
      %v2440 = vpop.permute.xlu0 %2439
      %2441 = vrot.lane.b32.xlu0 %v2357, 64
      %v2442 = vpop.permute.xlu0 %2441
      %2443 = vrot.lane.b32.xlu0 %v2358, 64
      %v2444 = vpop.permute.xlu0 %2443
      %2445 = vrot.lane.b32.xlu0 %v2359, 64
      %v2446 = vpop.permute.xlu0 %2445
      %2447 = vrot.lane.b32.xlu0 %v2360, 64
      %v2448 = vpop.permute.xlu0 %2447
      %2449 = vrot.lane.b32.xlu0 %v2361, 64
      %v2450 = vpop.permute.xlu0 %2449
      %2451 = vrot.lane.b32.xlu0 %v2362, 64
      %v2452 = vpop.permute.xlu0 %2451
      %2453 = vrot.lane.b32.xlu0 %v2363, 64
      %v2454 = vpop.permute.xlu0 %2453
      %2455 = vrot.lane.b32.xlu0 %v2364, 64
      %v2456 = vpop.permute.xlu0 %2455
      %2457 = vrot.lane.b32.xlu0 %v2365, 64
      %v2458 = vpop.permute.xlu0 %2457
      %2459 = vrot.lane.b32.xlu0 %v2366, 64
      %v2460 = vpop.permute.xlu0 %2459
      %2461 = vrot.lane.b32.xlu0 %v2367, 64
      %v2462 = vpop.permute.xlu0 %2461
      %2463 = vrot.lane.b32.xlu0 %v2368, 64
      %v2464 = vpop.permute.xlu0 %2463
      %v2497 = vmul.f32 %v1088, %v2402
      %v2498 = vmul.f32 %v1092, %v2404
      %v2499 = vmul.f32 %v1096, %v2406
      %v2500 = vmul.f32 %v1100, %v2408
      %v2501 = vmul.f32 %v1104, %v2410
      %v2502 = vmul.f32 %v1108, %v2412
      %v2503 = vmul.f32 %v1112, %v2414
      %v2504 = vmul.f32 %v1116, %v2416
      %v2505 = vmul.f32 %v1120, %v2418
      %v2506 = vmul.f32 %v1124, %v2420
      %v2507 = vmul.f32 %v1128, %v2422
      %v2508 = vmul.f32 %v1132, %v2424
      %v2509 = vmul.f32 %v1136, %v2426
      %v2510 = vmul.f32 %v1140, %v2428
      %v2511 = vmul.f32 %v1144, %v2430
      %v2512 = vmul.f32 %v1148, %v2432
      %v2513 = vmul.f32 %v1152, %v2434
      %v2514 = vmul.f32 %v1156, %v2436
      %v2515 = vmul.f32 %v1160, %v2438
      %v2516 = vmul.f32 %v1164, %v2440
      %v2517 = vmul.f32 %v1168, %v2442
      %v2518 = vmul.f32 %v1172, %v2444
      %v2519 = vmul.f32 %v1176, %v2446
      %v2520 = vmul.f32 %v1180, %v2448
      %v2521 = vmul.f32 %v1184, %v2450
      %v2522 = vmul.f32 %v1188, %v2452
      %v2523 = vmul.f32 %v1192, %v2454
      %v2524 = vmul.f32 %v1196, %v2456
      %v2525 = vmul.f32 %v1200, %v2458
      %v2526 = vmul.f32 %v1204, %v2460
      %v2527 = vmul.f32 %v1208, %v2462
      %v2528 = vmul.f32 %v1212, %v2464
      %2561 = vrot.lane.b32.xlu0 %v2497, 64
      %v2562 = vpop.permute.xlu0 %2561
      %2563 = vrot.lane.b32.xlu0 %v2498, 64
      %v2564 = vpop.permute.xlu0 %2563
      %2565 = vrot.lane.b32.xlu0 %v2499, 64
      %v2566 = vpop.permute.xlu0 %2565
      %2567 = vrot.lane.b32.xlu0 %v2500, 64
      %v2568 = vpop.permute.xlu0 %2567
      %2569 = vrot.lane.b32.xlu0 %v2501, 64
      %v2570 = vpop.permute.xlu0 %2569
      %2571 = vrot.lane.b32.xlu0 %v2502, 64
      %v2572 = vpop.permute.xlu0 %2571
      %2573 = vrot.lane.b32.xlu0 %v2503, 64
      %v2574 = vpop.permute.xlu0 %2573
      %2575 = vrot.lane.b32.xlu0 %v2504, 64
      %v2576 = vpop.permute.xlu0 %2575
      %2577 = vrot.lane.b32.xlu0 %v2505, 64
      %v2578 = vpop.permute.xlu0 %2577
      %2579 = vrot.lane.b32.xlu0 %v2506, 64
      %v2580 = vpop.permute.xlu0 %2579
      %2581 = vrot.lane.b32.xlu0 %v2507, 64
      %v2582 = vpop.permute.xlu0 %2581
      %2583 = vrot.lane.b32.xlu0 %v2508, 64
      %v2584 = vpop.permute.xlu0 %2583
      %2585 = vrot.lane.b32.xlu0 %v2509, 64
      %v2586 = vpop.permute.xlu0 %2585
      %2587 = vrot.lane.b32.xlu0 %v2510, 64
      %v2588 = vpop.permute.xlu0 %2587
      %2589 = vrot.lane.b32.xlu0 %v2511, 64
      %v2590 = vpop.permute.xlu0 %2589
      %2591 = vrot.lane.b32.xlu0 %v2512, 64
      %v2592 = vpop.permute.xlu0 %2591
      %2593 = vrot.lane.b32.xlu0 %v2513, 64
      %v2594 = vpop.permute.xlu0 %2593
      %2595 = vrot.lane.b32.xlu0 %v2514, 64
      %v2596 = vpop.permute.xlu0 %2595
      %2597 = vrot.lane.b32.xlu0 %v2515, 64
      %v2598 = vpop.permute.xlu0 %2597
      %2599 = vrot.lane.b32.xlu0 %v2516, 64
      %v2600 = vpop.permute.xlu0 %2599
      %2601 = vrot.lane.b32.xlu0 %v2517, 64
      %v2602 = vpop.permute.xlu0 %2601
      %2603 = vrot.lane.b32.xlu0 %v2518, 64
      %v2604 = vpop.permute.xlu0 %2603
      %2605 = vrot.lane.b32.xlu0 %v2519, 64
      %v2606 = vpop.permute.xlu0 %2605
      %2607 = vrot.lane.b32.xlu0 %v2520, 64
      %v2608 = vpop.permute.xlu0 %2607
      %2609 = vrot.lane.b32.xlu0 %v2521, 64
      %v2610 = vpop.permute.xlu0 %2609
      %2611 = vrot.lane.b32.xlu0 %v2522, 64
      %v2612 = vpop.permute.xlu0 %2611
      %2613 = vrot.lane.b32.xlu0 %v2523, 64
      %v2614 = vpop.permute.xlu0 %2613
      %2615 = vrot.lane.b32.xlu0 %v2524, 64
      %v2616 = vpop.permute.xlu0 %2615
      %2617 = vrot.lane.b32.xlu0 %v2525, 64
      %v2618 = vpop.permute.xlu0 %2617
      %2619 = vrot.lane.b32.xlu0 %v2526, 64
      %v2620 = vpop.permute.xlu0 %2619
      %2621 = vrot.lane.b32.xlu0 %v2527, 64
      %v2622 = vpop.permute.xlu0 %2621
      %2623 = vrot.lane.b32.xlu0 %v2528, 64
      %v2624 = vpop.permute.xlu0 %2623
      %v2657 = vadd.f32 %v2145, %v2562
      %v2658 = vadd.f32 %v2146, %v2564
      %v2659 = vadd.f32 %v2147, %v2566
      %v2660 = vadd.f32 %v2148, %v2568
      %v2661 = vadd.f32 %v2149, %v2570
      %v2662 = vadd.f32 %v2150, %v2572
      %v2663 = vadd.f32 %v2151, %v2574
      %v2664 = vadd.f32 %v2152, %v2576
      %v2665 = vadd.f32 %v2153, %v2578
      %v2666 = vadd.f32 %v2154, %v2580
      %v2667 = vadd.f32 %v2155, %v2582
      %v2668 = vadd.f32 %v2156, %v2584
      %v2669 = vadd.f32 %v2157, %v2586
      %v2670 = vadd.f32 %v2158, %v2588
      %v2671 = vadd.f32 %v2159, %v2590
      %v2672 = vadd.f32 %v2160, %v2592
      %v2673 = vadd.f32 %v2161, %v2594
      %v2674 = vadd.f32 %v2162, %v2596
      %v2675 = vadd.f32 %v2163, %v2598
      %v2676 = vadd.f32 %v2164, %v2600
      %v2677 = vadd.f32 %v2165, %v2602
      %v2678 = vadd.f32 %v2166, %v2604
      %v2679 = vadd.f32 %v2167, %v2606
      %v2680 = vadd.f32 %v2168, %v2608
      %v2681 = vadd.f32 %v2169, %v2610
      %v2682 = vadd.f32 %v2170, %v2612
      %v2683 = vadd.f32 %v2171, %v2614
      %v2684 = vadd.f32 %v2172, %v2616
      %v2685 = vadd.f32 %v2173, %v2618
      %v2686 = vadd.f32 %v2174, %v2620
      %v2687 = vadd.f32 %v2175, %v2622
      %v2688 = vadd.f32 %v2176, %v2624
      %2689 = vrot.lane.b32.xlu0 %v1089, 104
      %v2690 = vpop.permute.xlu0 %2689
      %2691 = vrot.lane.b32.xlu0 %v1093, 104
      %v2692 = vpop.permute.xlu0 %2691
      %2693 = vrot.lane.b32.xlu0 %v1097, 104
      %v2694 = vpop.permute.xlu0 %2693
      %2695 = vrot.lane.b32.xlu0 %v1101, 104
      %v2696 = vpop.permute.xlu0 %2695
      %2697 = vrot.lane.b32.xlu0 %v1105, 104
      %v2698 = vpop.permute.xlu0 %2697
      %2699 = vrot.lane.b32.xlu0 %v1109, 104
      %v2700 = vpop.permute.xlu0 %2699
      %2701 = vrot.lane.b32.xlu0 %v1113, 104
      %v2702 = vpop.permute.xlu0 %2701
      %2703 = vrot.lane.b32.xlu0 %v1117, 104
      %v2704 = vpop.permute.xlu0 %2703
      %2705 = vrot.lane.b32.xlu0 %v1121, 104
      %v2706 = vpop.permute.xlu0 %2705
      %2707 = vrot.lane.b32.xlu0 %v1125, 104
      %v2708 = vpop.permute.xlu0 %2707
      %2709 = vrot.lane.b32.xlu0 %v1129, 104
      %v2710 = vpop.permute.xlu0 %2709
      %2711 = vrot.lane.b32.xlu0 %v1133, 104
      %v2712 = vpop.permute.xlu0 %2711
      %2713 = vrot.lane.b32.xlu0 %v1137, 104
      %v2714 = vpop.permute.xlu0 %2713
      %2715 = vrot.lane.b32.xlu0 %v1141, 104
      %v2716 = vpop.permute.xlu0 %2715
      %2717 = vrot.lane.b32.xlu0 %v1145, 104
      %v2718 = vpop.permute.xlu0 %2717
      %2719 = vrot.lane.b32.xlu0 %v1149, 104
      %v2720 = vpop.permute.xlu0 %2719
      %2721 = vrot.lane.b32.xlu0 %v1153, 104
      %v2722 = vpop.permute.xlu0 %2721
      %2723 = vrot.lane.b32.xlu0 %v1157, 104
      %v2724 = vpop.permute.xlu0 %2723
      %2725 = vrot.lane.b32.xlu0 %v1161, 104
      %v2726 = vpop.permute.xlu0 %2725
      %2727 = vrot.lane.b32.xlu0 %v1165, 104
      %v2728 = vpop.permute.xlu0 %2727
      %2729 = vrot.lane.b32.xlu0 %v1169, 104
      %v2730 = vpop.permute.xlu0 %2729
      %2731 = vrot.lane.b32.xlu0 %v1173, 104
      %v2732 = vpop.permute.xlu0 %2731
      %2733 = vrot.lane.b32.xlu0 %v1177, 104
      %v2734 = vpop.permute.xlu0 %2733
      %2735 = vrot.lane.b32.xlu0 %v1181, 104
      %v2736 = vpop.permute.xlu0 %2735
      %2737 = vrot.lane.b32.xlu0 %v1185, 104
      %v2738 = vpop.permute.xlu0 %2737
      %2739 = vrot.lane.b32.xlu0 %v1189, 104
      %v2740 = vpop.permute.xlu0 %2739
      %2741 = vrot.lane.b32.xlu0 %v1193, 104
      %v2742 = vpop.permute.xlu0 %2741
      %2743 = vrot.lane.b32.xlu0 %v1197, 104
      %v2744 = vpop.permute.xlu0 %2743
      %2745 = vrot.lane.b32.xlu0 %v1201, 104
      %v2746 = vpop.permute.xlu0 %2745
      %2747 = vrot.lane.b32.xlu0 %v1205, 104
      %v2748 = vpop.permute.xlu0 %2747
      %2749 = vrot.lane.b32.xlu0 %v1209, 104
      %v2750 = vpop.permute.xlu0 %2749
      %2751 = vrot.lane.b32.xlu0 %v1213, 104
      %v2752 = vpop.permute.xlu0 %2751
      %v2785 = vsel %vm1534, %v2690, %v2178
      %v2786 = vsel %vm1534, %v2692, %v2180
      %v2787 = vsel %vm1534, %v2694, %v2182
      %v2788 = vsel %vm1534, %v2696, %v2184
      %v2789 = vsel %vm1534, %v2698, %v2186
      %v2790 = vsel %vm1534, %v2700, %v2188
      %v2791 = vsel %vm1534, %v2702, %v2190
      %v2792 = vsel %vm1534, %v2704, %v2192
      %v2793 = vsel %vm1534, %v2706, %v2194
      %v2794 = vsel %vm1534, %v2708, %v2196
      %v2795 = vsel %vm1534, %v2710, %v2198
      %v2796 = vsel %vm1534, %v2712, %v2200
      %v2797 = vsel %vm1534, %v2714, %v2202
      %v2798 = vsel %vm1534, %v2716, %v2204
      %v2799 = vsel %vm1534, %v2718, %v2206
      %v2800 = vsel %vm1534, %v2720, %v2208
      %v2801 = vsel %vm1534, %v2722, %v2210
      %v2802 = vsel %vm1534, %v2724, %v2212
      %v2803 = vsel %vm1534, %v2726, %v2214
      %v2804 = vsel %vm1534, %v2728, %v2216
      %v2805 = vsel %vm1534, %v2730, %v2218
      %v2806 = vsel %vm1534, %v2732, %v2220
      %v2807 = vsel %vm1534, %v2734, %v2222
      %v2808 = vsel %vm1534, %v2736, %v2224
      %v2809 = vsel %vm1534, %v2738, %v2226
      %v2810 = vsel %vm1534, %v2740, %v2228
      %v2811 = vsel %vm1534, %v2742, %v2230
      %v2812 = vsel %vm1534, %v2744, %v2232
      %v2813 = vsel %vm1534, %v2746, %v2234
      %v2814 = vsel %vm1534, %v2748, %v2236
      %v2815 = vsel %vm1534, %v2750, %v2238
      %v2816 = vsel %vm1534, %v2752, %v2240
      %v2817 = vsel %vm1567, %v2785, %v1666
      %v2818 = vsel %vm1567, %v2786, %v1668
      %v2819 = vsel %vm1567, %v2787, %v1670
      %v2820 = vsel %vm1567, %v2788, %v1672
      %v2821 = vsel %vm1567, %v2789, %v1674
      %v2822 = vsel %vm1567, %v2790, %v1676
      %v2823 = vsel %vm1567, %v2791, %v1678
      %v2824 = vsel %vm1567, %v2792, %v1680
      %v2825 = vsel %vm1567, %v2793, %v1682
      %v2826 = vsel %vm1567, %v2794, %v1684
      %v2827 = vsel %vm1567, %v2795, %v1686
      %v2828 = vsel %vm1567, %v2796, %v1688
      %v2829 = vsel %vm1567, %v2797, %v1690
      %v2830 = vsel %vm1567, %v2798, %v1692
      %v2831 = vsel %vm1567, %v2799, %v1694
      %v2832 = vsel %vm1567, %v2800, %v1696
      %v2833 = vsel %vm1567, %v2801, %v1698
      %v2834 = vsel %vm1567, %v2802, %v1700
      %v2835 = vsel %vm1567, %v2803, %v1702
      %v2836 = vsel %vm1567, %v2804, %v1704
      %v2837 = vsel %vm1567, %v2805, %v1706
      %v2838 = vsel %vm1567, %v2806, %v1708
      %v2839 = vsel %vm1567, %v2807, %v1710
      %v2840 = vsel %vm1567, %v2808, %v1712
      %v2841 = vsel %vm1567, %v2809, %v1714
      %v2842 = vsel %vm1567, %v2810, %v1716
      %v2843 = vsel %vm1567, %v2811, %v1718
      %v2844 = vsel %vm1567, %v2812, %v1720
      %v2845 = vsel %vm1567, %v2813, %v1722
      %v2846 = vsel %vm1567, %v2814, %v1724
      %v2847 = vsel %vm1567, %v2815, %v1726
      %v2848 = vsel %vm1567, %v2816, %v1728
      %v2849 = vsel %vm1600, %v2817, %v1089
      %v2850 = vsel %vm1600, %v2818, %v1093
      %v2851 = vsel %vm1600, %v2819, %v1097
      %v2852 = vsel %vm1600, %v2820, %v1101
      %v2853 = vsel %vm1600, %v2821, %v1105
      %v2854 = vsel %vm1600, %v2822, %v1109
      %v2855 = vsel %vm1600, %v2823, %v1113
      %v2856 = vsel %vm1600, %v2824, %v1117
      %v2857 = vsel %vm1600, %v2825, %v1121
      %v2858 = vsel %vm1600, %v2826, %v1125
      %v2859 = vsel %vm1600, %v2827, %v1129
      %v2860 = vsel %vm1600, %v2828, %v1133
      %v2861 = vsel %vm1600, %v2829, %v1137
      %v2862 = vsel %vm1600, %v2830, %v1141
      %v2863 = vsel %vm1600, %v2831, %v1145
      %v2864 = vsel %vm1600, %v2832, %v1149
      %v2865 = vsel %vm1600, %v2833, %v1153
      %v2866 = vsel %vm1600, %v2834, %v1157
      %v2867 = vsel %vm1600, %v2835, %v1161
      %v2868 = vsel %vm1600, %v2836, %v1165
      %v2869 = vsel %vm1600, %v2837, %v1169
      %v2870 = vsel %vm1600, %v2838, %v1173
      %v2871 = vsel %vm1600, %v2839, %v1177
      %v2872 = vsel %vm1600, %v2840, %v1181
      %v2873 = vsel %vm1600, %v2841, %v1185
      %v2874 = vsel %vm1600, %v2842, %v1189
      %v2875 = vsel %vm1600, %v2843, %v1193
      %v2876 = vsel %vm1600, %v2844, %v1197
      %v2877 = vsel %vm1600, %v2845, %v1201
      %v2878 = vsel %vm1600, %v2846, %v1205
      %v2879 = vsel %vm1600, %v2847, %v1209
      %v2880 = vsel %vm1600, %v2848, %v1213
      %2913 = vrot.lane.b32.xlu0 %v2849, 96
      %v2914 = vpop.permute.xlu0 %2913
      %2915 = vrot.lane.b32.xlu0 %v2850, 96
      %v2916 = vpop.permute.xlu0 %2915
      %2917 = vrot.lane.b32.xlu0 %v2851, 96
      %v2918 = vpop.permute.xlu0 %2917
      %2919 = vrot.lane.b32.xlu0 %v2852, 96
      %v2920 = vpop.permute.xlu0 %2919
      %2921 = vrot.lane.b32.xlu0 %v2853, 96
      %v2922 = vpop.permute.xlu0 %2921
      %2923 = vrot.lane.b32.xlu0 %v2854, 96
      %v2924 = vpop.permute.xlu0 %2923
      %2925 = vrot.lane.b32.xlu0 %v2855, 96
      %v2926 = vpop.permute.xlu0 %2925
      %2927 = vrot.lane.b32.xlu0 %v2856, 96
      %v2928 = vpop.permute.xlu0 %2927
      %2929 = vrot.lane.b32.xlu0 %v2857, 96
      %v2930 = vpop.permute.xlu0 %2929
      %2931 = vrot.lane.b32.xlu0 %v2858, 96
      %v2932 = vpop.permute.xlu0 %2931
      %2933 = vrot.lane.b32.xlu0 %v2859, 96
      %v2934 = vpop.permute.xlu0 %2933
      %2935 = vrot.lane.b32.xlu0 %v2860, 96
      %v2936 = vpop.permute.xlu0 %2935
      %2937 = vrot.lane.b32.xlu0 %v2861, 96
      %v2938 = vpop.permute.xlu0 %2937
      %2939 = vrot.lane.b32.xlu0 %v2862, 96
      %v2940 = vpop.permute.xlu0 %2939
      %2941 = vrot.lane.b32.xlu0 %v2863, 96
      %v2942 = vpop.permute.xlu0 %2941
      %2943 = vrot.lane.b32.xlu0 %v2864, 96
      %v2944 = vpop.permute.xlu0 %2943
      %2945 = vrot.lane.b32.xlu0 %v2865, 96
      %v2946 = vpop.permute.xlu0 %2945
      %2947 = vrot.lane.b32.xlu0 %v2866, 96
      %v2948 = vpop.permute.xlu0 %2947
      %2949 = vrot.lane.b32.xlu0 %v2867, 96
      %v2950 = vpop.permute.xlu0 %2949
      %2951 = vrot.lane.b32.xlu0 %v2868, 96
      %v2952 = vpop.permute.xlu0 %2951
      %2953 = vrot.lane.b32.xlu0 %v2869, 96
      %v2954 = vpop.permute.xlu0 %2953
      %2955 = vrot.lane.b32.xlu0 %v2870, 96
      %v2956 = vpop.permute.xlu0 %2955
      %2957 = vrot.lane.b32.xlu0 %v2871, 96
      %v2958 = vpop.permute.xlu0 %2957
      %2959 = vrot.lane.b32.xlu0 %v2872, 96
      %v2960 = vpop.permute.xlu0 %2959
      %2961 = vrot.lane.b32.xlu0 %v2873, 96
      %v2962 = vpop.permute.xlu0 %2961
      %2963 = vrot.lane.b32.xlu0 %v2874, 96
      %v2964 = vpop.permute.xlu0 %2963
      %2965 = vrot.lane.b32.xlu0 %v2875, 96
      %v2966 = vpop.permute.xlu0 %2965
      %2967 = vrot.lane.b32.xlu0 %v2876, 96
      %v2968 = vpop.permute.xlu0 %2967
      %2969 = vrot.lane.b32.xlu0 %v2877, 96
      %v2970 = vpop.permute.xlu0 %2969
      %2971 = vrot.lane.b32.xlu0 %v2878, 96
      %v2972 = vpop.permute.xlu0 %2971
      %2973 = vrot.lane.b32.xlu0 %v2879, 96
      %v2974 = vpop.permute.xlu0 %2973
      %2975 = vrot.lane.b32.xlu0 %v2880, 96
      %v2976 = vpop.permute.xlu0 %2975
      %v3009 = vmul.f32 %v1088, %v2914
      %v3010 = vmul.f32 %v1092, %v2916
      %v3011 = vmul.f32 %v1096, %v2918
      %v3012 = vmul.f32 %v1100, %v2920
      %v3013 = vmul.f32 %v1104, %v2922
      %v3014 = vmul.f32 %v1108, %v2924
      %v3015 = vmul.f32 %v1112, %v2926
      %v3016 = vmul.f32 %v1116, %v2928
      %v3017 = vmul.f32 %v1120, %v2930
      %v3018 = vmul.f32 %v1124, %v2932
      %v3019 = vmul.f32 %v1128, %v2934
      %v3020 = vmul.f32 %v1132, %v2936
      %v3021 = vmul.f32 %v1136, %v2938
      %v3022 = vmul.f32 %v1140, %v2940
      %v3023 = vmul.f32 %v1144, %v2942
      %v3024 = vmul.f32 %v1148, %v2944
      %v3025 = vmul.f32 %v1152, %v2946
      %v3026 = vmul.f32 %v1156, %v2948
      %v3027 = vmul.f32 %v1160, %v2950
      %v3028 = vmul.f32 %v1164, %v2952
      %v3029 = vmul.f32 %v1168, %v2954
      %v3030 = vmul.f32 %v1172, %v2956
      %v3031 = vmul.f32 %v1176, %v2958
      %v3032 = vmul.f32 %v1180, %v2960
      %v3033 = vmul.f32 %v1184, %v2962
      %v3034 = vmul.f32 %v1188, %v2964
      %v3035 = vmul.f32 %v1192, %v2966
      %v3036 = vmul.f32 %v1196, %v2968
      %v3037 = vmul.f32 %v1200, %v2970
      %v3038 = vmul.f32 %v1204, %v2972
      %v3039 = vmul.f32 %v1208, %v2974
      %v3040 = vmul.f32 %v1212, %v2976
      %3073 = vrot.lane.b32.xlu0 %v3009, 32
      %v3074 = vpop.permute.xlu0 %3073
      %3075 = vrot.lane.b32.xlu0 %v3010, 32
      %v3076 = vpop.permute.xlu0 %3075
      %3077 = vrot.lane.b32.xlu0 %v3011, 32
      %v3078 = vpop.permute.xlu0 %3077
      %3079 = vrot.lane.b32.xlu0 %v3012, 32
      %v3080 = vpop.permute.xlu0 %3079
      %3081 = vrot.lane.b32.xlu0 %v3013, 32
      %v3082 = vpop.permute.xlu0 %3081
      %3083 = vrot.lane.b32.xlu0 %v3014, 32
      %v3084 = vpop.permute.xlu0 %3083
      %3085 = vrot.lane.b32.xlu0 %v3015, 32
      %v3086 = vpop.permute.xlu0 %3085
      %3087 = vrot.lane.b32.xlu0 %v3016, 32
      %v3088 = vpop.permute.xlu0 %3087
      %3089 = vrot.lane.b32.xlu0 %v3017, 32
      %v3090 = vpop.permute.xlu0 %3089
      %3091 = vrot.lane.b32.xlu0 %v3018, 32
      %v3092 = vpop.permute.xlu0 %3091
      %3093 = vrot.lane.b32.xlu0 %v3019, 32
      %v3094 = vpop.permute.xlu0 %3093
      %3095 = vrot.lane.b32.xlu0 %v3020, 32
      %v3096 = vpop.permute.xlu0 %3095
      %3097 = vrot.lane.b32.xlu0 %v3021, 32
      %v3098 = vpop.permute.xlu0 %3097
      %3099 = vrot.lane.b32.xlu0 %v3022, 32
      %v3100 = vpop.permute.xlu0 %3099
      %3101 = vrot.lane.b32.xlu0 %v3023, 32
      %v3102 = vpop.permute.xlu0 %3101
      %3103 = vrot.lane.b32.xlu0 %v3024, 32
      %v3104 = vpop.permute.xlu0 %3103
      %3105 = vrot.lane.b32.xlu0 %v3025, 32
      %v3106 = vpop.permute.xlu0 %3105
      %3107 = vrot.lane.b32.xlu0 %v3026, 32
      %v3108 = vpop.permute.xlu0 %3107
      %3109 = vrot.lane.b32.xlu0 %v3027, 32
      %v3110 = vpop.permute.xlu0 %3109
      %3111 = vrot.lane.b32.xlu0 %v3028, 32
      %v3112 = vpop.permute.xlu0 %3111
      %3113 = vrot.lane.b32.xlu0 %v3029, 32
      %v3114 = vpop.permute.xlu0 %3113
      %3115 = vrot.lane.b32.xlu0 %v3030, 32
      %v3116 = vpop.permute.xlu0 %3115
      %3117 = vrot.lane.b32.xlu0 %v3031, 32
      %v3118 = vpop.permute.xlu0 %3117
      %3119 = vrot.lane.b32.xlu0 %v3032, 32
      %v3120 = vpop.permute.xlu0 %3119
      %3121 = vrot.lane.b32.xlu0 %v3033, 32
      %v3122 = vpop.permute.xlu0 %3121
      %3123 = vrot.lane.b32.xlu0 %v3034, 32
      %v3124 = vpop.permute.xlu0 %3123
      %3125 = vrot.lane.b32.xlu0 %v3035, 32
      %v3126 = vpop.permute.xlu0 %3125
      %3127 = vrot.lane.b32.xlu0 %v3036, 32
      %v3128 = vpop.permute.xlu0 %3127
      %3129 = vrot.lane.b32.xlu0 %v3037, 32
      %v3130 = vpop.permute.xlu0 %3129
      %3131 = vrot.lane.b32.xlu0 %v3038, 32
      %v3132 = vpop.permute.xlu0 %3131
      %3133 = vrot.lane.b32.xlu0 %v3039, 32
      %v3134 = vpop.permute.xlu0 %3133
      %3135 = vrot.lane.b32.xlu0 %v3040, 32
      %v3136 = vpop.permute.xlu0 %3135
      %v3169 = vadd.f32 %v2657, %v3074
      %v3170 = vadd.f32 %v2658, %v3076
      %v3171 = vadd.f32 %v2659, %v3078
      %v3172 = vadd.f32 %v2660, %v3080
      %v3173 = vadd.f32 %v2661, %v3082
      %v3174 = vadd.f32 %v2662, %v3084
      %v3175 = vadd.f32 %v2663, %v3086
      %v3176 = vadd.f32 %v2664, %v3088
      %v3177 = vadd.f32 %v2665, %v3090
      %v3178 = vadd.f32 %v2666, %v3092
      %v3179 = vadd.f32 %v2667, %v3094
      %v3180 = vadd.f32 %v2668, %v3096
      %v3181 = vadd.f32 %v2669, %v3098
      %v3182 = vadd.f32 %v2670, %v3100
      %v3183 = vadd.f32 %v2671, %v3102
      %v3184 = vadd.f32 %v2672, %v3104
      %v3185 = vadd.f32 %v2673, %v3106
      %v3186 = vadd.f32 %v2674, %v3108
      %v3187 = vadd.f32 %v2675, %v3110
      %v3188 = vadd.f32 %v2676, %v3112
      %v3189 = vadd.f32 %v2677, %v3114
      %v3190 = vadd.f32 %v2678, %v3116
      %v3191 = vadd.f32 %v2679, %v3118
      %v3192 = vadd.f32 %v2680, %v3120
      %v3193 = vadd.f32 %v2681, %v3122
      %v3194 = vadd.f32 %v2682, %v3124
      %v3195 = vadd.f32 %v2683, %v3126
      %v3196 = vadd.f32 %v2684, %v3128
      %v3197 = vadd.f32 %v2685, %v3130
      %v3198 = vadd.f32 %v2686, %v3132
      %v3199 = vadd.f32 %v2687, %v3134
      %v3200 = vadd.f32 %v2688, %v3136
      %3233 = vrot.lane.b32.xlu0 %v3169, 8
      %v3234 = vpop.permute.xlu0 %3233
      %3235 = vrot.lane.b32.xlu0 %v3170, 8
      %v3236 = vpop.permute.xlu0 %3235
      %3237 = vrot.lane.b32.xlu0 %v3171, 8
      %v3238 = vpop.permute.xlu0 %3237
      %3239 = vrot.lane.b32.xlu0 %v3172, 8
      %v3240 = vpop.permute.xlu0 %3239
      %3241 = vrot.lane.b32.xlu0 %v3173, 8
      %v3242 = vpop.permute.xlu0 %3241
      %3243 = vrot.lane.b32.xlu0 %v3174, 8
      %v3244 = vpop.permute.xlu0 %3243
      %3245 = vrot.lane.b32.xlu0 %v3175, 8
      %v3246 = vpop.permute.xlu0 %3245
      %3247 = vrot.lane.b32.xlu0 %v3176, 8
      %v3248 = vpop.permute.xlu0 %3247
      %3249 = vrot.lane.b32.xlu0 %v3177, 8
      %v3250 = vpop.permute.xlu0 %3249
      %3251 = vrot.lane.b32.xlu0 %v3178, 8
      %v3252 = vpop.permute.xlu0 %3251
      %3253 = vrot.lane.b32.xlu0 %v3179, 8
      %v3254 = vpop.permute.xlu0 %3253
      %3255 = vrot.lane.b32.xlu0 %v3180, 8
      %v3256 = vpop.permute.xlu0 %3255
      %3257 = vrot.lane.b32.xlu0 %v3181, 8
      %v3258 = vpop.permute.xlu0 %3257
      %3259 = vrot.lane.b32.xlu0 %v3182, 8
      %v3260 = vpop.permute.xlu0 %3259
      %3261 = vrot.lane.b32.xlu0 %v3183, 8
      %v3262 = vpop.permute.xlu0 %3261
      %3263 = vrot.lane.b32.xlu0 %v3184, 8
      %v3264 = vpop.permute.xlu0 %3263
      %3265 = vrot.lane.b32.xlu0 %v3185, 8
      %v3266 = vpop.permute.xlu0 %3265
      %3267 = vrot.lane.b32.xlu0 %v3186, 8
      %v3268 = vpop.permute.xlu0 %3267
      %3269 = vrot.lane.b32.xlu0 %v3187, 8
      %v3270 = vpop.permute.xlu0 %3269
      %3271 = vrot.lane.b32.xlu0 %v3188, 8
      %v3272 = vpop.permute.xlu0 %3271
      %3273 = vrot.lane.b32.xlu0 %v3189, 8
      %v3274 = vpop.permute.xlu0 %3273
      %3275 = vrot.lane.b32.xlu0 %v3190, 8
      %v3276 = vpop.permute.xlu0 %3275
      %3277 = vrot.lane.b32.xlu0 %v3191, 8
      %v3278 = vpop.permute.xlu0 %3277
      %3279 = vrot.lane.b32.xlu0 %v3192, 8
      %v3280 = vpop.permute.xlu0 %3279
      %3281 = vrot.lane.b32.xlu0 %v3193, 8
      %v3282 = vpop.permute.xlu0 %3281
      %3283 = vrot.lane.b32.xlu0 %v3194, 8
      %v3284 = vpop.permute.xlu0 %3283
      %3285 = vrot.lane.b32.xlu0 %v3195, 8
      %v3286 = vpop.permute.xlu0 %3285
      %3287 = vrot.lane.b32.xlu0 %v3196, 8
      %v3288 = vpop.permute.xlu0 %3287
      %3289 = vrot.lane.b32.xlu0 %v3197, 8
      %v3290 = vpop.permute.xlu0 %3289
      %3291 = vrot.lane.b32.xlu0 %v3198, 8
      %v3292 = vpop.permute.xlu0 %3291
      %3293 = vrot.lane.b32.xlu0 %v3199, 8
      %v3294 = vpop.permute.xlu0 %3293
      %3295 = vrot.lane.b32.xlu0 %v3200, 8
      %v3296 = vpop.permute.xlu0 %3295
      %3329 = vrot.lane.b32.xlu0 %v3169, 16
      %v3330 = vpop.permute.xlu0 %3329
      %3331 = vrot.lane.b32.xlu0 %v3170, 16
      %v3332 = vpop.permute.xlu0 %3331
      %3333 = vrot.lane.b32.xlu0 %v3171, 16
      %v3334 = vpop.permute.xlu0 %3333
      %3335 = vrot.lane.b32.xlu0 %v3172, 16
      %v3336 = vpop.permute.xlu0 %3335
      %3337 = vrot.lane.b32.xlu0 %v3173, 16
      %v3338 = vpop.permute.xlu0 %3337
      %3339 = vrot.lane.b32.xlu0 %v3174, 16
      %v3340 = vpop.permute.xlu0 %3339
      %3341 = vrot.lane.b32.xlu0 %v3175, 16
      %v3342 = vpop.permute.xlu0 %3341
      %3343 = vrot.lane.b32.xlu0 %v3176, 16
      %v3344 = vpop.permute.xlu0 %3343
      %3345 = vrot.lane.b32.xlu0 %v3177, 16
      %v3346 = vpop.permute.xlu0 %3345
      %3347 = vrot.lane.b32.xlu0 %v3178, 16
      %v3348 = vpop.permute.xlu0 %3347
      %3349 = vrot.lane.b32.xlu0 %v3179, 16
      %v3350 = vpop.permute.xlu0 %3349
      %3351 = vrot.lane.b32.xlu0 %v3180, 16
      %v3352 = vpop.permute.xlu0 %3351
      %3353 = vrot.lane.b32.xlu0 %v3181, 16
      %v3354 = vpop.permute.xlu0 %3353
      %3355 = vrot.lane.b32.xlu0 %v3182, 16
      %v3356 = vpop.permute.xlu0 %3355
      %3357 = vrot.lane.b32.xlu0 %v3183, 16
      %v3358 = vpop.permute.xlu0 %3357
      %3359 = vrot.lane.b32.xlu0 %v3184, 16
      %v3360 = vpop.permute.xlu0 %3359
      %3361 = vrot.lane.b32.xlu0 %v3185, 16
      %v3362 = vpop.permute.xlu0 %3361
      %3363 = vrot.lane.b32.xlu0 %v3186, 16
      %v3364 = vpop.permute.xlu0 %3363
      %3365 = vrot.lane.b32.xlu0 %v3187, 16
      %v3366 = vpop.permute.xlu0 %3365
      %3367 = vrot.lane.b32.xlu0 %v3188, 16
      %v3368 = vpop.permute.xlu0 %3367
      %3369 = vrot.lane.b32.xlu0 %v3189, 16
      %v3370 = vpop.permute.xlu0 %3369
      %3371 = vrot.lane.b32.xlu0 %v3190, 16
      %v3372 = vpop.permute.xlu0 %3371
      %3373 = vrot.lane.b32.xlu0 %v3191, 16
      %v3374 = vpop.permute.xlu0 %3373
      %3375 = vrot.lane.b32.xlu0 %v3192, 16
      %v3376 = vpop.permute.xlu0 %3375
      %3377 = vrot.lane.b32.xlu0 %v3193, 16
      %v3378 = vpop.permute.xlu0 %3377
      %3379 = vrot.lane.b32.xlu0 %v3194, 16
      %v3380 = vpop.permute.xlu0 %3379
      %3381 = vrot.lane.b32.xlu0 %v3195, 16
      %v3382 = vpop.permute.xlu0 %3381
      %3383 = vrot.lane.b32.xlu0 %v3196, 16
      %v3384 = vpop.permute.xlu0 %3383
      %3385 = vrot.lane.b32.xlu0 %v3197, 16
      %v3386 = vpop.permute.xlu0 %3385
      %3387 = vrot.lane.b32.xlu0 %v3198, 16
      %v3388 = vpop.permute.xlu0 %3387
      %3389 = vrot.lane.b32.xlu0 %v3199, 16
      %v3390 = vpop.permute.xlu0 %3389
      %3391 = vrot.lane.b32.xlu0 %v3200, 16
      %v3392 = vpop.permute.xlu0 %3391
      %3425 = vrot.lane.b32.xlu0 %v3169, 24
      %v3426 = vpop.permute.xlu0 %3425
      %3427 = vrot.lane.b32.xlu0 %v3170, 24
      %v3428 = vpop.permute.xlu0 %3427
      %3429 = vrot.lane.b32.xlu0 %v3171, 24
      %v3430 = vpop.permute.xlu0 %3429
      %3431 = vrot.lane.b32.xlu0 %v3172, 24
      %v3432 = vpop.permute.xlu0 %3431
      %3433 = vrot.lane.b32.xlu0 %v3173, 24
      %v3434 = vpop.permute.xlu0 %3433
      %3435 = vrot.lane.b32.xlu0 %v3174, 24
      %v3436 = vpop.permute.xlu0 %3435
      %3437 = vrot.lane.b32.xlu0 %v3175, 24
      %v3438 = vpop.permute.xlu0 %3437
      %3439 = vrot.lane.b32.xlu0 %v3176, 24
      %v3440 = vpop.permute.xlu0 %3439
      %3441 = vrot.lane.b32.xlu0 %v3177, 24
      %v3442 = vpop.permute.xlu0 %3441
      %3443 = vrot.lane.b32.xlu0 %v3178, 24
      %v3444 = vpop.permute.xlu0 %3443
      %3445 = vrot.lane.b32.xlu0 %v3179, 24
      %v3446 = vpop.permute.xlu0 %3445
      %3447 = vrot.lane.b32.xlu0 %v3180, 24
      %v3448 = vpop.permute.xlu0 %3447
      %3449 = vrot.lane.b32.xlu0 %v3181, 24
      %v3450 = vpop.permute.xlu0 %3449
      %3451 = vrot.lane.b32.xlu0 %v3182, 24
      %v3452 = vpop.permute.xlu0 %3451
      %3453 = vrot.lane.b32.xlu0 %v3183, 24
      %v3454 = vpop.permute.xlu0 %3453
      %3455 = vrot.lane.b32.xlu0 %v3184, 24
      %v3456 = vpop.permute.xlu0 %3455
      %3457 = vrot.lane.b32.xlu0 %v3185, 24
      %v3458 = vpop.permute.xlu0 %3457
      %3459 = vrot.lane.b32.xlu0 %v3186, 24
      %v3460 = vpop.permute.xlu0 %3459
      %3461 = vrot.lane.b32.xlu0 %v3187, 24
      %v3462 = vpop.permute.xlu0 %3461
      %3463 = vrot.lane.b32.xlu0 %v3188, 24
      %v3464 = vpop.permute.xlu0 %3463
      %3465 = vrot.lane.b32.xlu0 %v3189, 24
      %v3466 = vpop.permute.xlu0 %3465
      %3467 = vrot.lane.b32.xlu0 %v3190, 24
      %v3468 = vpop.permute.xlu0 %3467
      %3469 = vrot.lane.b32.xlu0 %v3191, 24
      %v3470 = vpop.permute.xlu0 %3469
      %3471 = vrot.lane.b32.xlu0 %v3192, 24
      %v3472 = vpop.permute.xlu0 %3471
      %3473 = vrot.lane.b32.xlu0 %v3193, 24
      %v3474 = vpop.permute.xlu0 %3473
      %3475 = vrot.lane.b32.xlu0 %v3194, 24
      %v3476 = vpop.permute.xlu0 %3475
      %3477 = vrot.lane.b32.xlu0 %v3195, 24
      %v3478 = vpop.permute.xlu0 %3477
      %3479 = vrot.lane.b32.xlu0 %v3196, 24
      %v3480 = vpop.permute.xlu0 %3479
      %3481 = vrot.lane.b32.xlu0 %v3197, 24
      %v3482 = vpop.permute.xlu0 %3481
      %3483 = vrot.lane.b32.xlu0 %v3198, 24
      %v3484 = vpop.permute.xlu0 %3483
      %3485 = vrot.lane.b32.xlu0 %v3199, 24
      %v3486 = vpop.permute.xlu0 %3485
      %3487 = vrot.lane.b32.xlu0 %v3200, 24
      %v3488 = vpop.permute.xlu0 %3487
      %3521 = vrot.lane.b32.xlu0 %v3169, 32
      %v3522 = vpop.permute.xlu0 %3521
      %3523 = vrot.lane.b32.xlu0 %v3170, 32
      %v3524 = vpop.permute.xlu0 %3523
      %3525 = vrot.lane.b32.xlu0 %v3171, 32
      %v3526 = vpop.permute.xlu0 %3525
      %3527 = vrot.lane.b32.xlu0 %v3172, 32
      %v3528 = vpop.permute.xlu0 %3527
      %3529 = vrot.lane.b32.xlu0 %v3173, 32
      %v3530 = vpop.permute.xlu0 %3529
      %3531 = vrot.lane.b32.xlu0 %v3174, 32
      %v3532 = vpop.permute.xlu0 %3531
      %3533 = vrot.lane.b32.xlu0 %v3175, 32
      %v3534 = vpop.permute.xlu0 %3533
      %3535 = vrot.lane.b32.xlu0 %v3176, 32
      %v3536 = vpop.permute.xlu0 %3535
      %3537 = vrot.lane.b32.xlu0 %v3177, 32
      %v3538 = vpop.permute.xlu0 %3537
      %3539 = vrot.lane.b32.xlu0 %v3178, 32
      %v3540 = vpop.permute.xlu0 %3539
      %3541 = vrot.lane.b32.xlu0 %v3179, 32
      %v3542 = vpop.permute.xlu0 %3541
      %3543 = vrot.lane.b32.xlu0 %v3180, 32
      %v3544 = vpop.permute.xlu0 %3543
      %3545 = vrot.lane.b32.xlu0 %v3181, 32
      %v3546 = vpop.permute.xlu0 %3545
      %3547 = vrot.lane.b32.xlu0 %v3182, 32
      %v3548 = vpop.permute.xlu0 %3547
      %3549 = vrot.lane.b32.xlu0 %v3183, 32
      %v3550 = vpop.permute.xlu0 %3549
      %3551 = vrot.lane.b32.xlu0 %v3184, 32
      %v3552 = vpop.permute.xlu0 %3551
      %3553 = vrot.lane.b32.xlu0 %v3185, 32
      %v3554 = vpop.permute.xlu0 %3553
      %3555 = vrot.lane.b32.xlu0 %v3186, 32
      %v3556 = vpop.permute.xlu0 %3555
      %3557 = vrot.lane.b32.xlu0 %v3187, 32
      %v3558 = vpop.permute.xlu0 %3557
      %3559 = vrot.lane.b32.xlu0 %v3188, 32
      %v3560 = vpop.permute.xlu0 %3559
      %3561 = vrot.lane.b32.xlu0 %v3189, 32
      %v3562 = vpop.permute.xlu0 %3561
      %3563 = vrot.lane.b32.xlu0 %v3190, 32
      %v3564 = vpop.permute.xlu0 %3563
      %3565 = vrot.lane.b32.xlu0 %v3191, 32
      %v3566 = vpop.permute.xlu0 %3565
      %3567 = vrot.lane.b32.xlu0 %v3192, 32
      %v3568 = vpop.permute.xlu0 %3567
      %3569 = vrot.lane.b32.xlu0 %v3193, 32
      %v3570 = vpop.permute.xlu0 %3569
      %3571 = vrot.lane.b32.xlu0 %v3194, 32
      %v3572 = vpop.permute.xlu0 %3571
      %3573 = vrot.lane.b32.xlu0 %v3195, 32
      %v3574 = vpop.permute.xlu0 %3573
      %3575 = vrot.lane.b32.xlu0 %v3196, 32
      %v3576 = vpop.permute.xlu0 %3575
      %3577 = vrot.lane.b32.xlu0 %v3197, 32
      %v3578 = vpop.permute.xlu0 %3577
      %3579 = vrot.lane.b32.xlu0 %v3198, 32
      %v3580 = vpop.permute.xlu0 %3579
      %3581 = vrot.lane.b32.xlu0 %v3199, 32
      %v3582 = vpop.permute.xlu0 %3581
      %3583 = vrot.lane.b32.xlu0 %v3200, 32
      %v3584 = vpop.permute.xlu0 %3583
      %3617 = vrot.lane.b32.xlu0 %v3169, 40
      %v3618 = vpop.permute.xlu0 %3617
      %3619 = vrot.lane.b32.xlu0 %v3170, 40
      %v3620 = vpop.permute.xlu0 %3619
      %3621 = vrot.lane.b32.xlu0 %v3171, 40
      %v3622 = vpop.permute.xlu0 %3621
      %3623 = vrot.lane.b32.xlu0 %v3172, 40
      %v3624 = vpop.permute.xlu0 %3623
      %3625 = vrot.lane.b32.xlu0 %v3173, 40
      %v3626 = vpop.permute.xlu0 %3625
      %3627 = vrot.lane.b32.xlu0 %v3174, 40
      %v3628 = vpop.permute.xlu0 %3627
      %3629 = vrot.lane.b32.xlu0 %v3175, 40
      %v3630 = vpop.permute.xlu0 %3629
      %3631 = vrot.lane.b32.xlu0 %v3176, 40
      %v3632 = vpop.permute.xlu0 %3631
      %3633 = vrot.lane.b32.xlu0 %v3177, 40
      %v3634 = vpop.permute.xlu0 %3633
      %3635 = vrot.lane.b32.xlu0 %v3178, 40
      %v3636 = vpop.permute.xlu0 %3635
      %3637 = vrot.lane.b32.xlu0 %v3179, 40
      %v3638 = vpop.permute.xlu0 %3637
      %3639 = vrot.lane.b32.xlu0 %v3180, 40
      %v3640 = vpop.permute.xlu0 %3639
      %3641 = vrot.lane.b32.xlu0 %v3181, 40
      %v3642 = vpop.permute.xlu0 %3641
      %3643 = vrot.lane.b32.xlu0 %v3182, 40
      %v3644 = vpop.permute.xlu0 %3643
      %3645 = vrot.lane.b32.xlu0 %v3183, 40
      %v3646 = vpop.permute.xlu0 %3645
      %3647 = vrot.lane.b32.xlu0 %v3184, 40
      %v3648 = vpop.permute.xlu0 %3647
      %3649 = vrot.lane.b32.xlu0 %v3185, 40
      %v3650 = vpop.permute.xlu0 %3649
      %3651 = vrot.lane.b32.xlu0 %v3186, 40
      %v3652 = vpop.permute.xlu0 %3651
      %3653 = vrot.lane.b32.xlu0 %v3187, 40
      %v3654 = vpop.permute.xlu0 %3653
      %3655 = vrot.lane.b32.xlu0 %v3188, 40
      %v3656 = vpop.permute.xlu0 %3655
      %3657 = vrot.lane.b32.xlu0 %v3189, 40
      %v3658 = vpop.permute.xlu0 %3657
      %3659 = vrot.lane.b32.xlu0 %v3190, 40
      %v3660 = vpop.permute.xlu0 %3659
      %3661 = vrot.lane.b32.xlu0 %v3191, 40
      %v3662 = vpop.permute.xlu0 %3661
      %3663 = vrot.lane.b32.xlu0 %v3192, 40
      %v3664 = vpop.permute.xlu0 %3663
      %3665 = vrot.lane.b32.xlu0 %v3193, 40
      %v3666 = vpop.permute.xlu0 %3665
      %3667 = vrot.lane.b32.xlu0 %v3194, 40
      %v3668 = vpop.permute.xlu0 %3667
      %3669 = vrot.lane.b32.xlu0 %v3195, 40
      %v3670 = vpop.permute.xlu0 %3669
      %3671 = vrot.lane.b32.xlu0 %v3196, 40
      %v3672 = vpop.permute.xlu0 %3671
      %3673 = vrot.lane.b32.xlu0 %v3197, 40
      %v3674 = vpop.permute.xlu0 %3673
      %3675 = vrot.lane.b32.xlu0 %v3198, 40
      %v3676 = vpop.permute.xlu0 %3675
      %3677 = vrot.lane.b32.xlu0 %v3199, 40
      %v3678 = vpop.permute.xlu0 %3677
      %3679 = vrot.lane.b32.xlu0 %v3200, 40
      %v3680 = vpop.permute.xlu0 %3679
      %3713 = vrot.lane.b32.xlu0 %v3169, 48
      %v3714 = vpop.permute.xlu0 %3713
      %3715 = vrot.lane.b32.xlu0 %v3170, 48
      %v3716 = vpop.permute.xlu0 %3715
      %3717 = vrot.lane.b32.xlu0 %v3171, 48
      %v3718 = vpop.permute.xlu0 %3717
      %3719 = vrot.lane.b32.xlu0 %v3172, 48
      %v3720 = vpop.permute.xlu0 %3719
      %3721 = vrot.lane.b32.xlu0 %v3173, 48
      %v3722 = vpop.permute.xlu0 %3721
      %3723 = vrot.lane.b32.xlu0 %v3174, 48
      %v3724 = vpop.permute.xlu0 %3723
      %3725 = vrot.lane.b32.xlu0 %v3175, 48
      %v3726 = vpop.permute.xlu0 %3725
      %3727 = vrot.lane.b32.xlu0 %v3176, 48
      %v3728 = vpop.permute.xlu0 %3727
      %3729 = vrot.lane.b32.xlu0 %v3177, 48
      %v3730 = vpop.permute.xlu0 %3729
      %3731 = vrot.lane.b32.xlu0 %v3178, 48
      %v3732 = vpop.permute.xlu0 %3731
      %3733 = vrot.lane.b32.xlu0 %v3179, 48
      %v3734 = vpop.permute.xlu0 %3733
      %3735 = vrot.lane.b32.xlu0 %v3180, 48
      %v3736 = vpop.permute.xlu0 %3735
      %3737 = vrot.lane.b32.xlu0 %v3181, 48
      %v3738 = vpop.permute.xlu0 %3737
      %3739 = vrot.lane.b32.xlu0 %v3182, 48
      %v3740 = vpop.permute.xlu0 %3739
      %3741 = vrot.lane.b32.xlu0 %v3183, 48
      %v3742 = vpop.permute.xlu0 %3741
      %3743 = vrot.lane.b32.xlu0 %v3184, 48
      %v3744 = vpop.permute.xlu0 %3743
      %3745 = vrot.lane.b32.xlu0 %v3185, 48
      %v3746 = vpop.permute.xlu0 %3745
      %3747 = vrot.lane.b32.xlu0 %v3186, 48
      %v3748 = vpop.permute.xlu0 %3747
      %3749 = vrot.lane.b32.xlu0 %v3187, 48
      %v3750 = vpop.permute.xlu0 %3749
      %3751 = vrot.lane.b32.xlu0 %v3188, 48
      %v3752 = vpop.permute.xlu0 %3751
      %3753 = vrot.lane.b32.xlu0 %v3189, 48
      %v3754 = vpop.permute.xlu0 %3753
      %3755 = vrot.lane.b32.xlu0 %v3190, 48
      %v3756 = vpop.permute.xlu0 %3755
      %3757 = vrot.lane.b32.xlu0 %v3191, 48
      %v3758 = vpop.permute.xlu0 %3757
      %3759 = vrot.lane.b32.xlu0 %v3192, 48
      %v3760 = vpop.permute.xlu0 %3759
      %3761 = vrot.lane.b32.xlu0 %v3193, 48
      %v3762 = vpop.permute.xlu0 %3761
      %3763 = vrot.lane.b32.xlu0 %v3194, 48
      %v3764 = vpop.permute.xlu0 %3763
      %3765 = vrot.lane.b32.xlu0 %v3195, 48
      %v3766 = vpop.permute.xlu0 %3765
      %3767 = vrot.lane.b32.xlu0 %v3196, 48
      %v3768 = vpop.permute.xlu0 %3767
      %3769 = vrot.lane.b32.xlu0 %v3197, 48
      %v3770 = vpop.permute.xlu0 %3769
      %3771 = vrot.lane.b32.xlu0 %v3198, 48
      %v3772 = vpop.permute.xlu0 %3771
      %3773 = vrot.lane.b32.xlu0 %v3199, 48
      %v3774 = vpop.permute.xlu0 %3773
      %3775 = vrot.lane.b32.xlu0 %v3200, 48
      %v3776 = vpop.permute.xlu0 %3775
      %3809 = vrot.lane.b32.xlu0 %v3169, 56
      %v3810 = vpop.permute.xlu0 %3809
      %3811 = vrot.lane.b32.xlu0 %v3170, 56
      %v3812 = vpop.permute.xlu0 %3811
      %3813 = vrot.lane.b32.xlu0 %v3171, 56
      %v3814 = vpop.permute.xlu0 %3813
      %3815 = vrot.lane.b32.xlu0 %v3172, 56
      %v3816 = vpop.permute.xlu0 %3815
      %3817 = vrot.lane.b32.xlu0 %v3173, 56
      %v3818 = vpop.permute.xlu0 %3817
      %3819 = vrot.lane.b32.xlu0 %v3174, 56
      %v3820 = vpop.permute.xlu0 %3819
      %3821 = vrot.lane.b32.xlu0 %v3175, 56
      %v3822 = vpop.permute.xlu0 %3821
      %3823 = vrot.lane.b32.xlu0 %v3176, 56
      %v3824 = vpop.permute.xlu0 %3823
      %3825 = vrot.lane.b32.xlu0 %v3177, 56
      %v3826 = vpop.permute.xlu0 %3825
      %3827 = vrot.lane.b32.xlu0 %v3178, 56
      %v3828 = vpop.permute.xlu0 %3827
      %3829 = vrot.lane.b32.xlu0 %v3179, 56
      %v3830 = vpop.permute.xlu0 %3829
      %3831 = vrot.lane.b32.xlu0 %v3180, 56
      %v3832 = vpop.permute.xlu0 %3831
      %3833 = vrot.lane.b32.xlu0 %v3181, 56
      %v3834 = vpop.permute.xlu0 %3833
      %3835 = vrot.lane.b32.xlu0 %v3182, 56
      %v3836 = vpop.permute.xlu0 %3835
      %3837 = vrot.lane.b32.xlu0 %v3183, 56
      %v3838 = vpop.permute.xlu0 %3837
      %3839 = vrot.lane.b32.xlu0 %v3184, 56
      %v3840 = vpop.permute.xlu0 %3839
      %3841 = vrot.lane.b32.xlu0 %v3185, 56
      %v3842 = vpop.permute.xlu0 %3841
      %3843 = vrot.lane.b32.xlu0 %v3186, 56
      %v3844 = vpop.permute.xlu0 %3843
      %3845 = vrot.lane.b32.xlu0 %v3187, 56
      %v3846 = vpop.permute.xlu0 %3845
      %3847 = vrot.lane.b32.xlu0 %v3188, 56
      %v3848 = vpop.permute.xlu0 %3847
      %3849 = vrot.lane.b32.xlu0 %v3189, 56
      %v3850 = vpop.permute.xlu0 %3849
      %3851 = vrot.lane.b32.xlu0 %v3190, 56
      %v3852 = vpop.permute.xlu0 %3851
      %3853 = vrot.lane.b32.xlu0 %v3191, 56
      %v3854 = vpop.permute.xlu0 %3853
      %3855 = vrot.lane.b32.xlu0 %v3192, 56
      %v3856 = vpop.permute.xlu0 %3855
      %3857 = vrot.lane.b32.xlu0 %v3193, 56
      %v3858 = vpop.permute.xlu0 %3857
      %3859 = vrot.lane.b32.xlu0 %v3194, 56
      %v3860 = vpop.permute.xlu0 %3859
      %3861 = vrot.lane.b32.xlu0 %v3195, 56
      %v3862 = vpop.permute.xlu0 %3861
      %3863 = vrot.lane.b32.xlu0 %v3196, 56
      %v3864 = vpop.permute.xlu0 %3863
      %3865 = vrot.lane.b32.xlu0 %v3197, 56
      %v3866 = vpop.permute.xlu0 %3865
      %3867 = vrot.lane.b32.xlu0 %v3198, 56
      %v3868 = vpop.permute.xlu0 %3867
      %3869 = vrot.lane.b32.xlu0 %v3199, 56
      %v3870 = vpop.permute.xlu0 %3869
      %3871 = vrot.lane.b32.xlu0 %v3200, 56
      %v3872 = vpop.permute.xlu0 %3871
      %v3905 = vsel %vm1534, %v3169, %v3234
      %v3906 = vsel %vm1534, %v3170, %v3236
      %v3907 = vsel %vm1534, %v3171, %v3238
      %v3908 = vsel %vm1534, %v3172, %v3240
      %v3909 = vsel %vm1534, %v3173, %v3242
      %v3910 = vsel %vm1534, %v3174, %v3244
      %v3911 = vsel %vm1534, %v3175, %v3246
      %v3912 = vsel %vm1534, %v3176, %v3248
      %v3913 = vsel %vm1534, %v3177, %v3250
      %v3914 = vsel %vm1534, %v3178, %v3252
      %v3915 = vsel %vm1534, %v3179, %v3254
      %v3916 = vsel %vm1534, %v3180, %v3256
      %v3917 = vsel %vm1534, %v3181, %v3258
      %v3918 = vsel %vm1534, %v3182, %v3260
      %v3919 = vsel %vm1534, %v3183, %v3262
      %v3920 = vsel %vm1534, %v3184, %v3264
      %v3921 = vsel %vm1534, %v3185, %v3266
      %v3922 = vsel %vm1534, %v3186, %v3268
      %v3923 = vsel %vm1534, %v3187, %v3270
      %v3924 = vsel %vm1534, %v3188, %v3272
      %v3925 = vsel %vm1534, %v3189, %v3274
      %v3926 = vsel %vm1534, %v3190, %v3276
      %v3927 = vsel %vm1534, %v3191, %v3278
      %v3928 = vsel %vm1534, %v3192, %v3280
      %v3929 = vsel %vm1534, %v3193, %v3282
      %v3930 = vsel %vm1534, %v3194, %v3284
      %v3931 = vsel %vm1534, %v3195, %v3286
      %v3932 = vsel %vm1534, %v3196, %v3288
      %v3933 = vsel %vm1534, %v3197, %v3290
      %v3934 = vsel %vm1534, %v3198, %v3292
      %v3935 = vsel %vm1534, %v3199, %v3294
      %v3936 = vsel %vm1534, %v3200, %v3296
      %v3937 = vsel %vm1567, %v3905, %v3330
      %v3938 = vsel %vm1567, %v3906, %v3332
      %v3939 = vsel %vm1567, %v3907, %v3334
      %v3940 = vsel %vm1567, %v3908, %v3336
      %v3941 = vsel %vm1567, %v3909, %v3338
      %v3942 = vsel %vm1567, %v3910, %v3340
      %v3943 = vsel %vm1567, %v3911, %v3342
      %v3944 = vsel %vm1567, %v3912, %v3344
      %v3945 = vsel %vm1567, %v3913, %v3346
      %v3946 = vsel %vm1567, %v3914, %v3348
      %v3947 = vsel %vm1567, %v3915, %v3350
      %v3948 = vsel %vm1567, %v3916, %v3352
      %v3949 = vsel %vm1567, %v3917, %v3354
      %v3950 = vsel %vm1567, %v3918, %v3356
      %v3951 = vsel %vm1567, %v3919, %v3358
      %v3952 = vsel %vm1567, %v3920, %v3360
      %v3953 = vsel %vm1567, %v3921, %v3362
      %v3954 = vsel %vm1567, %v3922, %v3364
      %v3955 = vsel %vm1567, %v3923, %v3366
      %v3956 = vsel %vm1567, %v3924, %v3368
      %v3957 = vsel %vm1567, %v3925, %v3370
      %v3958 = vsel %vm1567, %v3926, %v3372
      %v3959 = vsel %vm1567, %v3927, %v3374
      %v3960 = vsel %vm1567, %v3928, %v3376
      %v3961 = vsel %vm1567, %v3929, %v3378
      %v3962 = vsel %vm1567, %v3930, %v3380
      %v3963 = vsel %vm1567, %v3931, %v3382
      %v3964 = vsel %vm1567, %v3932, %v3384
      %v3965 = vsel %vm1567, %v3933, %v3386
      %v3966 = vsel %vm1567, %v3934, %v3388
      %v3967 = vsel %vm1567, %v3935, %v3390
      %v3968 = vsel %vm1567, %v3936, %v3392
      %v3969 = vsel %vm1600, %v3937, %v3426
      %v3970 = vsel %vm1600, %v3938, %v3428
      %v3971 = vsel %vm1600, %v3939, %v3430
      %v3972 = vsel %vm1600, %v3940, %v3432
      %v3973 = vsel %vm1600, %v3941, %v3434
      %v3974 = vsel %vm1600, %v3942, %v3436
      %v3975 = vsel %vm1600, %v3943, %v3438
      %v3976 = vsel %vm1600, %v3944, %v3440
      %v3977 = vsel %vm1600, %v3945, %v3442
      %v3978 = vsel %vm1600, %v3946, %v3444
      %v3979 = vsel %vm1600, %v3947, %v3446
      %v3980 = vsel %vm1600, %v3948, %v3448
      %v3981 = vsel %vm1600, %v3949, %v3450
      %v3982 = vsel %vm1600, %v3950, %v3452
      %v3983 = vsel %vm1600, %v3951, %v3454
      %v3984 = vsel %vm1600, %v3952, %v3456
      %v3985 = vsel %vm1600, %v3953, %v3458
      %v3986 = vsel %vm1600, %v3954, %v3460
      %v3987 = vsel %vm1600, %v3955, %v3462
      %v3988 = vsel %vm1600, %v3956, %v3464
      %v3989 = vsel %vm1600, %v3957, %v3466
      %v3990 = vsel %vm1600, %v3958, %v3468
      %v3991 = vsel %vm1600, %v3959, %v3470
      %v3992 = vsel %vm1600, %v3960, %v3472
      %v3993 = vsel %vm1600, %v3961, %v3474
      %v3994 = vsel %vm1600, %v3962, %v3476
      %v3995 = vsel %vm1600, %v3963, %v3478
      %v3996 = vsel %vm1600, %v3964, %v3480
      %v3997 = vsel %vm1600, %v3965, %v3482
      %v3998 = vsel %vm1600, %v3966, %v3484
      %v3999 = vsel %vm1600, %v3967, %v3486
      %v4000 = vsel %vm1600, %v3968, %v3488
      %v4001 = vsel %vm537, %v3969, %v3522
      %v4002 = vsel %vm537, %v3970, %v3524
      %v4003 = vsel %vm537, %v3971, %v3526
      %v4004 = vsel %vm537, %v3972, %v3528
      %v4005 = vsel %vm537, %v3973, %v3530
      %v4006 = vsel %vm537, %v3974, %v3532
      %v4007 = vsel %vm537, %v3975, %v3534
      %v4008 = vsel %vm537, %v3976, %v3536
      %v4009 = vsel %vm537, %v3977, %v3538
      %v4010 = vsel %vm537, %v3978, %v3540
      %v4011 = vsel %vm537, %v3979, %v3542
      %v4012 = vsel %vm537, %v3980, %v3544
      %v4013 = vsel %vm537, %v3981, %v3546
      %v4014 = vsel %vm537, %v3982, %v3548
      %v4015 = vsel %vm537, %v3983, %v3550
      %v4016 = vsel %vm537, %v3984, %v3552
      %v4017 = vsel %vm537, %v3985, %v3554
      %v4018 = vsel %vm537, %v3986, %v3556
      %v4019 = vsel %vm537, %v3987, %v3558
      %v4020 = vsel %vm537, %v3988, %v3560
      %v4021 = vsel %vm537, %v3989, %v3562
      %v4022 = vsel %vm537, %v3990, %v3564
      %v4023 = vsel %vm537, %v3991, %v3566
      %v4024 = vsel %vm537, %v3992, %v3568
      %v4025 = vsel %vm537, %v3993, %v3570
      %v4026 = vsel %vm537, %v3994, %v3572
      %v4027 = vsel %vm537, %v3995, %v3574
      %v4028 = vsel %vm537, %v3996, %v3576
      %v4029 = vsel %vm537, %v3997, %v3578
      %v4030 = vsel %vm537, %v3998, %v3580
      %v4031 = vsel %vm537, %v3999, %v3582
      %v4032 = vsel %vm537, %v4000, %v3584
      %vm4033 = vcmask 326656
      %v4034 = vsel %vm4033, %v4001, %v3618
      %v4035 = vsel %vm4033, %v4002, %v3620
      %v4036 = vsel %vm4033, %v4003, %v3622
      %v4037 = vsel %vm4033, %v4004, %v3624
      %v4038 = vsel %vm4033, %v4005, %v3626
      %v4039 = vsel %vm4033, %v4006, %v3628
      %v4040 = vsel %vm4033, %v4007, %v3630
      %v4041 = vsel %vm4033, %v4008, %v3632
      %v4042 = vsel %vm4033, %v4009, %v3634
      %v4043 = vsel %vm4033, %v4010, %v3636
      %v4044 = vsel %vm4033, %v4011, %v3638
      %v4045 = vsel %vm4033, %v4012, %v3640
      %v4046 = vsel %vm4033, %v4013, %v3642
      %v4047 = vsel %vm4033, %v4014, %v3644
      %v4048 = vsel %vm4033, %v4015, %v3646
      %v4049 = vsel %vm4033, %v4016, %v3648
      %v4050 = vsel %vm4033, %v4017, %v3650
      %v4051 = vsel %vm4033, %v4018, %v3652
      %v4052 = vsel %vm4033, %v4019, %v3654
      %v4053 = vsel %vm4033, %v4020, %v3656
      %v4054 = vsel %vm4033, %v4021, %v3658
      %v4055 = vsel %vm4033, %v4022, %v3660
      %v4056 = vsel %vm4033, %v4023, %v3662
      %v4057 = vsel %vm4033, %v4024, %v3664
      %v4058 = vsel %vm4033, %v4025, %v3666
      %v4059 = vsel %vm4033, %v4026, %v3668
      %v4060 = vsel %vm4033, %v4027, %v3670
      %v4061 = vsel %vm4033, %v4028, %v3672
      %v4062 = vsel %vm4033, %v4029, %v3674
      %v4063 = vsel %vm4033, %v4030, %v3676
      %v4064 = vsel %vm4033, %v4031, %v3678
      %v4065 = vsel %vm4033, %v4032, %v3680
      %vm4066 = vcmask 392192
      %v4067 = vsel %vm4066, %v4034, %v3714
      %v4068 = vsel %vm4066, %v4035, %v3716
      %v4069 = vsel %vm4066, %v4036, %v3718
      %v4070 = vsel %vm4066, %v4037, %v3720
      %v4071 = vsel %vm4066, %v4038, %v3722
      %v4072 = vsel %vm4066, %v4039, %v3724
      %v4073 = vsel %vm4066, %v4040, %v3726
      %v4074 = vsel %vm4066, %v4041, %v3728
      %v4075 = vsel %vm4066, %v4042, %v3730
      %v4076 = vsel %vm4066, %v4043, %v3732
      %v4077 = vsel %vm4066, %v4044, %v3734
      %v4078 = vsel %vm4066, %v4045, %v3736
      %v4079 = vsel %vm4066, %v4046, %v3738
      %v4080 = vsel %vm4066, %v4047, %v3740
      %v4081 = vsel %vm4066, %v4048, %v3742
      %v4082 = vsel %vm4066, %v4049, %v3744
      %v4083 = vsel %vm4066, %v4050, %v3746
      %v4084 = vsel %vm4066, %v4051, %v3748
      %v4085 = vsel %vm4066, %v4052, %v3750
      %v4086 = vsel %vm4066, %v4053, %v3752
      %v4087 = vsel %vm4066, %v4054, %v3754
      %v4088 = vsel %vm4066, %v4055, %v3756
      %v4089 = vsel %vm4066, %v4056, %v3758
      %v4090 = vsel %vm4066, %v4057, %v3760
      %v4091 = vsel %vm4066, %v4058, %v3762
      %v4092 = vsel %vm4066, %v4059, %v3764
      %v4093 = vsel %vm4066, %v4060, %v3766
      %v4094 = vsel %vm4066, %v4061, %v3768
      %v4095 = vsel %vm4066, %v4062, %v3770
      %v4096 = vsel %vm4066, %v4063, %v3772
      %v4097 = vsel %vm4066, %v4064, %v3774
      %v4098 = vsel %vm4066, %v4065, %v3776
      %vm4099 = vcmask 457728
      %v4100 = vsel %vm4099, %v4067, %v3810
      %v4101 = vsel %vm4099, %v4068, %v3812
      %v4102 = vsel %vm4099, %v4069, %v3814
      %v4103 = vsel %vm4099, %v4070, %v3816
      %v4104 = vsel %vm4099, %v4071, %v3818
      %v4105 = vsel %vm4099, %v4072, %v3820
      %v4106 = vsel %vm4099, %v4073, %v3822
      %v4107 = vsel %vm4099, %v4074, %v3824
      %v4108 = vsel %vm4099, %v4075, %v3826
      %v4109 = vsel %vm4099, %v4076, %v3828
      %v4110 = vsel %vm4099, %v4077, %v3830
      %v4111 = vsel %vm4099, %v4078, %v3832
      %v4112 = vsel %vm4099, %v4079, %v3834
      %v4113 = vsel %vm4099, %v4080, %v3836
      %v4114 = vsel %vm4099, %v4081, %v3838
      %v4115 = vsel %vm4099, %v4082, %v3840
      %v4116 = vsel %vm4099, %v4083, %v3842
      %v4117 = vsel %vm4099, %v4084, %v3844
      %v4118 = vsel %vm4099, %v4085, %v3846
      %v4119 = vsel %vm4099, %v4086, %v3848
      %v4120 = vsel %vm4099, %v4087, %v3850
      %v4121 = vsel %vm4099, %v4088, %v3852
      %v4122 = vsel %vm4099, %v4089, %v3854
      %v4123 = vsel %vm4099, %v4090, %v3856
      %v4124 = vsel %vm4099, %v4091, %v3858
      %v4125 = vsel %vm4099, %v4092, %v3860
      %v4126 = vsel %vm4099, %v4093, %v3862
      %v4127 = vsel %vm4099, %v4094, %v3864
      %v4128 = vsel %vm4099, %v4095, %v3866
      %v4129 = vsel %vm4099, %v4096, %v3868
      %v4130 = vsel %vm4099, %v4097, %v3870
      %v4131 = vsel %vm4099, %v4098, %v3872
      %v4132 = vmul.f32 %v1086, %v4100
      %v4133 = vmul.f32 %v1090, %v4101
      %v4134 = vmul.f32 %v1094, %v4102
      %v4135 = vmul.f32 %v1098, %v4103
      %v4136 = vmul.f32 %v1102, %v4104
      %v4137 = vmul.f32 %v1106, %v4105
      %v4138 = vmul.f32 %v1110, %v4106
      %v4139 = vmul.f32 %v1114, %v4107
      %v4140 = vmul.f32 %v1118, %v4108
      %v4141 = vmul.f32 %v1122, %v4109
      %v4142 = vmul.f32 %v1126, %v4110
      %v4143 = vmul.f32 %v1130, %v4111
      %v4144 = vmul.f32 %v1134, %v4112
      %v4145 = vmul.f32 %v1138, %v4113
      %v4146 = vmul.f32 %v1142, %v4114
      %v4147 = vmul.f32 %v1146, %v4115
      %v4148 = vmul.f32 %v1150, %v4116
      %v4149 = vmul.f32 %v1154, %v4117
      %v4150 = vmul.f32 %v1158, %v4118
      %v4151 = vmul.f32 %v1162, %v4119
      %v4152 = vmul.f32 %v1166, %v4120
      %v4153 = vmul.f32 %v1170, %v4121
      %v4154 = vmul.f32 %v1174, %v4122
      %v4155 = vmul.f32 %v1178, %v4123
      %v4156 = vmul.f32 %v1182, %v4124
      %v4157 = vmul.f32 %v1186, %v4125
      %v4158 = vmul.f32 %v1190, %v4126
      %v4159 = vmul.f32 %v1194, %v4127
      %v4160 = vmul.f32 %v1198, %v4128
      %v4161 = vmul.f32 %v1202, %v4129
      %v4162 = vmul.f32 %v1206, %v4130
      %v4163 = vmul.f32 %v1210, %v4131
      %4164 = vrot.lane.b32.xlu0 %v3169, 120
      %v4165 = vpop.permute.xlu0 %4164
      %4166 = vrot.lane.b32.xlu0 %v3170, 120
      %v4167 = vpop.permute.xlu0 %4166
      %4168 = vrot.lane.b32.xlu0 %v3171, 120
      %v4169 = vpop.permute.xlu0 %4168
      %4170 = vrot.lane.b32.xlu0 %v3172, 120
      %v4171 = vpop.permute.xlu0 %4170
      %4172 = vrot.lane.b32.xlu0 %v3173, 120
      %v4173 = vpop.permute.xlu0 %4172
      %4174 = vrot.lane.b32.xlu0 %v3174, 120
      %v4175 = vpop.permute.xlu0 %4174
      %4176 = vrot.lane.b32.xlu0 %v3175, 120
      %v4177 = vpop.permute.xlu0 %4176
      %4178 = vrot.lane.b32.xlu0 %v3176, 120
      %v4179 = vpop.permute.xlu0 %4178
      %4180 = vrot.lane.b32.xlu0 %v3177, 120
      %v4181 = vpop.permute.xlu0 %4180
      %4182 = vrot.lane.b32.xlu0 %v3178, 120
      %v4183 = vpop.permute.xlu0 %4182
      %4184 = vrot.lane.b32.xlu0 %v3179, 120
      %v4185 = vpop.permute.xlu0 %4184
      %4186 = vrot.lane.b32.xlu0 %v3180, 120
      %v4187 = vpop.permute.xlu0 %4186
      %4188 = vrot.lane.b32.xlu0 %v3181, 120
      %v4189 = vpop.permute.xlu0 %4188
      %4190 = vrot.lane.b32.xlu0 %v3182, 120
      %v4191 = vpop.permute.xlu0 %4190
      %4192 = vrot.lane.b32.xlu0 %v3183, 120
      %v4193 = vpop.permute.xlu0 %4192
      %4194 = vrot.lane.b32.xlu0 %v3184, 120
      %v4195 = vpop.permute.xlu0 %4194
      %4196 = vrot.lane.b32.xlu0 %v3185, 120
      %v4197 = vpop.permute.xlu0 %4196
      %4198 = vrot.lane.b32.xlu0 %v3186, 120
      %v4199 = vpop.permute.xlu0 %4198
      %4200 = vrot.lane.b32.xlu0 %v3187, 120
      %v4201 = vpop.permute.xlu0 %4200
      %4202 = vrot.lane.b32.xlu0 %v3188, 120
      %v4203 = vpop.permute.xlu0 %4202
      %4204 = vrot.lane.b32.xlu0 %v3189, 120
      %v4205 = vpop.permute.xlu0 %4204
      %4206 = vrot.lane.b32.xlu0 %v3190, 120
      %v4207 = vpop.permute.xlu0 %4206
      %4208 = vrot.lane.b32.xlu0 %v3191, 120
      %v4209 = vpop.permute.xlu0 %4208
      %4210 = vrot.lane.b32.xlu0 %v3192, 120
      %v4211 = vpop.permute.xlu0 %4210
      %4212 = vrot.lane.b32.xlu0 %v3193, 120
      %v4213 = vpop.permute.xlu0 %4212
      %4214 = vrot.lane.b32.xlu0 %v3194, 120
      %v4215 = vpop.permute.xlu0 %4214
      %4216 = vrot.lane.b32.xlu0 %v3195, 120
      %v4217 = vpop.permute.xlu0 %4216
      %4218 = vrot.lane.b32.xlu0 %v3196, 120
      %v4219 = vpop.permute.xlu0 %4218
      %4220 = vrot.lane.b32.xlu0 %v3197, 120
      %v4221 = vpop.permute.xlu0 %4220
      %4222 = vrot.lane.b32.xlu0 %v3198, 120
      %v4223 = vpop.permute.xlu0 %4222
      %4224 = vrot.lane.b32.xlu0 %v3199, 120
      %v4225 = vpop.permute.xlu0 %4224
      %4226 = vrot.lane.b32.xlu0 %v3200, 120
      %v4227 = vpop.permute.xlu0 %4226
      %v4260 = vsel %vm1534, %v4165, %v3169
      %v4261 = vsel %vm1534, %v4167, %v3170
      %v4262 = vsel %vm1534, %v4169, %v3171
      %v4263 = vsel %vm1534, %v4171, %v3172
      %v4264 = vsel %vm1534, %v4173, %v3173
      %v4265 = vsel %vm1534, %v4175, %v3174
      %v4266 = vsel %vm1534, %v4177, %v3175
      %v4267 = vsel %vm1534, %v4179, %v3176
      %v4268 = vsel %vm1534, %v4181, %v3177
      %v4269 = vsel %vm1534, %v4183, %v3178
      %v4270 = vsel %vm1534, %v4185, %v3179
      %v4271 = vsel %vm1534, %v4187, %v3180
      %v4272 = vsel %vm1534, %v4189, %v3181
      %v4273 = vsel %vm1534, %v4191, %v3182
      %v4274 = vsel %vm1534, %v4193, %v3183
      %v4275 = vsel %vm1534, %v4195, %v3184
      %v4276 = vsel %vm1534, %v4197, %v3185
      %v4277 = vsel %vm1534, %v4199, %v3186
      %v4278 = vsel %vm1534, %v4201, %v3187
      %v4279 = vsel %vm1534, %v4203, %v3188
      %v4280 = vsel %vm1534, %v4205, %v3189
      %v4281 = vsel %vm1534, %v4207, %v3190
      %v4282 = vsel %vm1534, %v4209, %v3191
      %v4283 = vsel %vm1534, %v4211, %v3192
      %v4284 = vsel %vm1534, %v4213, %v3193
      %v4285 = vsel %vm1534, %v4215, %v3194
      %v4286 = vsel %vm1534, %v4217, %v3195
      %v4287 = vsel %vm1534, %v4219, %v3196
      %v4288 = vsel %vm1534, %v4221, %v3197
      %v4289 = vsel %vm1534, %v4223, %v3198
      %v4290 = vsel %vm1534, %v4225, %v3199
      %v4291 = vsel %vm1534, %v4227, %v3200
      %v4292 = vsel %vm1567, %v4260, %v3234
      %v4293 = vsel %vm1567, %v4261, %v3236
      %v4294 = vsel %vm1567, %v4262, %v3238
      %v4295 = vsel %vm1567, %v4263, %v3240
      %v4296 = vsel %vm1567, %v4264, %v3242
      %v4297 = vsel %vm1567, %v4265, %v3244
      %v4298 = vsel %vm1567, %v4266, %v3246
      %v4299 = vsel %vm1567, %v4267, %v3248
      %v4300 = vsel %vm1567, %v4268, %v3250
      %v4301 = vsel %vm1567, %v4269, %v3252
      %v4302 = vsel %vm1567, %v4270, %v3254
      %v4303 = vsel %vm1567, %v4271, %v3256
      %v4304 = vsel %vm1567, %v4272, %v3258
      %v4305 = vsel %vm1567, %v4273, %v3260
      %v4306 = vsel %vm1567, %v4274, %v3262
      %v4307 = vsel %vm1567, %v4275, %v3264
      %v4308 = vsel %vm1567, %v4276, %v3266
      %v4309 = vsel %vm1567, %v4277, %v3268
      %v4310 = vsel %vm1567, %v4278, %v3270
      %v4311 = vsel %vm1567, %v4279, %v3272
      %v4312 = vsel %vm1567, %v4280, %v3274
      %v4313 = vsel %vm1567, %v4281, %v3276
      %v4314 = vsel %vm1567, %v4282, %v3278
      %v4315 = vsel %vm1567, %v4283, %v3280
      %v4316 = vsel %vm1567, %v4284, %v3282
      %v4317 = vsel %vm1567, %v4285, %v3284
      %v4318 = vsel %vm1567, %v4286, %v3286
      %v4319 = vsel %vm1567, %v4287, %v3288
      %v4320 = vsel %vm1567, %v4288, %v3290
      %v4321 = vsel %vm1567, %v4289, %v3292
      %v4322 = vsel %vm1567, %v4290, %v3294
      %v4323 = vsel %vm1567, %v4291, %v3296
      %v4324 = vsel %vm1600, %v4292, %v3330
      %v4325 = vsel %vm1600, %v4293, %v3332
      %v4326 = vsel %vm1600, %v4294, %v3334
      %v4327 = vsel %vm1600, %v4295, %v3336
      %v4328 = vsel %vm1600, %v4296, %v3338
      %v4329 = vsel %vm1600, %v4297, %v3340
      %v4330 = vsel %vm1600, %v4298, %v3342
      %v4331 = vsel %vm1600, %v4299, %v3344
      %v4332 = vsel %vm1600, %v4300, %v3346
      %v4333 = vsel %vm1600, %v4301, %v3348
      %v4334 = vsel %vm1600, %v4302, %v3350
      %v4335 = vsel %vm1600, %v4303, %v3352
      %v4336 = vsel %vm1600, %v4304, %v3354
      %v4337 = vsel %vm1600, %v4305, %v3356
      %v4338 = vsel %vm1600, %v4306, %v3358
      %v4339 = vsel %vm1600, %v4307, %v3360
      %v4340 = vsel %vm1600, %v4308, %v3362
      %v4341 = vsel %vm1600, %v4309, %v3364
      %v4342 = vsel %vm1600, %v4310, %v3366
      %v4343 = vsel %vm1600, %v4311, %v3368
      %v4344 = vsel %vm1600, %v4312, %v3370
      %v4345 = vsel %vm1600, %v4313, %v3372
      %v4346 = vsel %vm1600, %v4314, %v3374
      %v4347 = vsel %vm1600, %v4315, %v3376
      %v4348 = vsel %vm1600, %v4316, %v3378
      %v4349 = vsel %vm1600, %v4317, %v3380
      %v4350 = vsel %vm1600, %v4318, %v3382
      %v4351 = vsel %vm1600, %v4319, %v3384
      %v4352 = vsel %vm1600, %v4320, %v3386
      %v4353 = vsel %vm1600, %v4321, %v3388
      %v4354 = vsel %vm1600, %v4322, %v3390
      %v4355 = vsel %vm1600, %v4323, %v3392
      %v4356 = vsel %vm537, %v4324, %v3426
      %v4357 = vsel %vm537, %v4325, %v3428
      %v4358 = vsel %vm537, %v4326, %v3430
      %v4359 = vsel %vm537, %v4327, %v3432
      %v4360 = vsel %vm537, %v4328, %v3434
      %v4361 = vsel %vm537, %v4329, %v3436
      %v4362 = vsel %vm537, %v4330, %v3438
      %v4363 = vsel %vm537, %v4331, %v3440
      %v4364 = vsel %vm537, %v4332, %v3442
      %v4365 = vsel %vm537, %v4333, %v3444
      %v4366 = vsel %vm537, %v4334, %v3446
      %v4367 = vsel %vm537, %v4335, %v3448
      %v4368 = vsel %vm537, %v4336, %v3450
      %v4369 = vsel %vm537, %v4337, %v3452
      %v4370 = vsel %vm537, %v4338, %v3454
      %v4371 = vsel %vm537, %v4339, %v3456
      %v4372 = vsel %vm537, %v4340, %v3458
      %v4373 = vsel %vm537, %v4341, %v3460
      %v4374 = vsel %vm537, %v4342, %v3462
      %v4375 = vsel %vm537, %v4343, %v3464
      %v4376 = vsel %vm537, %v4344, %v3466
      %v4377 = vsel %vm537, %v4345, %v3468
      %v4378 = vsel %vm537, %v4346, %v3470
      %v4379 = vsel %vm537, %v4347, %v3472
      %v4380 = vsel %vm537, %v4348, %v3474
      %v4381 = vsel %vm537, %v4349, %v3476
      %v4382 = vsel %vm537, %v4350, %v3478
      %v4383 = vsel %vm537, %v4351, %v3480
      %v4384 = vsel %vm537, %v4352, %v3482
      %v4385 = vsel %vm537, %v4353, %v3484
      %v4386 = vsel %vm537, %v4354, %v3486
      %v4387 = vsel %vm537, %v4355, %v3488
      %v4388 = vsel %vm4033, %v4356, %v3522
      %v4389 = vsel %vm4033, %v4357, %v3524
      %v4390 = vsel %vm4033, %v4358, %v3526
      %v4391 = vsel %vm4033, %v4359, %v3528
      %v4392 = vsel %vm4033, %v4360, %v3530
      %v4393 = vsel %vm4033, %v4361, %v3532
      %v4394 = vsel %vm4033, %v4362, %v3534
      %v4395 = vsel %vm4033, %v4363, %v3536
      %v4396 = vsel %vm4033, %v4364, %v3538
      %v4397 = vsel %vm4033, %v4365, %v3540
      %v4398 = vsel %vm4033, %v4366, %v3542
      %v4399 = vsel %vm4033, %v4367, %v3544
      %v4400 = vsel %vm4033, %v4368, %v3546
      %v4401 = vsel %vm4033, %v4369, %v3548
      %v4402 = vsel %vm4033, %v4370, %v3550
      %v4403 = vsel %vm4033, %v4371, %v3552
      %v4404 = vsel %vm4033, %v4372, %v3554
      %v4405 = vsel %vm4033, %v4373, %v3556
      %v4406 = vsel %vm4033, %v4374, %v3558
      %v4407 = vsel %vm4033, %v4375, %v3560
      %v4408 = vsel %vm4033, %v4376, %v3562
      %v4409 = vsel %vm4033, %v4377, %v3564
      %v4410 = vsel %vm4033, %v4378, %v3566
      %v4411 = vsel %vm4033, %v4379, %v3568
      %v4412 = vsel %vm4033, %v4380, %v3570
      %v4413 = vsel %vm4033, %v4381, %v3572
      %v4414 = vsel %vm4033, %v4382, %v3574
      %v4415 = vsel %vm4033, %v4383, %v3576
      %v4416 = vsel %vm4033, %v4384, %v3578
      %v4417 = vsel %vm4033, %v4385, %v3580
      %v4418 = vsel %vm4033, %v4386, %v3582
      %v4419 = vsel %vm4033, %v4387, %v3584
      %v4420 = vsel %vm4066, %v4388, %v3618
      %v4421 = vsel %vm4066, %v4389, %v3620
      %v4422 = vsel %vm4066, %v4390, %v3622
      %v4423 = vsel %vm4066, %v4391, %v3624
      %v4424 = vsel %vm4066, %v4392, %v3626
      %v4425 = vsel %vm4066, %v4393, %v3628
      %v4426 = vsel %vm4066, %v4394, %v3630
      %v4427 = vsel %vm4066, %v4395, %v3632
      %v4428 = vsel %vm4066, %v4396, %v3634
      %v4429 = vsel %vm4066, %v4397, %v3636
      %v4430 = vsel %vm4066, %v4398, %v3638
      %v4431 = vsel %vm4066, %v4399, %v3640
      %v4432 = vsel %vm4066, %v4400, %v3642
      %v4433 = vsel %vm4066, %v4401, %v3644
      %v4434 = vsel %vm4066, %v4402, %v3646
      %v4435 = vsel %vm4066, %v4403, %v3648
      %v4436 = vsel %vm4066, %v4404, %v3650
      %v4437 = vsel %vm4066, %v4405, %v3652
      %v4438 = vsel %vm4066, %v4406, %v3654
      %v4439 = vsel %vm4066, %v4407, %v3656
      %v4440 = vsel %vm4066, %v4408, %v3658
      %v4441 = vsel %vm4066, %v4409, %v3660
      %v4442 = vsel %vm4066, %v4410, %v3662
      %v4443 = vsel %vm4066, %v4411, %v3664
      %v4444 = vsel %vm4066, %v4412, %v3666
      %v4445 = vsel %vm4066, %v4413, %v3668
      %v4446 = vsel %vm4066, %v4414, %v3670
      %v4447 = vsel %vm4066, %v4415, %v3672
      %v4448 = vsel %vm4066, %v4416, %v3674
      %v4449 = vsel %vm4066, %v4417, %v3676
      %v4450 = vsel %vm4066, %v4418, %v3678
      %v4451 = vsel %vm4066, %v4419, %v3680
      %v4452 = vsel %vm4099, %v4420, %v3714
      %v4453 = vsel %vm4099, %v4421, %v3716
      %v4454 = vsel %vm4099, %v4422, %v3718
      %v4455 = vsel %vm4099, %v4423, %v3720
      %v4456 = vsel %vm4099, %v4424, %v3722
      %v4457 = vsel %vm4099, %v4425, %v3724
      %v4458 = vsel %vm4099, %v4426, %v3726
      %v4459 = vsel %vm4099, %v4427, %v3728
      %v4460 = vsel %vm4099, %v4428, %v3730
      %v4461 = vsel %vm4099, %v4429, %v3732
      %v4462 = vsel %vm4099, %v4430, %v3734
      %v4463 = vsel %vm4099, %v4431, %v3736
      %v4464 = vsel %vm4099, %v4432, %v3738
      %v4465 = vsel %vm4099, %v4433, %v3740
      %v4466 = vsel %vm4099, %v4434, %v3742
      %v4467 = vsel %vm4099, %v4435, %v3744
      %v4468 = vsel %vm4099, %v4436, %v3746
      %v4469 = vsel %vm4099, %v4437, %v3748
      %v4470 = vsel %vm4099, %v4438, %v3750
      %v4471 = vsel %vm4099, %v4439, %v3752
      %v4472 = vsel %vm4099, %v4440, %v3754
      %v4473 = vsel %vm4099, %v4441, %v3756
      %v4474 = vsel %vm4099, %v4442, %v3758
      %v4475 = vsel %vm4099, %v4443, %v3760
      %v4476 = vsel %vm4099, %v4444, %v3762
      %v4477 = vsel %vm4099, %v4445, %v3764
      %v4478 = vsel %vm4099, %v4446, %v3766
      %v4479 = vsel %vm4099, %v4447, %v3768
      %v4480 = vsel %vm4099, %v4448, %v3770
      %v4481 = vsel %vm4099, %v4449, %v3772
      %v4482 = vsel %vm4099, %v4450, %v3774
      %v4483 = vsel %vm4099, %v4451, %v3776
      %4516 = vrot.lane.b32.xlu0 %v4452, 64
      %v4517 = vpop.permute.xlu0 %4516
      %4518 = vrot.lane.b32.xlu0 %v4453, 64
      %v4519 = vpop.permute.xlu0 %4518
      %4520 = vrot.lane.b32.xlu0 %v4454, 64
      %v4521 = vpop.permute.xlu0 %4520
      %4522 = vrot.lane.b32.xlu0 %v4455, 64
      %v4523 = vpop.permute.xlu0 %4522
      %4524 = vrot.lane.b32.xlu0 %v4456, 64
      %v4525 = vpop.permute.xlu0 %4524
      %4526 = vrot.lane.b32.xlu0 %v4457, 64
      %v4527 = vpop.permute.xlu0 %4526
      %4528 = vrot.lane.b32.xlu0 %v4458, 64
      %v4529 = vpop.permute.xlu0 %4528
      %4530 = vrot.lane.b32.xlu0 %v4459, 64
      %v4531 = vpop.permute.xlu0 %4530
      %4532 = vrot.lane.b32.xlu0 %v4460, 64
      %v4533 = vpop.permute.xlu0 %4532
      %4534 = vrot.lane.b32.xlu0 %v4461, 64
      %v4535 = vpop.permute.xlu0 %4534
      %4536 = vrot.lane.b32.xlu0 %v4462, 64
      %v4537 = vpop.permute.xlu0 %4536
      %4538 = vrot.lane.b32.xlu0 %v4463, 64
      %v4539 = vpop.permute.xlu0 %4538
      %4540 = vrot.lane.b32.xlu0 %v4464, 64
      %v4541 = vpop.permute.xlu0 %4540
      %4542 = vrot.lane.b32.xlu0 %v4465, 64
      %v4543 = vpop.permute.xlu0 %4542
      %4544 = vrot.lane.b32.xlu0 %v4466, 64
      %v4545 = vpop.permute.xlu0 %4544
      %4546 = vrot.lane.b32.xlu0 %v4467, 64
      %v4547 = vpop.permute.xlu0 %4546
      %4548 = vrot.lane.b32.xlu0 %v4468, 64
      %v4549 = vpop.permute.xlu0 %4548
      %4550 = vrot.lane.b32.xlu0 %v4469, 64
      %v4551 = vpop.permute.xlu0 %4550
      %4552 = vrot.lane.b32.xlu0 %v4470, 64
      %v4553 = vpop.permute.xlu0 %4552
      %4554 = vrot.lane.b32.xlu0 %v4471, 64
      %v4555 = vpop.permute.xlu0 %4554
      %4556 = vrot.lane.b32.xlu0 %v4472, 64
      %v4557 = vpop.permute.xlu0 %4556
      %4558 = vrot.lane.b32.xlu0 %v4473, 64
      %v4559 = vpop.permute.xlu0 %4558
      %4560 = vrot.lane.b32.xlu0 %v4474, 64
      %v4561 = vpop.permute.xlu0 %4560
      %4562 = vrot.lane.b32.xlu0 %v4475, 64
      %v4563 = vpop.permute.xlu0 %4562
      %4564 = vrot.lane.b32.xlu0 %v4476, 64
      %v4565 = vpop.permute.xlu0 %4564
      %4566 = vrot.lane.b32.xlu0 %v4477, 64
      %v4567 = vpop.permute.xlu0 %4566
      %4568 = vrot.lane.b32.xlu0 %v4478, 64
      %v4569 = vpop.permute.xlu0 %4568
      %4570 = vrot.lane.b32.xlu0 %v4479, 64
      %v4571 = vpop.permute.xlu0 %4570
      %4572 = vrot.lane.b32.xlu0 %v4480, 64
      %v4573 = vpop.permute.xlu0 %4572
      %4574 = vrot.lane.b32.xlu0 %v4481, 64
      %v4575 = vpop.permute.xlu0 %4574
      %4576 = vrot.lane.b32.xlu0 %v4482, 64
      %v4577 = vpop.permute.xlu0 %4576
      %4578 = vrot.lane.b32.xlu0 %v4483, 64
      %v4579 = vpop.permute.xlu0 %4578
      %v4612 = vmul.f32 %v1086, %v4517
      %v4613 = vmul.f32 %v1090, %v4519
      %v4614 = vmul.f32 %v1094, %v4521
      %v4615 = vmul.f32 %v1098, %v4523
      %v4616 = vmul.f32 %v1102, %v4525
      %v4617 = vmul.f32 %v1106, %v4527
      %v4618 = vmul.f32 %v1110, %v4529
      %v4619 = vmul.f32 %v1114, %v4531
      %v4620 = vmul.f32 %v1118, %v4533
      %v4621 = vmul.f32 %v1122, %v4535
      %v4622 = vmul.f32 %v1126, %v4537
      %v4623 = vmul.f32 %v1130, %v4539
      %v4624 = vmul.f32 %v1134, %v4541
      %v4625 = vmul.f32 %v1138, %v4543
      %v4626 = vmul.f32 %v1142, %v4545
      %v4627 = vmul.f32 %v1146, %v4547
      %v4628 = vmul.f32 %v1150, %v4549
      %v4629 = vmul.f32 %v1154, %v4551
      %v4630 = vmul.f32 %v1158, %v4553
      %v4631 = vmul.f32 %v1162, %v4555
      %v4632 = vmul.f32 %v1166, %v4557
      %v4633 = vmul.f32 %v1170, %v4559
      %v4634 = vmul.f32 %v1174, %v4561
      %v4635 = vmul.f32 %v1178, %v4563
      %v4636 = vmul.f32 %v1182, %v4565
      %v4637 = vmul.f32 %v1186, %v4567
      %v4638 = vmul.f32 %v1190, %v4569
      %v4639 = vmul.f32 %v1194, %v4571
      %v4640 = vmul.f32 %v1198, %v4573
      %v4641 = vmul.f32 %v1202, %v4575
      %v4642 = vmul.f32 %v1206, %v4577
      %v4643 = vmul.f32 %v1210, %v4579
      %4676 = vrot.lane.b32.xlu0 %v4612, 64
      %v4677 = vpop.permute.xlu0 %4676
      %4678 = vrot.lane.b32.xlu0 %v4613, 64
      %v4679 = vpop.permute.xlu0 %4678
      %4680 = vrot.lane.b32.xlu0 %v4614, 64
      %v4681 = vpop.permute.xlu0 %4680
      %4682 = vrot.lane.b32.xlu0 %v4615, 64
      %v4683 = vpop.permute.xlu0 %4682
      %4684 = vrot.lane.b32.xlu0 %v4616, 64
      %v4685 = vpop.permute.xlu0 %4684
      %4686 = vrot.lane.b32.xlu0 %v4617, 64
      %v4687 = vpop.permute.xlu0 %4686
      %4688 = vrot.lane.b32.xlu0 %v4618, 64
      %v4689 = vpop.permute.xlu0 %4688
      %4690 = vrot.lane.b32.xlu0 %v4619, 64
      %v4691 = vpop.permute.xlu0 %4690
      %4692 = vrot.lane.b32.xlu0 %v4620, 64
      %v4693 = vpop.permute.xlu0 %4692
      %4694 = vrot.lane.b32.xlu0 %v4621, 64
      %v4695 = vpop.permute.xlu0 %4694
      %4696 = vrot.lane.b32.xlu0 %v4622, 64
      %v4697 = vpop.permute.xlu0 %4696
      %4698 = vrot.lane.b32.xlu0 %v4623, 64
      %v4699 = vpop.permute.xlu0 %4698
      %4700 = vrot.lane.b32.xlu0 %v4624, 64
      %v4701 = vpop.permute.xlu0 %4700
      %4702 = vrot.lane.b32.xlu0 %v4625, 64
      %v4703 = vpop.permute.xlu0 %4702
      %4704 = vrot.lane.b32.xlu0 %v4626, 64
      %v4705 = vpop.permute.xlu0 %4704
      %4706 = vrot.lane.b32.xlu0 %v4627, 64
      %v4707 = vpop.permute.xlu0 %4706
      %4708 = vrot.lane.b32.xlu0 %v4628, 64
      %v4709 = vpop.permute.xlu0 %4708
      %4710 = vrot.lane.b32.xlu0 %v4629, 64
      %v4711 = vpop.permute.xlu0 %4710
      %4712 = vrot.lane.b32.xlu0 %v4630, 64
      %v4713 = vpop.permute.xlu0 %4712
      %4714 = vrot.lane.b32.xlu0 %v4631, 64
      %v4715 = vpop.permute.xlu0 %4714
      %4716 = vrot.lane.b32.xlu0 %v4632, 64
      %v4717 = vpop.permute.xlu0 %4716
      %4718 = vrot.lane.b32.xlu0 %v4633, 64
      %v4719 = vpop.permute.xlu0 %4718
      %4720 = vrot.lane.b32.xlu0 %v4634, 64
      %v4721 = vpop.permute.xlu0 %4720
      %4722 = vrot.lane.b32.xlu0 %v4635, 64
      %v4723 = vpop.permute.xlu0 %4722
      %4724 = vrot.lane.b32.xlu0 %v4636, 64
      %v4725 = vpop.permute.xlu0 %4724
      %4726 = vrot.lane.b32.xlu0 %v4637, 64
      %v4727 = vpop.permute.xlu0 %4726
      %4728 = vrot.lane.b32.xlu0 %v4638, 64
      %v4729 = vpop.permute.xlu0 %4728
      %4730 = vrot.lane.b32.xlu0 %v4639, 64
      %v4731 = vpop.permute.xlu0 %4730
      %4732 = vrot.lane.b32.xlu0 %v4640, 64
      %v4733 = vpop.permute.xlu0 %4732
      %4734 = vrot.lane.b32.xlu0 %v4641, 64
      %v4735 = vpop.permute.xlu0 %4734
      %4736 = vrot.lane.b32.xlu0 %v4642, 64
      %v4737 = vpop.permute.xlu0 %4736
      %4738 = vrot.lane.b32.xlu0 %v4643, 64
      %v4739 = vpop.permute.xlu0 %4738
      %v4772 = vadd.f32 %v4132, %v4677
      %v4773 = vadd.f32 %v4133, %v4679
      %v4774 = vadd.f32 %v4134, %v4681
      %v4775 = vadd.f32 %v4135, %v4683
      %v4776 = vadd.f32 %v4136, %v4685
      %v4777 = vadd.f32 %v4137, %v4687
      %v4778 = vadd.f32 %v4138, %v4689
      %v4779 = vadd.f32 %v4139, %v4691
      %v4780 = vadd.f32 %v4140, %v4693
      %v4781 = vadd.f32 %v4141, %v4695
      %v4782 = vadd.f32 %v4142, %v4697
      %v4783 = vadd.f32 %v4143, %v4699
      %v4784 = vadd.f32 %v4144, %v4701
      %v4785 = vadd.f32 %v4145, %v4703
      %v4786 = vadd.f32 %v4146, %v4705
      %v4787 = vadd.f32 %v4147, %v4707
      %v4788 = vadd.f32 %v4148, %v4709
      %v4789 = vadd.f32 %v4149, %v4711
      %v4790 = vadd.f32 %v4150, %v4713
      %v4791 = vadd.f32 %v4151, %v4715
      %v4792 = vadd.f32 %v4152, %v4717
      %v4793 = vadd.f32 %v4153, %v4719
      %v4794 = vadd.f32 %v4154, %v4721
      %v4795 = vadd.f32 %v4155, %v4723
      %v4796 = vadd.f32 %v4156, %v4725
      %v4797 = vadd.f32 %v4157, %v4727
      %v4798 = vadd.f32 %v4158, %v4729
      %v4799 = vadd.f32 %v4159, %v4731
      %v4800 = vadd.f32 %v4160, %v4733
      %v4801 = vadd.f32 %v4161, %v4735
      %v4802 = vadd.f32 %v4162, %v4737
      %v4803 = vadd.f32 %v4163, %v4739
      %4804 = vrot.lane.b32.xlu0 %v3169, 112
      %v4805 = vpop.permute.xlu0 %4804
      %4806 = vrot.lane.b32.xlu0 %v3170, 112
      %v4807 = vpop.permute.xlu0 %4806
      %4808 = vrot.lane.b32.xlu0 %v3171, 112
      %v4809 = vpop.permute.xlu0 %4808
      %4810 = vrot.lane.b32.xlu0 %v3172, 112
      %v4811 = vpop.permute.xlu0 %4810
      %4812 = vrot.lane.b32.xlu0 %v3173, 112
      %v4813 = vpop.permute.xlu0 %4812
      %4814 = vrot.lane.b32.xlu0 %v3174, 112
      %v4815 = vpop.permute.xlu0 %4814
      %4816 = vrot.lane.b32.xlu0 %v3175, 112
      %v4817 = vpop.permute.xlu0 %4816
      %4818 = vrot.lane.b32.xlu0 %v3176, 112
      %v4819 = vpop.permute.xlu0 %4818
      %4820 = vrot.lane.b32.xlu0 %v3177, 112
      %v4821 = vpop.permute.xlu0 %4820
      %4822 = vrot.lane.b32.xlu0 %v3178, 112
      %v4823 = vpop.permute.xlu0 %4822
      %4824 = vrot.lane.b32.xlu0 %v3179, 112
      %v4825 = vpop.permute.xlu0 %4824
      %4826 = vrot.lane.b32.xlu0 %v3180, 112
      %v4827 = vpop.permute.xlu0 %4826
      %4828 = vrot.lane.b32.xlu0 %v3181, 112
      %v4829 = vpop.permute.xlu0 %4828
      %4830 = vrot.lane.b32.xlu0 %v3182, 112
      %v4831 = vpop.permute.xlu0 %4830
      %4832 = vrot.lane.b32.xlu0 %v3183, 112
      %v4833 = vpop.permute.xlu0 %4832
      %4834 = vrot.lane.b32.xlu0 %v3184, 112
      %v4835 = vpop.permute.xlu0 %4834
      %4836 = vrot.lane.b32.xlu0 %v3185, 112
      %v4837 = vpop.permute.xlu0 %4836
      %4838 = vrot.lane.b32.xlu0 %v3186, 112
      %v4839 = vpop.permute.xlu0 %4838
      %4840 = vrot.lane.b32.xlu0 %v3187, 112
      %v4841 = vpop.permute.xlu0 %4840
      %4842 = vrot.lane.b32.xlu0 %v3188, 112
      %v4843 = vpop.permute.xlu0 %4842
      %4844 = vrot.lane.b32.xlu0 %v3189, 112
      %v4845 = vpop.permute.xlu0 %4844
      %4846 = vrot.lane.b32.xlu0 %v3190, 112
      %v4847 = vpop.permute.xlu0 %4846
      %4848 = vrot.lane.b32.xlu0 %v3191, 112
      %v4849 = vpop.permute.xlu0 %4848
      %4850 = vrot.lane.b32.xlu0 %v3192, 112
      %v4851 = vpop.permute.xlu0 %4850
      %4852 = vrot.lane.b32.xlu0 %v3193, 112
      %v4853 = vpop.permute.xlu0 %4852
      %4854 = vrot.lane.b32.xlu0 %v3194, 112
      %v4855 = vpop.permute.xlu0 %4854
      %4856 = vrot.lane.b32.xlu0 %v3195, 112
      %v4857 = vpop.permute.xlu0 %4856
      %4858 = vrot.lane.b32.xlu0 %v3196, 112
      %v4859 = vpop.permute.xlu0 %4858
      %4860 = vrot.lane.b32.xlu0 %v3197, 112
      %v4861 = vpop.permute.xlu0 %4860
      %4862 = vrot.lane.b32.xlu0 %v3198, 112
      %v4863 = vpop.permute.xlu0 %4862
      %4864 = vrot.lane.b32.xlu0 %v3199, 112
      %v4865 = vpop.permute.xlu0 %4864
      %4866 = vrot.lane.b32.xlu0 %v3200, 112
      %v4867 = vpop.permute.xlu0 %4866
      %v4900 = vsel %vm1534, %v4805, %v4165
      %v4901 = vsel %vm1534, %v4807, %v4167
      %v4902 = vsel %vm1534, %v4809, %v4169
      %v4903 = vsel %vm1534, %v4811, %v4171
      %v4904 = vsel %vm1534, %v4813, %v4173
      %v4905 = vsel %vm1534, %v4815, %v4175
      %v4906 = vsel %vm1534, %v4817, %v4177
      %v4907 = vsel %vm1534, %v4819, %v4179
      %v4908 = vsel %vm1534, %v4821, %v4181
      %v4909 = vsel %vm1534, %v4823, %v4183
      %v4910 = vsel %vm1534, %v4825, %v4185
      %v4911 = vsel %vm1534, %v4827, %v4187
      %v4912 = vsel %vm1534, %v4829, %v4189
      %v4913 = vsel %vm1534, %v4831, %v4191
      %v4914 = vsel %vm1534, %v4833, %v4193
      %v4915 = vsel %vm1534, %v4835, %v4195
      %v4916 = vsel %vm1534, %v4837, %v4197
      %v4917 = vsel %vm1534, %v4839, %v4199
      %v4918 = vsel %vm1534, %v4841, %v4201
      %v4919 = vsel %vm1534, %v4843, %v4203
      %v4920 = vsel %vm1534, %v4845, %v4205
      %v4921 = vsel %vm1534, %v4847, %v4207
      %v4922 = vsel %vm1534, %v4849, %v4209
      %v4923 = vsel %vm1534, %v4851, %v4211
      %v4924 = vsel %vm1534, %v4853, %v4213
      %v4925 = vsel %vm1534, %v4855, %v4215
      %v4926 = vsel %vm1534, %v4857, %v4217
      %v4927 = vsel %vm1534, %v4859, %v4219
      %v4928 = vsel %vm1534, %v4861, %v4221
      %v4929 = vsel %vm1534, %v4863, %v4223
      %v4930 = vsel %vm1534, %v4865, %v4225
      %v4931 = vsel %vm1534, %v4867, %v4227
      %v4932 = vsel %vm1567, %v4900, %v3169
      %v4933 = vsel %vm1567, %v4901, %v3170
      %v4934 = vsel %vm1567, %v4902, %v3171
      %v4935 = vsel %vm1567, %v4903, %v3172
      %v4936 = vsel %vm1567, %v4904, %v3173
      %v4937 = vsel %vm1567, %v4905, %v3174
      %v4938 = vsel %vm1567, %v4906, %v3175
      %v4939 = vsel %vm1567, %v4907, %v3176
      %v4940 = vsel %vm1567, %v4908, %v3177
      %v4941 = vsel %vm1567, %v4909, %v3178
      %v4942 = vsel %vm1567, %v4910, %v3179
      %v4943 = vsel %vm1567, %v4911, %v3180
      %v4944 = vsel %vm1567, %v4912, %v3181
      %v4945 = vsel %vm1567, %v4913, %v3182
      %v4946 = vsel %vm1567, %v4914, %v3183
      %v4947 = vsel %vm1567, %v4915, %v3184
      %v4948 = vsel %vm1567, %v4916, %v3185
      %v4949 = vsel %vm1567, %v4917, %v3186
      %v4950 = vsel %vm1567, %v4918, %v3187
      %v4951 = vsel %vm1567, %v4919, %v3188
      %v4952 = vsel %vm1567, %v4920, %v3189
      %v4953 = vsel %vm1567, %v4921, %v3190
      %v4954 = vsel %vm1567, %v4922, %v3191
      %v4955 = vsel %vm1567, %v4923, %v3192
      %v4956 = vsel %vm1567, %v4924, %v3193
      %v4957 = vsel %vm1567, %v4925, %v3194
      %v4958 = vsel %vm1567, %v4926, %v3195
      %v4959 = vsel %vm1567, %v4927, %v3196
      %v4960 = vsel %vm1567, %v4928, %v3197
      %v4961 = vsel %vm1567, %v4929, %v3198
      %v4962 = vsel %vm1567, %v4930, %v3199
      %v4963 = vsel %vm1567, %v4931, %v3200
      %v4964 = vsel %vm1600, %v4932, %v3234
      %v4965 = vsel %vm1600, %v4933, %v3236
      %v4966 = vsel %vm1600, %v4934, %v3238
      %v4967 = vsel %vm1600, %v4935, %v3240
      %v4968 = vsel %vm1600, %v4936, %v3242
      %v4969 = vsel %vm1600, %v4937, %v3244
      %v4970 = vsel %vm1600, %v4938, %v3246
      %v4971 = vsel %vm1600, %v4939, %v3248
      %v4972 = vsel %vm1600, %v4940, %v3250
      %v4973 = vsel %vm1600, %v4941, %v3252
      %v4974 = vsel %vm1600, %v4942, %v3254
      %v4975 = vsel %vm1600, %v4943, %v3256
      %v4976 = vsel %vm1600, %v4944, %v3258
      %v4977 = vsel %vm1600, %v4945, %v3260
      %v4978 = vsel %vm1600, %v4946, %v3262
      %v4979 = vsel %vm1600, %v4947, %v3264
      %v4980 = vsel %vm1600, %v4948, %v3266
      %v4981 = vsel %vm1600, %v4949, %v3268
      %v4982 = vsel %vm1600, %v4950, %v3270
      %v4983 = vsel %vm1600, %v4951, %v3272
      %v4984 = vsel %vm1600, %v4952, %v3274
      %v4985 = vsel %vm1600, %v4953, %v3276
      %v4986 = vsel %vm1600, %v4954, %v3278
      %v4987 = vsel %vm1600, %v4955, %v3280
      %v4988 = vsel %vm1600, %v4956, %v3282
      %v4989 = vsel %vm1600, %v4957, %v3284
      %v4990 = vsel %vm1600, %v4958, %v3286
      %v4991 = vsel %vm1600, %v4959, %v3288
      %v4992 = vsel %vm1600, %v4960, %v3290
      %v4993 = vsel %vm1600, %v4961, %v3292
      %v4994 = vsel %vm1600, %v4962, %v3294
      %v4995 = vsel %vm1600, %v4963, %v3296
      %v4996 = vsel %vm537, %v4964, %v3330
      %v4997 = vsel %vm537, %v4965, %v3332
      %v4998 = vsel %vm537, %v4966, %v3334
      %v4999 = vsel %vm537, %v4967, %v3336
      %v5000 = vsel %vm537, %v4968, %v3338
      %v5001 = vsel %vm537, %v4969, %v3340
      %v5002 = vsel %vm537, %v4970, %v3342
      %v5003 = vsel %vm537, %v4971, %v3344
      %v5004 = vsel %vm537, %v4972, %v3346
      %v5005 = vsel %vm537, %v4973, %v3348
      %v5006 = vsel %vm537, %v4974, %v3350
      %v5007 = vsel %vm537, %v4975, %v3352
      %v5008 = vsel %vm537, %v4976, %v3354
      %v5009 = vsel %vm537, %v4977, %v3356
      %v5010 = vsel %vm537, %v4978, %v3358
      %v5011 = vsel %vm537, %v4979, %v3360
      %v5012 = vsel %vm537, %v4980, %v3362
      %v5013 = vsel %vm537, %v4981, %v3364
      %v5014 = vsel %vm537, %v4982, %v3366
      %v5015 = vsel %vm537, %v4983, %v3368
      %v5016 = vsel %vm537, %v4984, %v3370
      %v5017 = vsel %vm537, %v4985, %v3372
      %v5018 = vsel %vm537, %v4986, %v3374
      %v5019 = vsel %vm537, %v4987, %v3376
      %v5020 = vsel %vm537, %v4988, %v3378
      %v5021 = vsel %vm537, %v4989, %v3380
      %v5022 = vsel %vm537, %v4990, %v3382
      %v5023 = vsel %vm537, %v4991, %v3384
      %v5024 = vsel %vm537, %v4992, %v3386
      %v5025 = vsel %vm537, %v4993, %v3388
      %v5026 = vsel %vm537, %v4994, %v3390
      %v5027 = vsel %vm537, %v4995, %v3392
      %v5028 = vsel %vm4033, %v4996, %v3426
      %v5029 = vsel %vm4033, %v4997, %v3428
      %v5030 = vsel %vm4033, %v4998, %v3430
      %v5031 = vsel %vm4033, %v4999, %v3432
      %v5032 = vsel %vm4033, %v5000, %v3434
      %v5033 = vsel %vm4033, %v5001, %v3436
      %v5034 = vsel %vm4033, %v5002, %v3438
      %v5035 = vsel %vm4033, %v5003, %v3440
      %v5036 = vsel %vm4033, %v5004, %v3442
      %v5037 = vsel %vm4033, %v5005, %v3444
      %v5038 = vsel %vm4033, %v5006, %v3446
      %v5039 = vsel %vm4033, %v5007, %v3448
      %v5040 = vsel %vm4033, %v5008, %v3450
      %v5041 = vsel %vm4033, %v5009, %v3452
      %v5042 = vsel %vm4033, %v5010, %v3454
      %v5043 = vsel %vm4033, %v5011, %v3456
      %v5044 = vsel %vm4033, %v5012, %v3458
      %v5045 = vsel %vm4033, %v5013, %v3460
      %v5046 = vsel %vm4033, %v5014, %v3462
      %v5047 = vsel %vm4033, %v5015, %v3464
      %v5048 = vsel %vm4033, %v5016, %v3466
      %v5049 = vsel %vm4033, %v5017, %v3468
      %v5050 = vsel %vm4033, %v5018, %v3470
      %v5051 = vsel %vm4033, %v5019, %v3472
      %v5052 = vsel %vm4033, %v5020, %v3474
      %v5053 = vsel %vm4033, %v5021, %v3476
      %v5054 = vsel %vm4033, %v5022, %v3478
      %v5055 = vsel %vm4033, %v5023, %v3480
      %v5056 = vsel %vm4033, %v5024, %v3482
      %v5057 = vsel %vm4033, %v5025, %v3484
      %v5058 = vsel %vm4033, %v5026, %v3486
      %v5059 = vsel %vm4033, %v5027, %v3488
      %v5060 = vsel %vm4066, %v5028, %v3522
      %v5061 = vsel %vm4066, %v5029, %v3524
      %v5062 = vsel %vm4066, %v5030, %v3526
      %v5063 = vsel %vm4066, %v5031, %v3528
      %v5064 = vsel %vm4066, %v5032, %v3530
      %v5065 = vsel %vm4066, %v5033, %v3532
      %v5066 = vsel %vm4066, %v5034, %v3534
      %v5067 = vsel %vm4066, %v5035, %v3536
      %v5068 = vsel %vm4066, %v5036, %v3538
      %v5069 = vsel %vm4066, %v5037, %v3540
      %v5070 = vsel %vm4066, %v5038, %v3542
      %v5071 = vsel %vm4066, %v5039, %v3544
      %v5072 = vsel %vm4066, %v5040, %v3546
      %v5073 = vsel %vm4066, %v5041, %v3548
      %v5074 = vsel %vm4066, %v5042, %v3550
      %v5075 = vsel %vm4066, %v5043, %v3552
      %v5076 = vsel %vm4066, %v5044, %v3554
      %v5077 = vsel %vm4066, %v5045, %v3556
      %v5078 = vsel %vm4066, %v5046, %v3558
      %v5079 = vsel %vm4066, %v5047, %v3560
      %v5080 = vsel %vm4066, %v5048, %v3562
      %v5081 = vsel %vm4066, %v5049, %v3564
      %v5082 = vsel %vm4066, %v5050, %v3566
      %v5083 = vsel %vm4066, %v5051, %v3568
      %v5084 = vsel %vm4066, %v5052, %v3570
      %v5085 = vsel %vm4066, %v5053, %v3572
      %v5086 = vsel %vm4066, %v5054, %v3574
      %v5087 = vsel %vm4066, %v5055, %v3576
      %v5088 = vsel %vm4066, %v5056, %v3578
      %v5089 = vsel %vm4066, %v5057, %v3580
      %v5090 = vsel %vm4066, %v5058, %v3582
      %v5091 = vsel %vm4066, %v5059, %v3584
      %v5092 = vsel %vm4099, %v5060, %v3618
      %v5093 = vsel %vm4099, %v5061, %v3620
      %v5094 = vsel %vm4099, %v5062, %v3622
      %v5095 = vsel %vm4099, %v5063, %v3624
      %v5096 = vsel %vm4099, %v5064, %v3626
      %v5097 = vsel %vm4099, %v5065, %v3628
      %v5098 = vsel %vm4099, %v5066, %v3630
      %v5099 = vsel %vm4099, %v5067, %v3632
      %v5100 = vsel %vm4099, %v5068, %v3634
      %v5101 = vsel %vm4099, %v5069, %v3636
      %v5102 = vsel %vm4099, %v5070, %v3638
      %v5103 = vsel %vm4099, %v5071, %v3640
      %v5104 = vsel %vm4099, %v5072, %v3642
      %v5105 = vsel %vm4099, %v5073, %v3644
      %v5106 = vsel %vm4099, %v5074, %v3646
      %v5107 = vsel %vm4099, %v5075, %v3648
      %v5108 = vsel %vm4099, %v5076, %v3650
      %v5109 = vsel %vm4099, %v5077, %v3652
      %v5110 = vsel %vm4099, %v5078, %v3654
      %v5111 = vsel %vm4099, %v5079, %v3656
      %v5112 = vsel %vm4099, %v5080, %v3658
      %v5113 = vsel %vm4099, %v5081, %v3660
      %v5114 = vsel %vm4099, %v5082, %v3662
      %v5115 = vsel %vm4099, %v5083, %v3664
      %v5116 = vsel %vm4099, %v5084, %v3666
      %v5117 = vsel %vm4099, %v5085, %v3668
      %v5118 = vsel %vm4099, %v5086, %v3670
      %v5119 = vsel %vm4099, %v5087, %v3672
      %v5120 = vsel %vm4099, %v5088, %v3674
      %v5121 = vsel %vm4099, %v5089, %v3676
      %v5122 = vsel %vm4099, %v5090, %v3678
      %v5123 = vsel %vm4099, %v5091, %v3680
      %v5124 = vmul.f32 %v1087, %v5092
      %v5125 = vmul.f32 %v1091, %v5093
      %v5126 = vmul.f32 %v1095, %v5094
      %v5127 = vmul.f32 %v1099, %v5095
      %v5128 = vmul.f32 %v1103, %v5096
      %v5129 = vmul.f32 %v1107, %v5097
      %v5130 = vmul.f32 %v1111, %v5098
      %v5131 = vmul.f32 %v1115, %v5099
      %v5132 = vmul.f32 %v1119, %v5100
      %v5133 = vmul.f32 %v1123, %v5101
      %v5134 = vmul.f32 %v1127, %v5102
      %v5135 = vmul.f32 %v1131, %v5103
      %v5136 = vmul.f32 %v1135, %v5104
      %v5137 = vmul.f32 %v1139, %v5105
      %v5138 = vmul.f32 %v1143, %v5106
      %v5139 = vmul.f32 %v1147, %v5107
      %v5140 = vmul.f32 %v1151, %v5108
      %v5141 = vmul.f32 %v1155, %v5109
      %v5142 = vmul.f32 %v1159, %v5110
      %v5143 = vmul.f32 %v1163, %v5111
      %v5144 = vmul.f32 %v1167, %v5112
      %v5145 = vmul.f32 %v1171, %v5113
      %v5146 = vmul.f32 %v1175, %v5114
      %v5147 = vmul.f32 %v1179, %v5115
      %v5148 = vmul.f32 %v1183, %v5116
      %v5149 = vmul.f32 %v1187, %v5117
      %v5150 = vmul.f32 %v1191, %v5118
      %v5151 = vmul.f32 %v1195, %v5119
      %v5152 = vmul.f32 %v1199, %v5120
      %v5153 = vmul.f32 %v1203, %v5121
      %v5154 = vmul.f32 %v1207, %v5122
      %v5155 = vmul.f32 %v1211, %v5123
      %v5156 = vadd.f32 %v4772, %v5124
      %v5157 = vadd.f32 %v4773, %v5125
      %v5158 = vadd.f32 %v4774, %v5126
      %v5159 = vadd.f32 %v4775, %v5127
      %v5160 = vadd.f32 %v4776, %v5128
      %v5161 = vadd.f32 %v4777, %v5129
      %v5162 = vadd.f32 %v4778, %v5130
      %v5163 = vadd.f32 %v4779, %v5131
      %v5164 = vadd.f32 %v4780, %v5132
      %v5165 = vadd.f32 %v4781, %v5133
      %v5166 = vadd.f32 %v4782, %v5134
      %v5167 = vadd.f32 %v4783, %v5135
      %v5168 = vadd.f32 %v4784, %v5136
      %v5169 = vadd.f32 %v4785, %v5137
      %v5170 = vadd.f32 %v4786, %v5138
      %v5171 = vadd.f32 %v4787, %v5139
      %v5172 = vadd.f32 %v4788, %v5140
      %v5173 = vadd.f32 %v4789, %v5141
      %v5174 = vadd.f32 %v4790, %v5142
      %v5175 = vadd.f32 %v4791, %v5143
      %v5176 = vadd.f32 %v4792, %v5144
      %v5177 = vadd.f32 %v4793, %v5145
      %v5178 = vadd.f32 %v4794, %v5146
      %v5179 = vadd.f32 %v4795, %v5147
      %v5180 = vadd.f32 %v4796, %v5148
      %v5181 = vadd.f32 %v4797, %v5149
      %v5182 = vadd.f32 %v4798, %v5150
      %v5183 = vadd.f32 %v4799, %v5151
      %v5184 = vadd.f32 %v4800, %v5152
      %v5185 = vadd.f32 %v4801, %v5153
      %v5186 = vadd.f32 %v4802, %v5154
      %v5187 = vadd.f32 %v4803, %v5155
      %5188 = vrot.lane.b32.xlu0 %v3169, 104
      %v5189 = vpop.permute.xlu0 %5188
      %5190 = vrot.lane.b32.xlu0 %v3170, 104
      %v5191 = vpop.permute.xlu0 %5190
      %5192 = vrot.lane.b32.xlu0 %v3171, 104
      %v5193 = vpop.permute.xlu0 %5192
      %5194 = vrot.lane.b32.xlu0 %v3172, 104
      %v5195 = vpop.permute.xlu0 %5194
      %5196 = vrot.lane.b32.xlu0 %v3173, 104
      %v5197 = vpop.permute.xlu0 %5196
      %5198 = vrot.lane.b32.xlu0 %v3174, 104
      %v5199 = vpop.permute.xlu0 %5198
      %5200 = vrot.lane.b32.xlu0 %v3175, 104
      %v5201 = vpop.permute.xlu0 %5200
      %5202 = vrot.lane.b32.xlu0 %v3176, 104
      %v5203 = vpop.permute.xlu0 %5202
      %5204 = vrot.lane.b32.xlu0 %v3177, 104
      %v5205 = vpop.permute.xlu0 %5204
      %5206 = vrot.lane.b32.xlu0 %v3178, 104
      %v5207 = vpop.permute.xlu0 %5206
      %5208 = vrot.lane.b32.xlu0 %v3179, 104
      %v5209 = vpop.permute.xlu0 %5208
      %5210 = vrot.lane.b32.xlu0 %v3180, 104
      %v5211 = vpop.permute.xlu0 %5210
      %5212 = vrot.lane.b32.xlu0 %v3181, 104
      %v5213 = vpop.permute.xlu0 %5212
      %5214 = vrot.lane.b32.xlu0 %v3182, 104
      %v5215 = vpop.permute.xlu0 %5214
      %5216 = vrot.lane.b32.xlu0 %v3183, 104
      %v5217 = vpop.permute.xlu0 %5216
      %5218 = vrot.lane.b32.xlu0 %v3184, 104
      %v5219 = vpop.permute.xlu0 %5218
      %5220 = vrot.lane.b32.xlu0 %v3185, 104
      %v5221 = vpop.permute.xlu0 %5220
      %5222 = vrot.lane.b32.xlu0 %v3186, 104
      %v5223 = vpop.permute.xlu0 %5222
      %5224 = vrot.lane.b32.xlu0 %v3187, 104
      %v5225 = vpop.permute.xlu0 %5224
      %5226 = vrot.lane.b32.xlu0 %v3188, 104
      %v5227 = vpop.permute.xlu0 %5226
      %5228 = vrot.lane.b32.xlu0 %v3189, 104
      %v5229 = vpop.permute.xlu0 %5228
      %5230 = vrot.lane.b32.xlu0 %v3190, 104
      %v5231 = vpop.permute.xlu0 %5230
      %5232 = vrot.lane.b32.xlu0 %v3191, 104
      %v5233 = vpop.permute.xlu0 %5232
      %5234 = vrot.lane.b32.xlu0 %v3192, 104
      %v5235 = vpop.permute.xlu0 %5234
      %5236 = vrot.lane.b32.xlu0 %v3193, 104
      %v5237 = vpop.permute.xlu0 %5236
      %5238 = vrot.lane.b32.xlu0 %v3194, 104
      %v5239 = vpop.permute.xlu0 %5238
      %5240 = vrot.lane.b32.xlu0 %v3195, 104
      %v5241 = vpop.permute.xlu0 %5240
      %5242 = vrot.lane.b32.xlu0 %v3196, 104
      %v5243 = vpop.permute.xlu0 %5242
      %5244 = vrot.lane.b32.xlu0 %v3197, 104
      %v5245 = vpop.permute.xlu0 %5244
      %5246 = vrot.lane.b32.xlu0 %v3198, 104
      %v5247 = vpop.permute.xlu0 %5246
      %5248 = vrot.lane.b32.xlu0 %v3199, 104
      %v5249 = vpop.permute.xlu0 %5248
      %5250 = vrot.lane.b32.xlu0 %v3200, 104
      %v5251 = vpop.permute.xlu0 %5250
      %v5284 = vsel %vm1534, %v5189, %v4805
      %v5285 = vsel %vm1534, %v5191, %v4807
      %v5286 = vsel %vm1534, %v5193, %v4809
      %v5287 = vsel %vm1534, %v5195, %v4811
      %v5288 = vsel %vm1534, %v5197, %v4813
      %v5289 = vsel %vm1534, %v5199, %v4815
      %v5290 = vsel %vm1534, %v5201, %v4817
      %v5291 = vsel %vm1534, %v5203, %v4819
      %v5292 = vsel %vm1534, %v5205, %v4821
      %v5293 = vsel %vm1534, %v5207, %v4823
      %v5294 = vsel %vm1534, %v5209, %v4825
      %v5295 = vsel %vm1534, %v5211, %v4827
      %v5296 = vsel %vm1534, %v5213, %v4829
      %v5297 = vsel %vm1534, %v5215, %v4831
      %v5298 = vsel %vm1534, %v5217, %v4833
      %v5299 = vsel %vm1534, %v5219, %v4835
      %v5300 = vsel %vm1534, %v5221, %v4837
      %v5301 = vsel %vm1534, %v5223, %v4839
      %v5302 = vsel %vm1534, %v5225, %v4841
      %v5303 = vsel %vm1534, %v5227, %v4843
      %v5304 = vsel %vm1534, %v5229, %v4845
      %v5305 = vsel %vm1534, %v5231, %v4847
      %v5306 = vsel %vm1534, %v5233, %v4849
      %v5307 = vsel %vm1534, %v5235, %v4851
      %v5308 = vsel %vm1534, %v5237, %v4853
      %v5309 = vsel %vm1534, %v5239, %v4855
      %v5310 = vsel %vm1534, %v5241, %v4857
      %v5311 = vsel %vm1534, %v5243, %v4859
      %v5312 = vsel %vm1534, %v5245, %v4861
      %v5313 = vsel %vm1534, %v5247, %v4863
      %v5314 = vsel %vm1534, %v5249, %v4865
      %v5315 = vsel %vm1534, %v5251, %v4867
      %v5316 = vsel %vm1567, %v5284, %v4165
      %v5317 = vsel %vm1567, %v5285, %v4167
      %v5318 = vsel %vm1567, %v5286, %v4169
      %v5319 = vsel %vm1567, %v5287, %v4171
      %v5320 = vsel %vm1567, %v5288, %v4173
      %v5321 = vsel %vm1567, %v5289, %v4175
      %v5322 = vsel %vm1567, %v5290, %v4177
      %v5323 = vsel %vm1567, %v5291, %v4179
      %v5324 = vsel %vm1567, %v5292, %v4181
      %v5325 = vsel %vm1567, %v5293, %v4183
      %v5326 = vsel %vm1567, %v5294, %v4185
      %v5327 = vsel %vm1567, %v5295, %v4187
      %v5328 = vsel %vm1567, %v5296, %v4189
      %v5329 = vsel %vm1567, %v5297, %v4191
      %v5330 = vsel %vm1567, %v5298, %v4193
      %v5331 = vsel %vm1567, %v5299, %v4195
      %v5332 = vsel %vm1567, %v5300, %v4197
      %v5333 = vsel %vm1567, %v5301, %v4199
      %v5334 = vsel %vm1567, %v5302, %v4201
      %v5335 = vsel %vm1567, %v5303, %v4203
      %v5336 = vsel %vm1567, %v5304, %v4205
      %v5337 = vsel %vm1567, %v5305, %v4207
      %v5338 = vsel %vm1567, %v5306, %v4209
      %v5339 = vsel %vm1567, %v5307, %v4211
      %v5340 = vsel %vm1567, %v5308, %v4213
      %v5341 = vsel %vm1567, %v5309, %v4215
      %v5342 = vsel %vm1567, %v5310, %v4217
      %v5343 = vsel %vm1567, %v5311, %v4219
      %v5344 = vsel %vm1567, %v5312, %v4221
      %v5345 = vsel %vm1567, %v5313, %v4223
      %v5346 = vsel %vm1567, %v5314, %v4225
      %v5347 = vsel %vm1567, %v5315, %v4227
      %v5348 = vsel %vm1600, %v5316, %v3169
      %v5349 = vsel %vm1600, %v5317, %v3170
      %v5350 = vsel %vm1600, %v5318, %v3171
      %v5351 = vsel %vm1600, %v5319, %v3172
      %v5352 = vsel %vm1600, %v5320, %v3173
      %v5353 = vsel %vm1600, %v5321, %v3174
      %v5354 = vsel %vm1600, %v5322, %v3175
      %v5355 = vsel %vm1600, %v5323, %v3176
      %v5356 = vsel %vm1600, %v5324, %v3177
      %v5357 = vsel %vm1600, %v5325, %v3178
      %v5358 = vsel %vm1600, %v5326, %v3179
      %v5359 = vsel %vm1600, %v5327, %v3180
      %v5360 = vsel %vm1600, %v5328, %v3181
      %v5361 = vsel %vm1600, %v5329, %v3182
      %v5362 = vsel %vm1600, %v5330, %v3183
      %v5363 = vsel %vm1600, %v5331, %v3184
      %v5364 = vsel %vm1600, %v5332, %v3185
      %v5365 = vsel %vm1600, %v5333, %v3186
      %v5366 = vsel %vm1600, %v5334, %v3187
      %v5367 = vsel %vm1600, %v5335, %v3188
      %v5368 = vsel %vm1600, %v5336, %v3189
      %v5369 = vsel %vm1600, %v5337, %v3190
      %v5370 = vsel %vm1600, %v5338, %v3191
      %v5371 = vsel %vm1600, %v5339, %v3192
      %v5372 = vsel %vm1600, %v5340, %v3193
      %v5373 = vsel %vm1600, %v5341, %v3194
      %v5374 = vsel %vm1600, %v5342, %v3195
      %v5375 = vsel %vm1600, %v5343, %v3196
      %v5376 = vsel %vm1600, %v5344, %v3197
      %v5377 = vsel %vm1600, %v5345, %v3198
      %v5378 = vsel %vm1600, %v5346, %v3199
      %v5379 = vsel %vm1600, %v5347, %v3200
      %v5380 = vsel %vm537, %v5348, %v3234
      %v5381 = vsel %vm537, %v5349, %v3236
      %v5382 = vsel %vm537, %v5350, %v3238
      %v5383 = vsel %vm537, %v5351, %v3240
      %v5384 = vsel %vm537, %v5352, %v3242
      %v5385 = vsel %vm537, %v5353, %v3244
      %v5386 = vsel %vm537, %v5354, %v3246
      %v5387 = vsel %vm537, %v5355, %v3248
      %v5388 = vsel %vm537, %v5356, %v3250
      %v5389 = vsel %vm537, %v5357, %v3252
      %v5390 = vsel %vm537, %v5358, %v3254
      %v5391 = vsel %vm537, %v5359, %v3256
      %v5392 = vsel %vm537, %v5360, %v3258
      %v5393 = vsel %vm537, %v5361, %v3260
      %v5394 = vsel %vm537, %v5362, %v3262
      %v5395 = vsel %vm537, %v5363, %v3264
      %v5396 = vsel %vm537, %v5364, %v3266
      %v5397 = vsel %vm537, %v5365, %v3268
      %v5398 = vsel %vm537, %v5366, %v3270
      %v5399 = vsel %vm537, %v5367, %v3272
      %v5400 = vsel %vm537, %v5368, %v3274
      %v5401 = vsel %vm537, %v5369, %v3276
      %v5402 = vsel %vm537, %v5370, %v3278
      %v5403 = vsel %vm537, %v5371, %v3280
      %v5404 = vsel %vm537, %v5372, %v3282
      %v5405 = vsel %vm537, %v5373, %v3284
      %v5406 = vsel %vm537, %v5374, %v3286
      %v5407 = vsel %vm537, %v5375, %v3288
      %v5408 = vsel %vm537, %v5376, %v3290
      %v5409 = vsel %vm537, %v5377, %v3292
      %v5410 = vsel %vm537, %v5378, %v3294
      %v5411 = vsel %vm537, %v5379, %v3296
      %v5412 = vsel %vm4033, %v5380, %v3330
      %v5413 = vsel %vm4033, %v5381, %v3332
      %v5414 = vsel %vm4033, %v5382, %v3334
      %v5415 = vsel %vm4033, %v5383, %v3336
      %v5416 = vsel %vm4033, %v5384, %v3338
      %v5417 = vsel %vm4033, %v5385, %v3340
      %v5418 = vsel %vm4033, %v5386, %v3342
      %v5419 = vsel %vm4033, %v5387, %v3344
      %v5420 = vsel %vm4033, %v5388, %v3346
      %v5421 = vsel %vm4033, %v5389, %v3348
      %v5422 = vsel %vm4033, %v5390, %v3350
      %v5423 = vsel %vm4033, %v5391, %v3352
      %v5424 = vsel %vm4033, %v5392, %v3354
      %v5425 = vsel %vm4033, %v5393, %v3356
      %v5426 = vsel %vm4033, %v5394, %v3358
      %v5427 = vsel %vm4033, %v5395, %v3360
      %v5428 = vsel %vm4033, %v5396, %v3362
      %v5429 = vsel %vm4033, %v5397, %v3364
      %v5430 = vsel %vm4033, %v5398, %v3366
      %v5431 = vsel %vm4033, %v5399, %v3368
      %v5432 = vsel %vm4033, %v5400, %v3370
      %v5433 = vsel %vm4033, %v5401, %v3372
      %v5434 = vsel %vm4033, %v5402, %v3374
      %v5435 = vsel %vm4033, %v5403, %v3376
      %v5436 = vsel %vm4033, %v5404, %v3378
      %v5437 = vsel %vm4033, %v5405, %v3380
      %v5438 = vsel %vm4033, %v5406, %v3382
      %v5439 = vsel %vm4033, %v5407, %v3384
      %v5440 = vsel %vm4033, %v5408, %v3386
      %v5441 = vsel %vm4033, %v5409, %v3388
      %v5442 = vsel %vm4033, %v5410, %v3390
      %v5443 = vsel %vm4033, %v5411, %v3392
      %v5444 = vsel %vm4066, %v5412, %v3426
      %v5445 = vsel %vm4066, %v5413, %v3428
      %v5446 = vsel %vm4066, %v5414, %v3430
      %v5447 = vsel %vm4066, %v5415, %v3432
      %v5448 = vsel %vm4066, %v5416, %v3434
      %v5449 = vsel %vm4066, %v5417, %v3436
      %v5450 = vsel %vm4066, %v5418, %v3438
      %v5451 = vsel %vm4066, %v5419, %v3440
      %v5452 = vsel %vm4066, %v5420, %v3442
      %v5453 = vsel %vm4066, %v5421, %v3444
      %v5454 = vsel %vm4066, %v5422, %v3446
      %v5455 = vsel %vm4066, %v5423, %v3448
      %v5456 = vsel %vm4066, %v5424, %v3450
      %v5457 = vsel %vm4066, %v5425, %v3452
      %v5458 = vsel %vm4066, %v5426, %v3454
      %v5459 = vsel %vm4066, %v5427, %v3456
      %v5460 = vsel %vm4066, %v5428, %v3458
      %v5461 = vsel %vm4066, %v5429, %v3460
      %v5462 = vsel %vm4066, %v5430, %v3462
      %v5463 = vsel %vm4066, %v5431, %v3464
      %v5464 = vsel %vm4066, %v5432, %v3466
      %v5465 = vsel %vm4066, %v5433, %v3468
      %v5466 = vsel %vm4066, %v5434, %v3470
      %v5467 = vsel %vm4066, %v5435, %v3472
      %v5468 = vsel %vm4066, %v5436, %v3474
      %v5469 = vsel %vm4066, %v5437, %v3476
      %v5470 = vsel %vm4066, %v5438, %v3478
      %v5471 = vsel %vm4066, %v5439, %v3480
      %v5472 = vsel %vm4066, %v5440, %v3482
      %v5473 = vsel %vm4066, %v5441, %v3484
      %v5474 = vsel %vm4066, %v5442, %v3486
      %v5475 = vsel %vm4066, %v5443, %v3488
      %v5476 = vsel %vm4099, %v5444, %v3522
      %v5477 = vsel %vm4099, %v5445, %v3524
      %v5478 = vsel %vm4099, %v5446, %v3526
      %v5479 = vsel %vm4099, %v5447, %v3528
      %v5480 = vsel %vm4099, %v5448, %v3530
      %v5481 = vsel %vm4099, %v5449, %v3532
      %v5482 = vsel %vm4099, %v5450, %v3534
      %v5483 = vsel %vm4099, %v5451, %v3536
      %v5484 = vsel %vm4099, %v5452, %v3538
      %v5485 = vsel %vm4099, %v5453, %v3540
      %v5486 = vsel %vm4099, %v5454, %v3542
      %v5487 = vsel %vm4099, %v5455, %v3544
      %v5488 = vsel %vm4099, %v5456, %v3546
      %v5489 = vsel %vm4099, %v5457, %v3548
      %v5490 = vsel %vm4099, %v5458, %v3550
      %v5491 = vsel %vm4099, %v5459, %v3552
      %v5492 = vsel %vm4099, %v5460, %v3554
      %v5493 = vsel %vm4099, %v5461, %v3556
      %v5494 = vsel %vm4099, %v5462, %v3558
      %v5495 = vsel %vm4099, %v5463, %v3560
      %v5496 = vsel %vm4099, %v5464, %v3562
      %v5497 = vsel %vm4099, %v5465, %v3564
      %v5498 = vsel %vm4099, %v5466, %v3566
      %v5499 = vsel %vm4099, %v5467, %v3568
      %v5500 = vsel %vm4099, %v5468, %v3570
      %v5501 = vsel %vm4099, %v5469, %v3572
      %v5502 = vsel %vm4099, %v5470, %v3574
      %v5503 = vsel %vm4099, %v5471, %v3576
      %v5504 = vsel %vm4099, %v5472, %v3578
      %v5505 = vsel %vm4099, %v5473, %v3580
      %v5506 = vsel %vm4099, %v5474, %v3582
      %v5507 = vsel %vm4099, %v5475, %v3584
      %5540 = vrot.lane.b32.xlu0 %v5476, 64
      %v5541 = vpop.permute.xlu0 %5540
      %5542 = vrot.lane.b32.xlu0 %v5477, 64
      %v5543 = vpop.permute.xlu0 %5542
      %5544 = vrot.lane.b32.xlu0 %v5478, 64
      %v5545 = vpop.permute.xlu0 %5544
      %5546 = vrot.lane.b32.xlu0 %v5479, 64
      %v5547 = vpop.permute.xlu0 %5546
      %5548 = vrot.lane.b32.xlu0 %v5480, 64
      %v5549 = vpop.permute.xlu0 %5548
      %5550 = vrot.lane.b32.xlu0 %v5481, 64
      %v5551 = vpop.permute.xlu0 %5550
      %5552 = vrot.lane.b32.xlu0 %v5482, 64
      %v5553 = vpop.permute.xlu0 %5552
      %5554 = vrot.lane.b32.xlu0 %v5483, 64
      %v5555 = vpop.permute.xlu0 %5554
      %5556 = vrot.lane.b32.xlu0 %v5484, 64
      %v5557 = vpop.permute.xlu0 %5556
      %5558 = vrot.lane.b32.xlu0 %v5485, 64
      %v5559 = vpop.permute.xlu0 %5558
      %5560 = vrot.lane.b32.xlu0 %v5486, 64
      %v5561 = vpop.permute.xlu0 %5560
      %5562 = vrot.lane.b32.xlu0 %v5487, 64
      %v5563 = vpop.permute.xlu0 %5562
      %5564 = vrot.lane.b32.xlu0 %v5488, 64
      %v5565 = vpop.permute.xlu0 %5564
      %5566 = vrot.lane.b32.xlu0 %v5489, 64
      %v5567 = vpop.permute.xlu0 %5566
      %5568 = vrot.lane.b32.xlu0 %v5490, 64
      %v5569 = vpop.permute.xlu0 %5568
      %5570 = vrot.lane.b32.xlu0 %v5491, 64
      %v5571 = vpop.permute.xlu0 %5570
      %5572 = vrot.lane.b32.xlu0 %v5492, 64
      %v5573 = vpop.permute.xlu0 %5572
      %5574 = vrot.lane.b32.xlu0 %v5493, 64
      %v5575 = vpop.permute.xlu0 %5574
      %5576 = vrot.lane.b32.xlu0 %v5494, 64
      %v5577 = vpop.permute.xlu0 %5576
      %5578 = vrot.lane.b32.xlu0 %v5495, 64
      %v5579 = vpop.permute.xlu0 %5578
      %5580 = vrot.lane.b32.xlu0 %v5496, 64
      %v5581 = vpop.permute.xlu0 %5580
      %5582 = vrot.lane.b32.xlu0 %v5497, 64
      %v5583 = vpop.permute.xlu0 %5582
      %5584 = vrot.lane.b32.xlu0 %v5498, 64
      %v5585 = vpop.permute.xlu0 %5584
      %5586 = vrot.lane.b32.xlu0 %v5499, 64
      %v5587 = vpop.permute.xlu0 %5586
      %5588 = vrot.lane.b32.xlu0 %v5500, 64
      %v5589 = vpop.permute.xlu0 %5588
      %5590 = vrot.lane.b32.xlu0 %v5501, 64
      %v5591 = vpop.permute.xlu0 %5590
      %5592 = vrot.lane.b32.xlu0 %v5502, 64
      %v5593 = vpop.permute.xlu0 %5592
      %5594 = vrot.lane.b32.xlu0 %v5503, 64
      %v5595 = vpop.permute.xlu0 %5594
      %5596 = vrot.lane.b32.xlu0 %v5504, 64
      %v5597 = vpop.permute.xlu0 %5596
      %5598 = vrot.lane.b32.xlu0 %v5505, 64
      %v5599 = vpop.permute.xlu0 %5598
      %5600 = vrot.lane.b32.xlu0 %v5506, 64
      %v5601 = vpop.permute.xlu0 %5600
      %5602 = vrot.lane.b32.xlu0 %v5507, 64
      %v5603 = vpop.permute.xlu0 %5602
      %v5636 = vmul.f32 %v1087, %v5541
      %v5637 = vmul.f32 %v1091, %v5543
      %v5638 = vmul.f32 %v1095, %v5545
      %v5639 = vmul.f32 %v1099, %v5547
      %v5640 = vmul.f32 %v1103, %v5549
      %v5641 = vmul.f32 %v1107, %v5551
      %v5642 = vmul.f32 %v1111, %v5553
      %v5643 = vmul.f32 %v1115, %v5555
      %v5644 = vmul.f32 %v1119, %v5557
      %v5645 = vmul.f32 %v1123, %v5559
      %v5646 = vmul.f32 %v1127, %v5561
      %v5647 = vmul.f32 %v1131, %v5563
      %v5648 = vmul.f32 %v1135, %v5565
      %v5649 = vmul.f32 %v1139, %v5567
      %v5650 = vmul.f32 %v1143, %v5569
      %v5651 = vmul.f32 %v1147, %v5571
      %v5652 = vmul.f32 %v1151, %v5573
      %v5653 = vmul.f32 %v1155, %v5575
      %v5654 = vmul.f32 %v1159, %v5577
      %v5655 = vmul.f32 %v1163, %v5579
      %v5656 = vmul.f32 %v1167, %v5581
      %v5657 = vmul.f32 %v1171, %v5583
      %v5658 = vmul.f32 %v1175, %v5585
      %v5659 = vmul.f32 %v1179, %v5587
      %v5660 = vmul.f32 %v1183, %v5589
      %v5661 = vmul.f32 %v1187, %v5591
      %v5662 = vmul.f32 %v1191, %v5593
      %v5663 = vmul.f32 %v1195, %v5595
      %v5664 = vmul.f32 %v1199, %v5597
      %v5665 = vmul.f32 %v1203, %v5599
      %v5666 = vmul.f32 %v1207, %v5601
      %v5667 = vmul.f32 %v1211, %v5603
      %5700 = vrot.lane.b32.xlu0 %v5636, 64
      %v5701 = vpop.permute.xlu0 %5700
      %5702 = vrot.lane.b32.xlu0 %v5637, 64
      %v5703 = vpop.permute.xlu0 %5702
      %5704 = vrot.lane.b32.xlu0 %v5638, 64
      %v5705 = vpop.permute.xlu0 %5704
      %5706 = vrot.lane.b32.xlu0 %v5639, 64
      %v5707 = vpop.permute.xlu0 %5706
      %5708 = vrot.lane.b32.xlu0 %v5640, 64
      %v5709 = vpop.permute.xlu0 %5708
      %5710 = vrot.lane.b32.xlu0 %v5641, 64
      %v5711 = vpop.permute.xlu0 %5710
      %5712 = vrot.lane.b32.xlu0 %v5642, 64
      %v5713 = vpop.permute.xlu0 %5712
      %5714 = vrot.lane.b32.xlu0 %v5643, 64
      %v5715 = vpop.permute.xlu0 %5714
      %5716 = vrot.lane.b32.xlu0 %v5644, 64
      %v5717 = vpop.permute.xlu0 %5716
      %5718 = vrot.lane.b32.xlu0 %v5645, 64
      %v5719 = vpop.permute.xlu0 %5718
      %5720 = vrot.lane.b32.xlu0 %v5646, 64
      %v5721 = vpop.permute.xlu0 %5720
      %5722 = vrot.lane.b32.xlu0 %v5647, 64
      %v5723 = vpop.permute.xlu0 %5722
      %5724 = vrot.lane.b32.xlu0 %v5648, 64
      %v5725 = vpop.permute.xlu0 %5724
      %5726 = vrot.lane.b32.xlu0 %v5649, 64
      %v5727 = vpop.permute.xlu0 %5726
      %5728 = vrot.lane.b32.xlu0 %v5650, 64
      %v5729 = vpop.permute.xlu0 %5728
      %5730 = vrot.lane.b32.xlu0 %v5651, 64
      %v5731 = vpop.permute.xlu0 %5730
      %5732 = vrot.lane.b32.xlu0 %v5652, 64
      %v5733 = vpop.permute.xlu0 %5732
      %5734 = vrot.lane.b32.xlu0 %v5653, 64
      %v5735 = vpop.permute.xlu0 %5734
      %5736 = vrot.lane.b32.xlu0 %v5654, 64
      %v5737 = vpop.permute.xlu0 %5736
      %5738 = vrot.lane.b32.xlu0 %v5655, 64
      %v5739 = vpop.permute.xlu0 %5738
      %5740 = vrot.lane.b32.xlu0 %v5656, 64
      %v5741 = vpop.permute.xlu0 %5740
      %5742 = vrot.lane.b32.xlu0 %v5657, 64
      %v5743 = vpop.permute.xlu0 %5742
      %5744 = vrot.lane.b32.xlu0 %v5658, 64
      %v5745 = vpop.permute.xlu0 %5744
      %5746 = vrot.lane.b32.xlu0 %v5659, 64
      %v5747 = vpop.permute.xlu0 %5746
      %5748 = vrot.lane.b32.xlu0 %v5660, 64
      %v5749 = vpop.permute.xlu0 %5748
      %5750 = vrot.lane.b32.xlu0 %v5661, 64
      %v5751 = vpop.permute.xlu0 %5750
      %5752 = vrot.lane.b32.xlu0 %v5662, 64
      %v5753 = vpop.permute.xlu0 %5752
      %5754 = vrot.lane.b32.xlu0 %v5663, 64
      %v5755 = vpop.permute.xlu0 %5754
      %5756 = vrot.lane.b32.xlu0 %v5664, 64
      %v5757 = vpop.permute.xlu0 %5756
      %5758 = vrot.lane.b32.xlu0 %v5665, 64
      %v5759 = vpop.permute.xlu0 %5758
      %5760 = vrot.lane.b32.xlu0 %v5666, 64
      %v5761 = vpop.permute.xlu0 %5760
      %5762 = vrot.lane.b32.xlu0 %v5667, 64
      %v5763 = vpop.permute.xlu0 %5762
      %v5796 = vadd.f32 %v5156, %v5701
      %v5797 = vadd.f32 %v5157, %v5703
      %v5798 = vadd.f32 %v5158, %v5705
      %v5799 = vadd.f32 %v5159, %v5707
      %v5800 = vadd.f32 %v5160, %v5709
      %v5801 = vadd.f32 %v5161, %v5711
      %v5802 = vadd.f32 %v5162, %v5713
      %v5803 = vadd.f32 %v5163, %v5715
      %v5804 = vadd.f32 %v5164, %v5717
      %v5805 = vadd.f32 %v5165, %v5719
      %v5806 = vadd.f32 %v5166, %v5721
      %v5807 = vadd.f32 %v5167, %v5723
      %v5808 = vadd.f32 %v5168, %v5725
      %v5809 = vadd.f32 %v5169, %v5727
      %v5810 = vadd.f32 %v5170, %v5729
      %v5811 = vadd.f32 %v5171, %v5731
      %v5812 = vadd.f32 %v5172, %v5733
      %v5813 = vadd.f32 %v5173, %v5735
      %v5814 = vadd.f32 %v5174, %v5737
      %v5815 = vadd.f32 %v5175, %v5739
      %v5816 = vadd.f32 %v5176, %v5741
      %v5817 = vadd.f32 %v5177, %v5743
      %v5818 = vadd.f32 %v5178, %v5745
      %v5819 = vadd.f32 %v5179, %v5747
      %v5820 = vadd.f32 %v5180, %v5749
      %v5821 = vadd.f32 %v5181, %v5751
      %v5822 = vadd.f32 %v5182, %v5753
      %v5823 = vadd.f32 %v5183, %v5755
      %v5824 = vadd.f32 %v5184, %v5757
      %v5825 = vadd.f32 %v5185, %v5759
      %v5826 = vadd.f32 %v5186, %v5761
      %v5827 = vadd.f32 %v5187, %v5763
      %v5828 = vxor.u32 %v5796, 2147483648
      %v5829 = vxor.u32 %v5797, 2147483648
      %v5830 = vxor.u32 %v5798, 2147483648
      %v5831 = vxor.u32 %v5799, 2147483648
      %v5832 = vxor.u32 %v5800, 2147483648
      %v5833 = vxor.u32 %v5801, 2147483648
      %v5834 = vxor.u32 %v5802, 2147483648
      %v5835 = vxor.u32 %v5803, 2147483648
      %v5836 = vxor.u32 %v5804, 2147483648
      %v5837 = vxor.u32 %v5805, 2147483648
      %v5838 = vxor.u32 %v5806, 2147483648
      %v5839 = vxor.u32 %v5807, 2147483648
      %v5840 = vxor.u32 %v5808, 2147483648
      %v5841 = vxor.u32 %v5809, 2147483648
      %v5842 = vxor.u32 %v5810, 2147483648
      %v5843 = vxor.u32 %v5811, 2147483648
      %v5844 = vxor.u32 %v5812, 2147483648
      %v5845 = vxor.u32 %v5813, 2147483648
      %v5846 = vxor.u32 %v5814, 2147483648
      %v5847 = vxor.u32 %v5815, 2147483648
      %v5848 = vxor.u32 %v5816, 2147483648
      %v5849 = vxor.u32 %v5817, 2147483648
      %v5850 = vxor.u32 %v5818, 2147483648
      %v5851 = vxor.u32 %v5819, 2147483648
      %v5852 = vxor.u32 %v5820, 2147483648
      %v5853 = vxor.u32 %v5821, 2147483648
      %v5854 = vxor.u32 %v5822, 2147483648
      %v5855 = vxor.u32 %v5823, 2147483648
      %v5856 = vxor.u32 %v5824, 2147483648
      %v5857 = vxor.u32 %v5825, 2147483648
      %v5858 = vxor.u32 %v5826, 2147483648
      %v5859 = vxor.u32 %v5827, 2147483648
      %v5860 = vmul.f32 %v5828, 1.442695
      %v5861 = vpow.pop %v5860
      %v5862 = vmul.f32 %v5829, 1.442695
      %v5863 = vpow.pop %v5862
      %v5864 = vmul.f32 %v5830, 1.442695
      %v5865 = vpow.pop %v5864
      %v5866 = vmul.f32 %v5831, 1.442695
      %v5867 = vpow.pop %v5866
      %v5868 = vmul.f32 %v5832, 1.442695
      %v5869 = vpow.pop %v5868
      %v5870 = vmul.f32 %v5833, 1.442695
      %v5871 = vpow.pop %v5870
      %v5872 = vmul.f32 %v5834, 1.442695
      %v5873 = vpow.pop %v5872
      %v5874 = vmul.f32 %v5835, 1.442695
      %v5875 = vpow.pop %v5874
      %v5876 = vmul.f32 %v5836, 1.442695
      %v5877 = vpow.pop %v5876
      %v5878 = vmul.f32 %v5837, 1.442695
      %v5879 = vpow.pop %v5878
      %v5880 = vmul.f32 %v5838, 1.442695
      %v5881 = vpow.pop %v5880
      %v5882 = vmul.f32 %v5839, 1.442695
      %v5883 = vpow.pop %v5882
      %v5884 = vmul.f32 %v5840, 1.442695
      %v5885 = vpow.pop %v5884
      %v5886 = vmul.f32 %v5841, 1.442695
      %v5887 = vpow.pop %v5886
      %v5888 = vmul.f32 %v5842, 1.442695
      %v5889 = vpow.pop %v5888
      %v5890 = vmul.f32 %v5843, 1.442695
      %v5891 = vpow.pop %v5890
      %v5892 = vmul.f32 %v5844, 1.442695
      %v5893 = vpow.pop %v5892
      %v5894 = vmul.f32 %v5845, 1.442695
      %v5895 = vpow.pop %v5894
      %v5896 = vmul.f32 %v5846, 1.442695
      %v5897 = vpow.pop %v5896
      %v5898 = vmul.f32 %v5847, 1.442695
      %v5899 = vpow.pop %v5898
      %v5900 = vmul.f32 %v5848, 1.442695
      %v5901 = vpow.pop %v5900
      %v5902 = vmul.f32 %v5849, 1.442695
      %v5903 = vpow.pop %v5902
      %v5904 = vmul.f32 %v5850, 1.442695
      %v5905 = vpow.pop %v5904
      %v5906 = vmul.f32 %v5851, 1.442695
      %v5907 = vpow.pop %v5906
      %v5908 = vmul.f32 %v5852, 1.442695
      %v5909 = vpow.pop %v5908
      %v5910 = vmul.f32 %v5853, 1.442695
      %v5911 = vpow.pop %v5910
      %v5912 = vmul.f32 %v5854, 1.442695
      %v5913 = vpow.pop %v5912
      %v5914 = vmul.f32 %v5855, 1.442695
      %v5915 = vpow.pop %v5914
      %v5916 = vmul.f32 %v5856, 1.442695
      %v5917 = vpow.pop %v5916
      %v5918 = vmul.f32 %v5857, 1.442695
      %v5919 = vpow.pop %v5918
      %v5920 = vmul.f32 %v5858, 1.442695
      %v5921 = vpow.pop %v5920
      %v5922 = vmul.f32 %v5859, 1.442695
      %v5923 = vpow.pop %v5922
      %v5924 = vadd.f32 %v5861, 1.0
      %v5925 = vadd.f32 %v5863, 1.0
      %v5926 = vadd.f32 %v5865, 1.0
      %v5927 = vadd.f32 %v5867, 1.0
      %v5928 = vadd.f32 %v5869, 1.0
      %v5929 = vadd.f32 %v5871, 1.0
      %v5930 = vadd.f32 %v5873, 1.0
      %v5931 = vadd.f32 %v5875, 1.0
      %v5932 = vadd.f32 %v5877, 1.0
      %v5933 = vadd.f32 %v5879, 1.0
      %v5934 = vadd.f32 %v5881, 1.0
      %v5935 = vadd.f32 %v5883, 1.0
      %v5936 = vadd.f32 %v5885, 1.0
      %v5937 = vadd.f32 %v5887, 1.0
      %v5938 = vadd.f32 %v5889, 1.0
      %v5939 = vadd.f32 %v5891, 1.0
      %v5940 = vadd.f32 %v5893, 1.0
      %v5941 = vadd.f32 %v5895, 1.0
      %v5942 = vadd.f32 %v5897, 1.0
      %v5943 = vadd.f32 %v5899, 1.0
      %v5944 = vadd.f32 %v5901, 1.0
      %v5945 = vadd.f32 %v5903, 1.0
      %v5946 = vadd.f32 %v5905, 1.0
      %v5947 = vadd.f32 %v5907, 1.0
      %v5948 = vadd.f32 %v5909, 1.0
      %v5949 = vadd.f32 %v5911, 1.0
      %v5950 = vadd.f32 %v5913, 1.0
      %v5951 = vadd.f32 %v5915, 1.0
      %v5952 = vadd.f32 %v5917, 1.0
      %v5953 = vadd.f32 %v5919, 1.0
      %v5954 = vadd.f32 %v5921, 1.0
      %v5955 = vadd.f32 %v5923, 1.0
      %v5956 = vrcp.pop %v5924
      %v5957 = vmul.f32 %v5924, %v5956
      %v5958 = vsub.f32 1.0, %v5957
      %v5959 = vmul.f32 %v5956, %v5958
      %v5960 = vadd.f32 %v5956, %v5959
      %vm5961 = vweird.f32 %v5924
      %vm5962 = vweird.f32 %v5956
      %vm5963 = vmor %vm5961, %vm5962
      %v5964 = vsel %vm5963, %v5956, %v5960
      %v5965 = vand.u32 2147483647, %v5924
      %vm5966 = vcmp.eq.f32.partialorder %v5965, 8.507059e+37
      %v5967 = vand.u32 %v5924, 2147483648
      %v5968 = vor.u32 1.1754944e-38, %v5967
      %v5969 = vsel %vm5966, %v5968, %v5964
      %v5970 = vmul.f32 1.0, %v5969
      %v5971 = vrcp.pop %v5925
      %v5972 = vmul.f32 %v5925, %v5971
      %v5973 = vsub.f32 1.0, %v5972
      %v5974 = vmul.f32 %v5971, %v5973
      %v5975 = vadd.f32 %v5971, %v5974
      %vm5976 = vweird.f32 %v5925
      %vm5977 = vweird.f32 %v5971
      %vm5978 = vmor %vm5976, %vm5977
      %v5979 = vsel %vm5978, %v5971, %v5975
      %v5980 = vand.u32 2147483647, %v5925
      %vm5981 = vcmp.eq.f32.partialorder %v5980, 8.507059e+37
      %v5982 = vand.u32 %v5925, 2147483648
      %v5983 = vor.u32 1.1754944e-38, %v5982
      %v5984 = vsel %vm5981, %v5983, %v5979
      %v5985 = vmul.f32 1.0, %v5984
      %v5986 = vrcp.pop %v5926
      %v5987 = vmul.f32 %v5926, %v5986
      %v5988 = vsub.f32 1.0, %v5987
      %v5989 = vmul.f32 %v5986, %v5988
      %v5990 = vadd.f32 %v5986, %v5989
      %vm5991 = vweird.f32 %v5926
      %vm5992 = vweird.f32 %v5986
      %vm5993 = vmor %vm5991, %vm5992
      %v5994 = vsel %vm5993, %v5986, %v5990
      %v5995 = vand.u32 2147483647, %v5926
      %vm5996 = vcmp.eq.f32.partialorder %v5995, 8.507059e+37
      %v5997 = vand.u32 %v5926, 2147483648
      %v5998 = vor.u32 1.1754944e-38, %v5997
      %v5999 = vsel %vm5996, %v5998, %v5994
      %v6000 = vmul.f32 1.0, %v5999
      %v6001 = vrcp.pop %v5927
      %v6002 = vmul.f32 %v5927, %v6001
      %v6003 = vsub.f32 1.0, %v6002
      %v6004 = vmul.f32 %v6001, %v6003
      %v6005 = vadd.f32 %v6001, %v6004
      %vm6006 = vweird.f32 %v5927
      %vm6007 = vweird.f32 %v6001
      %vm6008 = vmor %vm6006, %vm6007
      %v6009 = vsel %vm6008, %v6001, %v6005
      %v6010 = vand.u32 2147483647, %v5927
      %vm6011 = vcmp.eq.f32.partialorder %v6010, 8.507059e+37
      %v6012 = vand.u32 %v5927, 2147483648
      %v6013 = vor.u32 1.1754944e-38, %v6012
      %v6014 = vsel %vm6011, %v6013, %v6009
      %v6015 = vmul.f32 1.0, %v6014
      %v6016 = vrcp.pop %v5928
      %v6017 = vmul.f32 %v5928, %v6016
      %v6018 = vsub.f32 1.0, %v6017
      %v6019 = vmul.f32 %v6016, %v6018
      %v6020 = vadd.f32 %v6016, %v6019
      %vm6021 = vweird.f32 %v5928
      %vm6022 = vweird.f32 %v6016
      %vm6023 = vmor %vm6021, %vm6022
      %v6024 = vsel %vm6023, %v6016, %v6020
      %v6025 = vand.u32 2147483647, %v5928
      %vm6026 = vcmp.eq.f32.partialorder %v6025, 8.507059e+37
      %v6027 = vand.u32 %v5928, 2147483648
      %v6028 = vor.u32 1.1754944e-38, %v6027
      %v6029 = vsel %vm6026, %v6028, %v6024
      %v6030 = vmul.f32 1.0, %v6029
      %v6031 = vrcp.pop %v5929
      %v6032 = vmul.f32 %v5929, %v6031
      %v6033 = vsub.f32 1.0, %v6032
      %v6034 = vmul.f32 %v6031, %v6033
      %v6035 = vadd.f32 %v6031, %v6034
      %vm6036 = vweird.f32 %v5929
      %vm6037 = vweird.f32 %v6031
      %vm6038 = vmor %vm6036, %vm6037
      %v6039 = vsel %vm6038, %v6031, %v6035
      %v6040 = vand.u32 2147483647, %v5929
      %vm6041 = vcmp.eq.f32.partialorder %v6040, 8.507059e+37
      %v6042 = vand.u32 %v5929, 2147483648
      %v6043 = vor.u32 1.1754944e-38, %v6042
      %v6044 = vsel %vm6041, %v6043, %v6039
      %v6045 = vmul.f32 1.0, %v6044
      %v6046 = vrcp.pop %v5930
      %v6047 = vmul.f32 %v5930, %v6046
      %v6048 = vsub.f32 1.0, %v6047
      %v6049 = vmul.f32 %v6046, %v6048
      %v6050 = vadd.f32 %v6046, %v6049
      %vm6051 = vweird.f32 %v5930
      %vm6052 = vweird.f32 %v6046
      %vm6053 = vmor %vm6051, %vm6052
      %v6054 = vsel %vm6053, %v6046, %v6050
      %v6055 = vand.u32 2147483647, %v5930
      %vm6056 = vcmp.eq.f32.partialorder %v6055, 8.507059e+37
      %v6057 = vand.u32 %v5930, 2147483648
      %v6058 = vor.u32 1.1754944e-38, %v6057
      %v6059 = vsel %vm6056, %v6058, %v6054
      %v6060 = vmul.f32 1.0, %v6059
      %v6061 = vrcp.pop %v5931
      %v6062 = vmul.f32 %v5931, %v6061
      %v6063 = vsub.f32 1.0, %v6062
      %v6064 = vmul.f32 %v6061, %v6063
      %v6065 = vadd.f32 %v6061, %v6064
      %vm6066 = vweird.f32 %v5931
      %vm6067 = vweird.f32 %v6061
      %vm6068 = vmor %vm6066, %vm6067
      %v6069 = vsel %vm6068, %v6061, %v6065
      %v6070 = vand.u32 2147483647, %v5931
      %vm6071 = vcmp.eq.f32.partialorder %v6070, 8.507059e+37
      %v6072 = vand.u32 %v5931, 2147483648
      %v6073 = vor.u32 1.1754944e-38, %v6072
      %v6074 = vsel %vm6071, %v6073, %v6069
      %v6075 = vmul.f32 1.0, %v6074
      %v6076 = vrcp.pop %v5932
      %v6077 = vmul.f32 %v5932, %v6076
      %v6078 = vsub.f32 1.0, %v6077
      %v6079 = vmul.f32 %v6076, %v6078
      %v6080 = vadd.f32 %v6076, %v6079
      %vm6081 = vweird.f32 %v5932
      %vm6082 = vweird.f32 %v6076
      %vm6083 = vmor %vm6081, %vm6082
      %v6084 = vsel %vm6083, %v6076, %v6080
      %v6085 = vand.u32 2147483647, %v5932
      %vm6086 = vcmp.eq.f32.partialorder %v6085, 8.507059e+37
      %v6087 = vand.u32 %v5932, 2147483648
      %v6088 = vor.u32 1.1754944e-38, %v6087
      %v6089 = vsel %vm6086, %v6088, %v6084
      %v6090 = vmul.f32 1.0, %v6089
      %v6091 = vrcp.pop %v5933
      %v6092 = vmul.f32 %v5933, %v6091
      %v6093 = vsub.f32 1.0, %v6092
      %v6094 = vmul.f32 %v6091, %v6093
      %v6095 = vadd.f32 %v6091, %v6094
      %vm6096 = vweird.f32 %v5933
      %vm6097 = vweird.f32 %v6091
      %vm6098 = vmor %vm6096, %vm6097
      %v6099 = vsel %vm6098, %v6091, %v6095
      %v6100 = vand.u32 2147483647, %v5933
      %vm6101 = vcmp.eq.f32.partialorder %v6100, 8.507059e+37
      %v6102 = vand.u32 %v5933, 2147483648
      %v6103 = vor.u32 1.1754944e-38, %v6102
      %v6104 = vsel %vm6101, %v6103, %v6099
      %v6105 = vmul.f32 1.0, %v6104
      %v6106 = vrcp.pop %v5934
      %v6107 = vmul.f32 %v5934, %v6106
      %v6108 = vsub.f32 1.0, %v6107
      %v6109 = vmul.f32 %v6106, %v6108
      %v6110 = vadd.f32 %v6106, %v6109
      %vm6111 = vweird.f32 %v5934
      %vm6112 = vweird.f32 %v6106
      %vm6113 = vmor %vm6111, %vm6112
      %v6114 = vsel %vm6113, %v6106, %v6110
      %v6115 = vand.u32 2147483647, %v5934
      %vm6116 = vcmp.eq.f32.partialorder %v6115, 8.507059e+37
      %v6117 = vand.u32 %v5934, 2147483648
      %v6118 = vor.u32 1.1754944e-38, %v6117
      %v6119 = vsel %vm6116, %v6118, %v6114
      %v6120 = vmul.f32 1.0, %v6119
      %v6121 = vrcp.pop %v5935
      %v6122 = vmul.f32 %v5935, %v6121
      %v6123 = vsub.f32 1.0, %v6122
      %v6124 = vmul.f32 %v6121, %v6123
      %v6125 = vadd.f32 %v6121, %v6124
      %vm6126 = vweird.f32 %v5935
      %vm6127 = vweird.f32 %v6121
      %vm6128 = vmor %vm6126, %vm6127
      %v6129 = vsel %vm6128, %v6121, %v6125
      %v6130 = vand.u32 2147483647, %v5935
      %vm6131 = vcmp.eq.f32.partialorder %v6130, 8.507059e+37
      %v6132 = vand.u32 %v5935, 2147483648
      %v6133 = vor.u32 1.1754944e-38, %v6132
      %v6134 = vsel %vm6131, %v6133, %v6129
      %v6135 = vmul.f32 1.0, %v6134
      %v6136 = vrcp.pop %v5936
      %v6137 = vmul.f32 %v5936, %v6136
      %v6138 = vsub.f32 1.0, %v6137
      %v6139 = vmul.f32 %v6136, %v6138
      %v6140 = vadd.f32 %v6136, %v6139
      %vm6141 = vweird.f32 %v5936
      %vm6142 = vweird.f32 %v6136
      %vm6143 = vmor %vm6141, %vm6142
      %v6144 = vsel %vm6143, %v6136, %v6140
      %v6145 = vand.u32 2147483647, %v5936
      %vm6146 = vcmp.eq.f32.partialorder %v6145, 8.507059e+37
      %v6147 = vand.u32 %v5936, 2147483648
      %v6148 = vor.u32 1.1754944e-38, %v6147
      %v6149 = vsel %vm6146, %v6148, %v6144
      %v6150 = vmul.f32 1.0, %v6149
      %v6151 = vrcp.pop %v5937
      %v6152 = vmul.f32 %v5937, %v6151
      %v6153 = vsub.f32 1.0, %v6152
      %v6154 = vmul.f32 %v6151, %v6153
      %v6155 = vadd.f32 %v6151, %v6154
      %vm6156 = vweird.f32 %v5937
      %vm6157 = vweird.f32 %v6151
      %vm6158 = vmor %vm6156, %vm6157
      %v6159 = vsel %vm6158, %v6151, %v6155
      %v6160 = vand.u32 2147483647, %v5937
      %vm6161 = vcmp.eq.f32.partialorder %v6160, 8.507059e+37
      %v6162 = vand.u32 %v5937, 2147483648
      %v6163 = vor.u32 1.1754944e-38, %v6162
      %v6164 = vsel %vm6161, %v6163, %v6159
      %v6165 = vmul.f32 1.0, %v6164
      %v6166 = vrcp.pop %v5938
      %v6167 = vmul.f32 %v5938, %v6166
      %v6168 = vsub.f32 1.0, %v6167
      %v6169 = vmul.f32 %v6166, %v6168
      %v6170 = vadd.f32 %v6166, %v6169
      %vm6171 = vweird.f32 %v5938
      %vm6172 = vweird.f32 %v6166
      %vm6173 = vmor %vm6171, %vm6172
      %v6174 = vsel %vm6173, %v6166, %v6170
      %v6175 = vand.u32 2147483647, %v5938
      %vm6176 = vcmp.eq.f32.partialorder %v6175, 8.507059e+37
      %v6177 = vand.u32 %v5938, 2147483648
      %v6178 = vor.u32 1.1754944e-38, %v6177
      %v6179 = vsel %vm6176, %v6178, %v6174
      %v6180 = vmul.f32 1.0, %v6179
      %v6181 = vrcp.pop %v5939
      %v6182 = vmul.f32 %v5939, %v6181
      %v6183 = vsub.f32 1.0, %v6182
      %v6184 = vmul.f32 %v6181, %v6183
      %v6185 = vadd.f32 %v6181, %v6184
      %vm6186 = vweird.f32 %v5939
      %vm6187 = vweird.f32 %v6181
      %vm6188 = vmor %vm6186, %vm6187
      %v6189 = vsel %vm6188, %v6181, %v6185
      %v6190 = vand.u32 2147483647, %v5939
      %vm6191 = vcmp.eq.f32.partialorder %v6190, 8.507059e+37
      %v6192 = vand.u32 %v5939, 2147483648
      %v6193 = vor.u32 1.1754944e-38, %v6192
      %v6194 = vsel %vm6191, %v6193, %v6189
      %v6195 = vmul.f32 1.0, %v6194
      %v6196 = vrcp.pop %v5940
      %v6197 = vmul.f32 %v5940, %v6196
      %v6198 = vsub.f32 1.0, %v6197
      %v6199 = vmul.f32 %v6196, %v6198
      %v6200 = vadd.f32 %v6196, %v6199
      %vm6201 = vweird.f32 %v5940
      %vm6202 = vweird.f32 %v6196
      %vm6203 = vmor %vm6201, %vm6202
      %v6204 = vsel %vm6203, %v6196, %v6200
      %v6205 = vand.u32 2147483647, %v5940
      %vm6206 = vcmp.eq.f32.partialorder %v6205, 8.507059e+37
      %v6207 = vand.u32 %v5940, 2147483648
      %v6208 = vor.u32 1.1754944e-38, %v6207
      %v6209 = vsel %vm6206, %v6208, %v6204
      %v6210 = vmul.f32 1.0, %v6209
      %v6211 = vrcp.pop %v5941
      %v6212 = vmul.f32 %v5941, %v6211
      %v6213 = vsub.f32 1.0, %v6212
      %v6214 = vmul.f32 %v6211, %v6213
      %v6215 = vadd.f32 %v6211, %v6214
      %vm6216 = vweird.f32 %v5941
      %vm6217 = vweird.f32 %v6211
      %vm6218 = vmor %vm6216, %vm6217
      %v6219 = vsel %vm6218, %v6211, %v6215
      %v6220 = vand.u32 2147483647, %v5941
      %vm6221 = vcmp.eq.f32.partialorder %v6220, 8.507059e+37
      %v6222 = vand.u32 %v5941, 2147483648
      %v6223 = vor.u32 1.1754944e-38, %v6222
      %v6224 = vsel %vm6221, %v6223, %v6219
      %v6225 = vmul.f32 1.0, %v6224
      %v6226 = vrcp.pop %v5942
      %v6227 = vmul.f32 %v5942, %v6226
      %v6228 = vsub.f32 1.0, %v6227
      %v6229 = vmul.f32 %v6226, %v6228
      %v6230 = vadd.f32 %v6226, %v6229
      %vm6231 = vweird.f32 %v5942
      %vm6232 = vweird.f32 %v6226
      %vm6233 = vmor %vm6231, %vm6232
      %v6234 = vsel %vm6233, %v6226, %v6230
      %v6235 = vand.u32 2147483647, %v5942
      %vm6236 = vcmp.eq.f32.partialorder %v6235, 8.507059e+37
      %v6237 = vand.u32 %v5942, 2147483648
      %v6238 = vor.u32 1.1754944e-38, %v6237
      %v6239 = vsel %vm6236, %v6238, %v6234
      %v6240 = vmul.f32 1.0, %v6239
      %v6241 = vrcp.pop %v5943
      %v6242 = vmul.f32 %v5943, %v6241
      %v6243 = vsub.f32 1.0, %v6242
      %v6244 = vmul.f32 %v6241, %v6243
      %v6245 = vadd.f32 %v6241, %v6244
      %vm6246 = vweird.f32 %v5943
      %vm6247 = vweird.f32 %v6241
      %vm6248 = vmor %vm6246, %vm6247
      %v6249 = vsel %vm6248, %v6241, %v6245
      %v6250 = vand.u32 2147483647, %v5943
      %vm6251 = vcmp.eq.f32.partialorder %v6250, 8.507059e+37
      %v6252 = vand.u32 %v5943, 2147483648
      %v6253 = vor.u32 1.1754944e-38, %v6252
      %v6254 = vsel %vm6251, %v6253, %v6249
      %v6255 = vmul.f32 1.0, %v6254
      %v6256 = vrcp.pop %v5944
      %v6257 = vmul.f32 %v5944, %v6256
      %v6258 = vsub.f32 1.0, %v6257
      %v6259 = vmul.f32 %v6256, %v6258
      %v6260 = vadd.f32 %v6256, %v6259
      %vm6261 = vweird.f32 %v5944
      %vm6262 = vweird.f32 %v6256
      %vm6263 = vmor %vm6261, %vm6262
      %v6264 = vsel %vm6263, %v6256, %v6260
      %v6265 = vand.u32 2147483647, %v5944
      %vm6266 = vcmp.eq.f32.partialorder %v6265, 8.507059e+37
      %v6267 = vand.u32 %v5944, 2147483648
      %v6268 = vor.u32 1.1754944e-38, %v6267
      %v6269 = vsel %vm6266, %v6268, %v6264
      %v6270 = vmul.f32 1.0, %v6269
      %v6271 = vrcp.pop %v5945
      %v6272 = vmul.f32 %v5945, %v6271
      %v6273 = vsub.f32 1.0, %v6272
      %v6274 = vmul.f32 %v6271, %v6273
      %v6275 = vadd.f32 %v6271, %v6274
      %vm6276 = vweird.f32 %v5945
      %vm6277 = vweird.f32 %v6271
      %vm6278 = vmor %vm6276, %vm6277
      %v6279 = vsel %vm6278, %v6271, %v6275
      %v6280 = vand.u32 2147483647, %v5945
      %vm6281 = vcmp.eq.f32.partialorder %v6280, 8.507059e+37
      %v6282 = vand.u32 %v5945, 2147483648
      %v6283 = vor.u32 1.1754944e-38, %v6282
      %v6284 = vsel %vm6281, %v6283, %v6279
      %v6285 = vmul.f32 1.0, %v6284
      %v6286 = vrcp.pop %v5946
      %v6287 = vmul.f32 %v5946, %v6286
      %v6288 = vsub.f32 1.0, %v6287
      %v6289 = vmul.f32 %v6286, %v6288
      %v6290 = vadd.f32 %v6286, %v6289
      %vm6291 = vweird.f32 %v5946
      %vm6292 = vweird.f32 %v6286
      %vm6293 = vmor %vm6291, %vm6292
      %v6294 = vsel %vm6293, %v6286, %v6290
      %v6295 = vand.u32 2147483647, %v5946
      %vm6296 = vcmp.eq.f32.partialorder %v6295, 8.507059e+37
      %v6297 = vand.u32 %v5946, 2147483648
      %v6298 = vor.u32 1.1754944e-38, %v6297
      %v6299 = vsel %vm6296, %v6298, %v6294
      %v6300 = vmul.f32 1.0, %v6299
      %v6301 = vrcp.pop %v5947
      %v6302 = vmul.f32 %v5947, %v6301
      %v6303 = vsub.f32 1.0, %v6302
      %v6304 = vmul.f32 %v6301, %v6303
      %v6305 = vadd.f32 %v6301, %v6304
      %vm6306 = vweird.f32 %v5947
      %vm6307 = vweird.f32 %v6301
      %vm6308 = vmor %vm6306, %vm6307
      %v6309 = vsel %vm6308, %v6301, %v6305
      %v6310 = vand.u32 2147483647, %v5947
      %vm6311 = vcmp.eq.f32.partialorder %v6310, 8.507059e+37
      %v6312 = vand.u32 %v5947, 2147483648
      %v6313 = vor.u32 1.1754944e-38, %v6312
      %v6314 = vsel %vm6311, %v6313, %v6309
      %v6315 = vmul.f32 1.0, %v6314
      %v6316 = vrcp.pop %v5948
      %v6317 = vmul.f32 %v5948, %v6316
      %v6318 = vsub.f32 1.0, %v6317
      %v6319 = vmul.f32 %v6316, %v6318
      %v6320 = vadd.f32 %v6316, %v6319
      %vm6321 = vweird.f32 %v5948
      %vm6322 = vweird.f32 %v6316
      %vm6323 = vmor %vm6321, %vm6322
      %v6324 = vsel %vm6323, %v6316, %v6320
      %v6325 = vand.u32 2147483647, %v5948
      %vm6326 = vcmp.eq.f32.partialorder %v6325, 8.507059e+37
      %v6327 = vand.u32 %v5948, 2147483648
      %v6328 = vor.u32 1.1754944e-38, %v6327
      %v6329 = vsel %vm6326, %v6328, %v6324
      %v6330 = vmul.f32 1.0, %v6329
      %v6331 = vrcp.pop %v5949
      %v6332 = vmul.f32 %v5949, %v6331
      %v6333 = vsub.f32 1.0, %v6332
      %v6334 = vmul.f32 %v6331, %v6333
      %v6335 = vadd.f32 %v6331, %v6334
      %vm6336 = vweird.f32 %v5949
      %vm6337 = vweird.f32 %v6331
      %vm6338 = vmor %vm6336, %vm6337
      %v6339 = vsel %vm6338, %v6331, %v6335
      %v6340 = vand.u32 2147483647, %v5949
      %vm6341 = vcmp.eq.f32.partialorder %v6340, 8.507059e+37
      %v6342 = vand.u32 %v5949, 2147483648
      %v6343 = vor.u32 1.1754944e-38, %v6342
      %v6344 = vsel %vm6341, %v6343, %v6339
      %v6345 = vmul.f32 1.0, %v6344
      %v6346 = vrcp.pop %v5950
      %v6347 = vmul.f32 %v5950, %v6346
      %v6348 = vsub.f32 1.0, %v6347
      %v6349 = vmul.f32 %v6346, %v6348
      %v6350 = vadd.f32 %v6346, %v6349
      %vm6351 = vweird.f32 %v5950
      %vm6352 = vweird.f32 %v6346
      %vm6353 = vmor %vm6351, %vm6352
      %v6354 = vsel %vm6353, %v6346, %v6350
      %v6355 = vand.u32 2147483647, %v5950
      %vm6356 = vcmp.eq.f32.partialorder %v6355, 8.507059e+37
      %v6357 = vand.u32 %v5950, 2147483648
      %v6358 = vor.u32 1.1754944e-38, %v6357
      %v6359 = vsel %vm6356, %v6358, %v6354
      %v6360 = vmul.f32 1.0, %v6359
      %v6361 = vrcp.pop %v5951
      %v6362 = vmul.f32 %v5951, %v6361
      %v6363 = vsub.f32 1.0, %v6362
      %v6364 = vmul.f32 %v6361, %v6363
      %v6365 = vadd.f32 %v6361, %v6364
      %vm6366 = vweird.f32 %v5951
      %vm6367 = vweird.f32 %v6361
      %vm6368 = vmor %vm6366, %vm6367
      %v6369 = vsel %vm6368, %v6361, %v6365
      %v6370 = vand.u32 2147483647, %v5951
      %vm6371 = vcmp.eq.f32.partialorder %v6370, 8.507059e+37
      %v6372 = vand.u32 %v5951, 2147483648
      %v6373 = vor.u32 1.1754944e-38, %v6372
      %v6374 = vsel %vm6371, %v6373, %v6369
      %v6375 = vmul.f32 1.0, %v6374
      %v6376 = vrcp.pop %v5952
      %v6377 = vmul.f32 %v5952, %v6376
      %v6378 = vsub.f32 1.0, %v6377
      %v6379 = vmul.f32 %v6376, %v6378
      %v6380 = vadd.f32 %v6376, %v6379
      %vm6381 = vweird.f32 %v5952
      %vm6382 = vweird.f32 %v6376
      %vm6383 = vmor %vm6381, %vm6382
      %v6384 = vsel %vm6383, %v6376, %v6380
      %v6385 = vand.u32 2147483647, %v5952
      %vm6386 = vcmp.eq.f32.partialorder %v6385, 8.507059e+37
      %v6387 = vand.u32 %v5952, 2147483648
      %v6388 = vor.u32 1.1754944e-38, %v6387
      %v6389 = vsel %vm6386, %v6388, %v6384
      %v6390 = vmul.f32 1.0, %v6389
      %v6391 = vrcp.pop %v5953
      %v6392 = vmul.f32 %v5953, %v6391
      %v6393 = vsub.f32 1.0, %v6392
      %v6394 = vmul.f32 %v6391, %v6393
      %v6395 = vadd.f32 %v6391, %v6394
      %vm6396 = vweird.f32 %v5953
      %vm6397 = vweird.f32 %v6391
      %vm6398 = vmor %vm6396, %vm6397
      %v6399 = vsel %vm6398, %v6391, %v6395
      %v6400 = vand.u32 2147483647, %v5953
      %vm6401 = vcmp.eq.f32.partialorder %v6400, 8.507059e+37
      %v6402 = vand.u32 %v5953, 2147483648
      %v6403 = vor.u32 1.1754944e-38, %v6402
      %v6404 = vsel %vm6401, %v6403, %v6399
      %v6405 = vmul.f32 1.0, %v6404
      %v6406 = vrcp.pop %v5954
      %v6407 = vmul.f32 %v5954, %v6406
      %v6408 = vsub.f32 1.0, %v6407
      %v6409 = vmul.f32 %v6406, %v6408
      %v6410 = vadd.f32 %v6406, %v6409
      %vm6411 = vweird.f32 %v5954
      %vm6412 = vweird.f32 %v6406
      %vm6413 = vmor %vm6411, %vm6412
      %v6414 = vsel %vm6413, %v6406, %v6410
      %v6415 = vand.u32 2147483647, %v5954
      %vm6416 = vcmp.eq.f32.partialorder %v6415, 8.507059e+37
      %v6417 = vand.u32 %v5954, 2147483648
      %v6418 = vor.u32 1.1754944e-38, %v6417
      %v6419 = vsel %vm6416, %v6418, %v6414
      %v6420 = vmul.f32 1.0, %v6419
      %v6421 = vrcp.pop %v5955
      %v6422 = vmul.f32 %v5955, %v6421
      %v6423 = vsub.f32 1.0, %v6422
      %v6424 = vmul.f32 %v6421, %v6423
      %v6425 = vadd.f32 %v6421, %v6424
      %vm6426 = vweird.f32 %v5955
      %vm6427 = vweird.f32 %v6421
      %vm6428 = vmor %vm6426, %vm6427
      %v6429 = vsel %vm6428, %v6421, %v6425
      %v6430 = vand.u32 2147483647, %v5955
      %vm6431 = vcmp.eq.f32.partialorder %v6430, 8.507059e+37
      %v6432 = vand.u32 %v5955, 2147483648
      %v6433 = vor.u32 1.1754944e-38, %v6432
      %v6434 = vsel %vm6431, %v6433, %v6429
      %v6435 = vmul.f32 1.0, %v6434
      %vm6436 = vcmask 523264
      %6437 = vst.msk [vmem:[%s226] sm:$0xff] %vm6436, %v5970
      %6438 = vst.msk [vmem:[%s226 + $0x8] sm:$0xff] %vm6436, %v5985
      %6439 = vst.msk [vmem:[%s226 + $0x10] sm:$0xff] %vm6436, %v6000
      %6440 = vst.msk [vmem:[%s226 + $0x18] sm:$0xff] %vm6436, %v6015
      %6441 = vst.msk [vmem:[%s226 + $0x20] sm:$0xff] %vm6436, %v6030
      %6442 = vst.msk [vmem:[%s226 + $0x28] sm:$0xff] %vm6436, %v6045
      %6443 = vst.msk [vmem:[%s226 + $0x30] sm:$0xff] %vm6436, %v6060
      %6444 = vst.msk [vmem:[%s226 + $0x38] sm:$0xff] %vm6436, %v6075
      %6445 = vst.msk [vmem:[%s226 + $0x40] sm:$0xff] %vm6436, %v6090
      %6446 = vst.msk [vmem:[%s226 + $0x48] sm:$0xff] %vm6436, %v6105
      %6447 = vst.msk [vmem:[%s226 + $0x50] sm:$0xff] %vm6436, %v6120
      %6448 = vst.msk [vmem:[%s226 + $0x58] sm:$0xff] %vm6436, %v6135
      %6449 = vst.msk [vmem:[%s226 + $0x60] sm:$0xff] %vm6436, %v6150
      %6450 = vst.msk [vmem:[%s226 + $0x68] sm:$0xff] %vm6436, %v6165
      %6451 = vst.msk [vmem:[%s226 + $0x70] sm:$0xff] %vm6436, %v6180
      %6452 = vst.msk [vmem:[%s226 + $0x78] sm:$0xff] %vm6436, %v6195
      %6453 = vst.msk [vmem:[%s226 + $0x80] sm:$0xff] %vm6436, %v6210
      %6454 = vst.msk [vmem:[%s226 + $0x88] sm:$0xff] %vm6436, %v6225
      %6455 = vst.msk [vmem:[%s226 + $0x90] sm:$0xff] %vm6436, %v6240
      %6456 = vst.msk [vmem:[%s226 + $0x98] sm:$0xff] %vm6436, %v6255
      %6457 = vst.msk [vmem:[%s226 + $0xa0] sm:$0xff] %vm6436, %v6270
      %6458 = vst.msk [vmem:[%s226 + $0xa8] sm:$0xff] %vm6436, %v6285
      %6459 = vst.msk [vmem:[%s226 + $0xb0] sm:$0xff] %vm6436, %v6300
      %6460 = vst.msk [vmem:[%s226 + $0xb8] sm:$0xff] %vm6436, %v6315
      %6461 = vst.msk [vmem:[%s226 + $0xc0] sm:$0xff] %vm6436, %v6330
      %6462 = vst.msk [vmem:[%s226 + $0xc8] sm:$0xff] %vm6436, %v6345
      %6463 = vst.msk [vmem:[%s226 + $0xd0] sm:$0xff] %vm6436, %v6360
      %6464 = vst.msk [vmem:[%s226 + $0xd8] sm:$0xff] %vm6436, %v6375
      %6465 = vst.msk [vmem:[%s226 + $0xe0] sm:$0xff] %vm6436, %v6390
      %6466 = vst.msk [vmem:[%s226 + $0xe8] sm:$0xff] %vm6436, %v6405
      %6467 = vst.msk [vmem:[%s226 + $0xf0] sm:$0xff] %vm6436, %v6420
      %6468 = vst.msk [vmem:[%s226 + $0xf8] sm:$0xff] %vm6436, %v6435
      %s6469 = smul.u32 32, %s16
      %p6470 = scmp.lt.s32.totalorder %s6469, 63
      %s6471 = scalar_select %p6470, %s6469, 63
      %s6472 = smul.addr %s6471, 8
      %s6473 = scalar_lea.vmem %s5, %s6472
      // Predicated region
      $region41: #{tpu_custom_call.1} parent=39 // pred_check
        %p6474 = pneg %p144
      $region42: #{tpu_custom_call.1} parent=39 // pred_check_branch
        %6476 = sbr.rel (%p6474) target = $region44
      $region43: #{tpu_custom_call.1} parent=39 // pred_region
        %s6477 = smul.u32 32, %s16
      $region44: #{tpu_custom_call.1} parent=39 // pred_fallthru
        _
    $region40: #{tpu_custom_call.1} parent=5 // pred_fallthru
      _
    %p6478 = scmp.le.s32.totalorder 2, %s11
    // Predicated region
    $region45: #{tpu_custom_call.1} parent=5 // pred_check
      %p6479 = pneg %p6478
    $region46: #{tpu_custom_call.1} parent=5 // pred_check_branch
      %6481 = sbr.rel (%p6479) target = $region48
    $region47: #{tpu_custom_call.1} parent=5 // pred_region
      %s6482 = ssub.s32 %s11, 2
      // Predicated region
      $region49: #{tpu_custom_call.1} parent=47 // pred_check
        %p6483 = pneg %p150
      $region50: #{tpu_custom_call.1} parent=47 // pred_check_branch
        %6485 = sbr.rel (%p6483) target = $region52
      $region51: #{tpu_custom_call.1} parent=47 // pred_region
        %s6486 = smul.u32 32, %s17
        %p6487 = scmp.lt.s32.totalorder %s6486, 63
        %s6488 = scalar_select %p6487, %s6486, 63
        %s6489 = smul.addr %s6488, 8
        %s6490 = scalar_lea.vmem %s5, %s6489
      $region52: #{tpu_custom_call.1} parent=47 // pred_fallthru
        _
    $region48: #{tpu_custom_call.1} parent=5 // pred_fallthru
      _
  $region6: #{tpu_custom_call.1} parent=0 // loop_footer
    %s15 = sadd.s32 1, %s11
  $region7: #{tpu_custom_call.1} parent=0 // loop_footer_branch
    %10 = sbr.rel target = $region3
  $region8: #{tpu_custom_call.1} parent=0 // loop_exit
    _

</llo_original>
